<compile_context>
chip_gen: v7x
topology: tpu7x:2x2x1
jax: 0.10.0
libtpu: 0.0.40
codegen_flags: <defaults>
</compile_context>

<pallas_src>
import jax
import jax.numpy as jnp
from jax import lax
from jax.experimental import pallas as pl
from jax.experimental.pallas import tpu as pltpu

LEAKY_SLOPE = 0.1
BN_EPS = 1e-5
LANE = 128                      # lane width: channel padding target

# Inter-layer activation storage.  Keep f32 to match PyTorch; flip to
# jnp.bfloat16 on v6e/v7x to halve activation HBM traffic (accumulation,
# stats and the folded BN scale/shift stay f32 regardless).
STORAGE_DTYPE = jnp.float32
# MXU operand dtype (native bf16 on v5e/v6e/v7x); accumulation is f32.
MXU_DTYPE = jnp.bfloat16


# --------------------------------------------------------------------------- #
# Kernels
# --------------------------------------------------------------------------- #
def _layer_kernel(y_ref, scale_ref, shift_ref, w_ref, b_ref,
                  y_out_ref, stats_ref, xpad_ref, col_ref):
    """One EncoderPerLayer step; its own BN normalize is deferred to the next layer.

    y_ref:     (1, H, W, Cp)   previous pre-BN activation (raw input, layer 0)
    scale_ref: (1, Cp)         previous layer's folded BN scale (gamma * rsqrt(var+eps))
    shift_ref: (1, Cp)         previous layer's folded BN shift (beta - mean*scale)
    w_ref:     (9*Cp, Cp)      im2col conv weights, tap-major, bf16
    b_ref:     (1, Cp)         conv bias, f32
    y_out_ref: (1, H, W, Cp)   y = x + leaky_relu(conv(x) + b)   (pre-BN of this layer)
    stats_ref: (1, 2, Cp)      per-tile [sum, sum((y - tile_mean)^2)] per channel
    xpad_ref:  (H+2, W+2, Cp)  VMEM scratch: zero-halo'd conv input (f32)
    col_ref:   (H*W, 9*Cp)     VMEM scratch: im2col patch matrix (bf16)
    """
    _, H, W, Cp = y_ref.shape
    HW = H * W

    # Previous layer's folded BatchNorm affine (identity for the first layer).
    x = (y_ref[...].astype(jnp.float32) * scale_ref[...]
         + shift_ref[...]).reshape(H, W, Cp)
    xf = x.reshape(HW, Cp)

    # Build the 'same'-padding halo in VMEM.  Zero ONLY the 1-pixel border,
    # every step: cheap, and correct even when the batch grid is partitioned
    # across TensorCores (a program_id==0 one-shot init would not be).
    xpad_ref[0:1, :, :] = jnp.zeros((1, W + 2, Cp), jnp.float32)
    xpad_ref[H + 1:H + 2, :, :] = jnp.zeros((1, W + 2, Cp), jnp.float32)
    xpad_ref[1:H + 1, 0:1, :] = jnp.zeros((H, 1, Cp), jnp.float32)
    xpad_ref[1:H + 1, W + 1:W + 2, :] = jnp.zeros((H, 1, Cp), jnp.float32)
    xpad_ref[1:H + 1, 1:W + 1, :] = x

    # im2col: one (HW, 9*Cp) bf16 patch matrix.  Each tap block is written at a
    # lane-aligned (multiple-of-128) column offset; the centre tap reuses the
    # already-live x instead of re-reading the unaligned interior of xpad.
    for dh in range(3):
        for dw in range(3):
            t = dh * 3 + dw
            if dh == 1 and dw == 1:
                tap = xf
            else:
                tap = xpad_ref[dh:dh + H, dw:dw + W, :].reshape(HW, Cp)
            col_ref[:, t * Cp:(t + 1) * Cp] = tap.astype(MXU_DTYPE)

    # Single deep-K MXU matmul (bf16 x bf16 -> f32 accumulate) + bias.
    conv = jnp.dot(col_ref[...], w_ref[...],
                   preferred_element_type=jnp.float32) + b_ref[...]
    act = jnp.maximum(conv, LEAKY_SLOPE * conv)      # leaky_relu(0.1)
    y = xf + act                                     # residual add (f32)

    y_out_ref[...] = y.reshape(1, H, W, Cp).astype(y_out_ref.dtype)

    # Per-tile BatchNorm partials: [sum, sum of squared deviations from the
    # tile mean].  Combined across tiles with Chan's formula in the wrapper,
    # which avoids E[y^2]-mean^2 catastrophic cancellation.
    s = jnp.sum(y, axis=0, keepdims=True)                               # (1, Cp)
    m2 = jnp.sum(jnp.square(y - s * (1.0 / HW)), axis=0, keepdims=True)  # (1, Cp)
    stats_ref[:, 0:1, :] = s.reshape(1, 1, Cp)
    stats_ref[:, 1:2, :] = m2.reshape(1, 1, Cp)


# --------------------------------------------------------------------------- #
# pallas_call wrappers
# --------------------------------------------------------------------------- #
def _vmem_limit(working_set_bytes):
    """Scoped-VMEM limit from the actual working set, capped per generation."""
    try:
        phys = int(pltpu.get_tpu_info().vmem_capacity_bytes)
    except Exception:                       # conservative fallback: v7x (64 MiB)
        phys = 64 * 1024 * 1024
    cap = (phys * 7) // 8
    return int(min(max(int(working_set_bytes) + (8 << 20), 32 << 20), cap))


def _conv_layer(y_prev, scale, shift, w, b):
    N, H, W, Cp = y_prev.shape
    act_bytes = jnp.dtype(STORAGE_DTYPE).itemsize
    working_set = (
        4 * H * W * Cp * act_bytes                      # 2x in tile + 2x out tile
        + 2 * 9 * Cp * Cp * jnp.dtype(MXU_DTYPE).itemsize   # weights (double buffered)
        + (H + 2) * (W + 2) * Cp * 4                    # xpad scratch (f32)
        + H * W * 9 * Cp * jnp.dtype(MXU_DTYPE).itemsize    # im2col scratch
        + 16 * Cp * 4)                                  # scale/shift/bias/stats
    return pl.pallas_call(
        _layer_kernel,
        out_shape=(jax.ShapeDtypeStruct((N, H, W, Cp), STORAGE_DTYPE),
                   jax.ShapeDtypeStruct((N, 2, Cp), jnp.float32)),
        grid_spec=pltpu.PrefetchScalarGridSpec(
            num_scalar_prefetch=0,
            grid=(N,),
            in_specs=[
                pl.BlockSpec((1, H, W, Cp), lambda n: (n, 0, 0, 0)),
                pl.BlockSpec((1, Cp), lambda n: (0, 0)),
                pl.BlockSpec((1, Cp), lambda n: (0, 0)),
                pl.BlockSpec((9 * Cp, Cp), lambda n: (0, 0)),
                pl.BlockSpec((1, Cp), lambda n: (0, 0)),
            ],
            out_specs=[
                pl.BlockSpec((1, H, W, Cp), lambda n: (n, 0, 0, 0)),
                pl.BlockSpec((1, 2, Cp), lambda n: (n, 0, 0)),
            ],
            scratch_shapes=[
                pltpu.VMEM((H + 2, W + 2, Cp), jnp.float32),
                pltpu.VMEM((H * W, 9 * Cp), MXU_DTYPE),
            ],
        ),
        compiler_params=pltpu.CompilerParams(
            dimension_semantics=("parallel",),
            vmem_limit_bytes=_vmem_limit(working_set),
        ),
    )(y_prev, scale, shift, w, b)


# --------------------------------------------------------------------------- #
# BatchNorm statistics folding (wrapper side, tiny arrays)
# --------------------------------------------------------------------------- #
def _bn_scale_shift(stats, gamma, beta, tile_count):
    """Combine per-tile [sum, M2] (Chan's formula) and fold mean/var + affine."""
    stats = stats.astype(jnp.float32)
    sums, m2s = stats[:, 0, :], stats[:, 1, :]          # (n_tiles, Cp)
    n_tiles = stats.shape[0]
    total = float(n_tiles * tile_count)
    mean = jnp.sum(sums, axis=0) / total
    tile_mean = sums / float(tile_count)
    m2 = jnp.sum(m2s, axis=0) + float(tile_count) * jnp.sum(
        jnp.square(tile_mean - mean), axis=0)
    var = jnp.maximum(m2 / total, 0.0)                  # biased variance (train-mode BN)
    inv = lax.rsqrt(var + BN_EPS)
    scale = gamma * inv
    shift = beta - mean * scale
    return scale.reshape(1, -1), shift.reshape(1, -1)


def _prepare_layer_params(p, C, Cp):
    """PyTorch-layout params -> lane-padded, im2col-reshaped kernel arrays."""
    # p["w"]: (Cout, Cin, 3, 3) -> (3, 3, Cin, Cout) -> pad channels -> (9*Cp, Cp)
    w = jnp.transpose(p["w"].astype(jnp.float32), (2, 3, 1, 0))
    w = jnp.pad(w, ((0, 0), (0, 0), (0, Cp - C), (0, Cp - C)))
    w = w.reshape(9 * Cp, Cp).astype(MXU_DTYPE)
    b = jnp.pad(p["b"].astype(jnp.float32), (0, Cp - C)).reshape(1, Cp)
    gamma = jnp.pad(p["gamma"].astype(jnp.float32), (0, Cp - C))
    beta = jnp.pad(p["beta"].astype(jnp.float32), (0, Cp - C))
    return w, b, gamma, beta


def init_encoder_layer_params(key, layers_num, channels):
    """PyTorch-default-like init: Conv2d kaiming-uniform(a=sqrt(5)), BN gamma=1,beta=0."""
    params = []
    fan_in = channels * 3 * 3
    bound = 1.0 / (fan_in ** 0.5)
    for i in range(layers_num):
        kw, kb = jax.random.split(jax.random.fold_in(key, i))
        w = jax.random.uniform(kw, (channels, channels, 3, 3),
                               jnp.float32, -bound, bound)   # (Cout, Cin, 3, 3)
        b = jax.random.uniform(kb, (channels,), jnp.float32, -bound, bound)
        params.append({"w": w, "b": b,
                       "gamma": jnp.ones((channels,), jnp.float32),
                       "beta": jnp.zeros((channels,), jnp.float32)})
    return params


# --------------------------------------------------------------------------- #
# Forward pass
# --------------------------------------------------------------------------- #
@jax.jit
def encoder_layer_forward(x_nchw, params):
    N, C, H, W = x_nchw.shape
    Cp = ((C + LANE - 1) // LANE) * LANE

    # NCHW -> NHWC (channels on the lane axis), channels zero-padded to a lane
    # multiple.  Padded channels stay exactly zero through every layer (their
    # conv weights, bias, gamma and beta are zero), so numerics are unchanged.
    x = jnp.transpose(x_nchw.astype(jnp.float32), (0, 2, 3, 1))
    if Cp != C:
        x = jnp.pad(x, ((0, 0), (0, 0), (0, 0), (0, Cp - C)))

    # Layer 0 sees the raw input: identity folded-BN affine.
    scale = jnp.ones((1, Cp), jnp.float32)
    shift = jnp.zeros((1, Cp), jnp.float32)

    y = x.astype(STORAGE_DTYPE)
    for p in params:
        w, b, gamma, beta = _prepare_layer_params(p, C, Cp)
        # Fused: normalize previous layer's output, conv+act+residual, partial stats.
        y, stats = _conv_layer(y, scale, shift, w, b)
        scale, shift = _bn_scale_shift(stats, gamma, beta, H * W)

    # Last layer's BatchNorm affine fused with channel un-padding and the
    # NHWC -> NCHW transpose in a single XLA pass (no separate normalize kernel).
    out = y.astype(jnp.float32)[..., :C] * scale[:, :C] + shift[:, :C]
    return jnp.transpose(out, (0, 3, 1, 2))


if __name__ == "__main__":
    key = jax.random.PRNGKey(0)
    kx, kp = jax.random.split(key)

    batch, channels, spatial, layers_num = 2, 4, 16, 2
    x = jax.random.normal(kx, (batch, channels, spatial, spatial), jnp.float32)

    params = init_encoder_layer_params(kp, layers_num, channels)

    out = encoder_layer_forward(x, params)
    out = jax.block_until_ready(out)
    assert out.shape == x.shape and out.dtype == jnp.float32
    print("KERNEL_OK")
</pallas_src>

<mosaic_0001>
module attributes {stable_mosaic.version = 11 : i64} {
  func.func @_layer_kernel(%arg0: i32, %arg1: memref<1x16x16x128xf32, #tpu.memory_space<vmem>>, %arg2: memref<1x128xf32, #tpu.memory_space<vmem>>, %arg3: memref<1x128xf32, #tpu.memory_space<vmem>>, %arg4: memref<1152x128xbf16, #tpu.memory_space<vmem>>, %arg5: memref<1x128xf32, #tpu.memory_space<vmem>>, %arg6: memref<1x16x16x128xf32, #tpu.memory_space<vmem>>, %arg7: memref<1x2x128xf32, #tpu.memory_space<vmem>>, %arg8: memref<18x18x128xf32, #tpu.memory_space<vmem>>, %arg9: memref<256x1152xbf16, #tpu.memory_space<vmem>>) attributes {dimension_semantics = [#tpu.dimension_semantics<parallel>], iteration_bounds = array<i64: 2>, scalar_prefetch = 0 : i64, scratch_operands = 2 : i64, tpu.core_type = #tpu.core_type<tc>, window_params = [{transform_indices = @transform_0, window_bounds = array<i64: 1, 16, 16, 128>}, {pipeline_mode = #tpu.pipeline_mode<synchronous>, transform_indices = @transform_1, window_bounds = array<i64: 1, 128>}, {pipeline_mode = #tpu.pipeline_mode<synchronous>, transform_indices = @transform_2, window_bounds = array<i64: 1, 128>}, {pipeline_mode = #tpu.pipeline_mode<synchronous>, transform_indices = @transform_3, window_bounds = array<i64: 1152, 128>}, {pipeline_mode = #tpu.pipeline_mode<synchronous>, transform_indices = @transform_4, window_bounds = array<i64: 1, 128>}, {transform_indices = @transform_5, window_bounds = array<i64: 1, 16, 16, 128>}, {transform_indices = @transform_6, window_bounds = array<i64: 1, 2, 128>}]} {
    %c0 = arith.constant 0 : index
    %c0_0 = arith.constant 0 : index
    %c0_1 = arith.constant 0 : index
    %c0_2 = arith.constant 0 : index
    %0 = vector.load %arg1[%c0, %c0_0, %c0_1, %c0_2] : memref<1x16x16x128xf32, #tpu.memory_space<vmem>>, vector<1x16x16x128xf32>
    %c0_3 = arith.constant 0 : index
    %c0_4 = arith.constant 0 : index
    %1 = vector.load %arg2[%c0_3, %c0_4] : memref<1x128xf32, #tpu.memory_space<vmem>>, vector<1x128xf32>
    %2 = vector.shape_cast %1 : vector<1x128xf32> to vector<1x1x1x128xf32>
    %3 = vector.broadcast %2 : vector<1x1x1x128xf32> to vector<1x16x16x128xf32>
    %4 = arith.mulf %0, %3 : vector<1x16x16x128xf32>
    %c0_5 = arith.constant 0 : index
    %c0_6 = arith.constant 0 : index
    %5 = vector.load %arg3[%c0_5, %c0_6] : memref<1x128xf32, #tpu.memory_space<vmem>>, vector<1x128xf32>
    %6 = vector.shape_cast %5 : vector<1x128xf32> to vector<1x1x1x128xf32>
    %7 = vector.broadcast %6 : vector<1x1x1x128xf32> to vector<1x16x16x128xf32>
    %8 = arith.addf %4, %7 : vector<1x16x16x128xf32>
    %9 = vector.shape_cast %8 : vector<1x16x16x128xf32> to vector<16x16x128xf32>
    %10 = vector.shape_cast %9 : vector<16x16x128xf32> to vector<256x128xf32>
    %cst = arith.constant 0.000000e+00 : f32
    %11 = vector.broadcast %cst : f32 to vector<1x18x128xf32>
    %c0_7 = arith.constant 0 : index
    %c0_8 = arith.constant 0 : index
    %c0_9 = arith.constant 0 : index
    %12 = vector.load %arg8[%c0_7, %c0_8, %c0_9] : memref<18x18x128xf32, #tpu.memory_space<vmem>>, vector<1x18x128xf32>
    tpu.vector_store %arg8[%c0_7, %c0_8, %c0_9], %11 {strides = array<i32>} : memref<18x18x128xf32, #tpu.memory_space<vmem>>, vector<1x18x128xf32>,
    %cst_10 = arith.constant 0.000000e+00 : f32
    %13 = vector.broadcast %cst_10 : f32 to vector<1x18x128xf32>
    %c17 = arith.constant 17 : index
    %c0_11 = arith.constant 0 : index
    %c0_12 = arith.constant 0 : index
    %14 = vector.load %arg8[%c17, %c0_11, %c0_12] : memref<18x18x128xf32, #tpu.memory_space<vmem>>, vector<1x18x128xf32>
    tpu.vector_store %arg8[%c17, %c0_11, %c0_12], %13 {strides = array<i32>} : memref<18x18x128xf32, #tpu.memory_space<vmem>>, vector<1x18x128xf32>,
    %cst_13 = arith.constant 0.000000e+00 : f32
    %15 = vector.broadcast %cst_13 : f32 to vector<16x1x128xf32>
    %c1 = arith.constant 1 : index
    %c0_14 = arith.constant 0 : index
    %c0_15 = arith.constant 0 : index
    %16 = vector.load %arg8[%c1, %c0_14, %c0_15] : memref<18x18x128xf32, #tpu.memory_space<vmem>>, vector<16x1x128xf32>
    tpu.vector_store %arg8[%c1, %c0_14, %c0_15], %15 {strides = array<i32>} : memref<18x18x128xf32, #tpu.memory_space<vmem>>, vector<16x1x128xf32>,
    %cst_16 = arith.constant 0.000000e+00 : f32
    %17 = vector.broadcast %cst_16 : f32 to vector<16x1x128xf32>
    %c1_17 = arith.constant 1 : index
    %c17_18 = arith.constant 17 : index
    %c0_19 = arith.constant 0 : index
    %18 = vector.load %arg8[%c1_17, %c17_18, %c0_19] : memref<18x18x128xf32, #tpu.memory_space<vmem>>, vector<16x1x128xf32>
    tpu.vector_store %arg8[%c1_17, %c17_18, %c0_19], %17 {strides = array<i32>} : memref<18x18x128xf32, #tpu.memory_space<vmem>>, vector<16x1x128xf32>,
    %c1_20 = arith.constant 1 : index
    %c1_21 = arith.constant 1 : index
    %c0_22 = arith.constant 0 : index
    %19 = vector.load %arg8[%c1_20, %c1_21, %c0_22] : memref<18x18x128xf32, #tpu.memory_space<vmem>>, vector<16x16x128xf32>
    tpu.vector_store %arg8[%c1_20, %c1_21, %c0_22], %9 {strides = array<i32>} : memref<18x18x128xf32, #tpu.memory_space<vmem>>, vector<16x16x128xf32>,
    %c0_23 = arith.constant 0 : index
    %c0_24 = arith.constant 0 : index
    %c0_25 = arith.constant 0 : index
    %20 = vector.load %arg8[%c0_23, %c0_24, %c0_25] : memref<18x18x128xf32, #tpu.memory_space<vmem>>, vector<16x16x128xf32>
    %21 = vector.shape_cast %20 : vector<16x16x128xf32> to vector<256x128xf32>
    %22 = arith.truncf %21 : vector<256x128xf32> to vector<256x128xbf16>
    %c0_26 = arith.constant 0 : index
    %c0_27 = arith.constant 0 : index
    %23 = vector.load %arg9[%c0_26, %c0_27] : memref<256x1152xbf16, #tpu.memory_space<vmem>>, vector<256x128xbf16>
    tpu.vector_store %arg9[%c0_26, %c0_27], %22 {strides = array<i32>} : memref<256x1152xbf16, #tpu.memory_space<vmem>>, vector<256x128xbf16>,
    %c0_28 = arith.constant 0 : index
    %c1_29 = arith.constant 1 : index
    %c0_30 = arith.constant 0 : index
    %24 = vector.load %arg8[%c0_28, %c1_29, %c0_30] : memref<18x18x128xf32, #tpu.memory_space<vmem>>, vector<16x16x128xf32>
    %25 = vector.shape_cast %24 : vector<16x16x128xf32> to vector<256x128xf32>
    %26 = arith.truncf %25 : vector<256x128xf32> to vector<256x128xbf16>
    %c0_31 = arith.constant 0 : index
    %c128 = arith.constant 128 : index
    %27 = vector.load %arg9[%c0_31, %c128] : memref<256x1152xbf16, #tpu.memory_space<vmem>>, vector<256x128xbf16>
    tpu.vector_store %arg9[%c0_31, %c128], %26 {strides = array<i32>} : memref<256x1152xbf16, #tpu.memory_space<vmem>>, vector<256x128xbf16>,
    %c0_32 = arith.constant 0 : index
    %c2 = arith.constant 2 : index
    %c0_33 = arith.constant 0 : index
    %28 = vector.load %arg8[%c0_32, %c2, %c0_33] : memref<18x18x128xf32, #tpu.memory_space<vmem>>, vector<16x16x128xf32>
    %29 = vector.shape_cast %28 : vector<16x16x128xf32> to vector<256x128xf32>
    %30 = arith.truncf %29 : vector<256x128xf32> to vector<256x128xbf16>
    %c0_34 = arith.constant 0 : index
    %c256 = arith.constant 256 : index
    %31 = vector.load %arg9[%c0_34, %c256] : memref<256x1152xbf16, #tpu.memory_space<vmem>>, vector<256x128xbf16>
    tpu.vector_store %arg9[%c0_34, %c256], %30 {strides = array<i32>} : memref<256x1152xbf16, #tpu.memory_space<vmem>>, vector<256x128xbf16>,
    %c1_35 = arith.constant 1 : index
    %c0_36 = arith.constant 0 : index
    %c0_37 = arith.constant 0 : index
    %32 = vector.load %arg8[%c1_35, %c0_36, %c0_37] : memref<18x18x128xf32, #tpu.memory_space<vmem>>, vector<16x16x128xf32>
    %33 = vector.shape_cast %32 : vector<16x16x128xf32> to vector<256x128xf32>
    %34 = arith.truncf %33 : vector<256x128xf32> to vector<256x128xbf16>
    %c0_38 = arith.constant 0 : index
    %c384 = arith.constant 384 : index
    %35 = vector.load %arg9[%c0_38, %c384] : memref<256x1152xbf16, #tpu.memory_space<vmem>>, vector<256x128xbf16>
    tpu.vector_store %arg9[%c0_38, %c384], %34 {strides = array<i32>} : memref<256x1152xbf16, #tpu.memory_space<vmem>>, vector<256x128xbf16>,
    %36 = arith.truncf %10 : vector<256x128xf32> to vector<256x128xbf16>
    %c0_39 = arith.constant 0 : index
    %c512 = arith.constant 512 : index
    %37 = vector.load %arg9[%c0_39, %c512] : memref<256x1152xbf16, #tpu.memory_space<vmem>>, vector<256x128xbf16>
    tpu.vector_store %arg9[%c0_39, %c512], %36 {strides = array<i32>} : memref<256x1152xbf16, #tpu.memory_space<vmem>>, vector<256x128xbf16>,
    %c1_40 = arith.constant 1 : index
    %c2_41 = arith.constant 2 : index
    %c0_42 = arith.constant 0 : index
    %38 = vector.load %arg8[%c1_40, %c2_41, %c0_42] : memref<18x18x128xf32, #tpu.memory_space<vmem>>, vector<16x16x128xf32>
    %39 = vector.shape_cast %38 : vector<16x16x128xf32> to vector<256x128xf32>
    %40 = arith.truncf %39 : vector<256x128xf32> to vector<256x128xbf16>
    %c0_43 = arith.constant 0 : index
    %c640 = arith.constant 640 : index
    %41 = vector.load %arg9[%c0_43, %c640] : memref<256x1152xbf16, #tpu.memory_space<vmem>>, vector<256x128xbf16>
    tpu.vector_store %arg9[%c0_43, %c640], %40 {strides = array<i32>} : memref<256x1152xbf16, #tpu.memory_space<vmem>>, vector<256x128xbf16>,
    %c2_44 = arith.constant 2 : index
    %c0_45 = arith.constant 0 : index
    %c0_46 = arith.constant 0 : index
    %42 = vector.load %arg8[%c2_44, %c0_45, %c0_46] : memref<18x18x128xf32, #tpu.memory_space<vmem>>, vector<16x16x128xf32>
    %43 = vector.shape_cast %42 : vector<16x16x128xf32> to vector<256x128xf32>
    %44 = arith.truncf %43 : vector<256x128xf32> to vector<256x128xbf16>
    %c0_47 = arith.constant 0 : index
    %c768 = arith.constant 768 : index
    %45 = vector.load %arg9[%c0_47, %c768] : memref<256x1152xbf16, #tpu.memory_space<vmem>>, vector<256x128xbf16>
    tpu.vector_store %arg9[%c0_47, %c768], %44 {strides = array<i32>} : memref<256x1152xbf16, #tpu.memory_space<vmem>>, vector<256x128xbf16>,
    %c2_48 = arith.constant 2 : index
    %c1_49 = arith.constant 1 : index
    %c0_50 = arith.constant 0 : index
    %46 = vector.load %arg8[%c2_48, %c1_49, %c0_50] : memref<18x18x128xf32, #tpu.memory_space<vmem>>, vector<16x16x128xf32>
    %47 = vector.shape_cast %46 : vector<16x16x128xf32> to vector<256x128xf32>
    %48 = arith.truncf %47 : vector<256x128xf32> to vector<256x128xbf16>
    %c0_51 = arith.constant 0 : index
    %c896 = arith.constant 896 : index
    %49 = vector.load %arg9[%c0_51, %c896] : memref<256x1152xbf16, #tpu.memory_space<vmem>>, vector<256x128xbf16>
    tpu.vector_store %arg9[%c0_51, %c896], %48 {strides = array<i32>} : memref<256x1152xbf16, #tpu.memory_space<vmem>>, vector<256x128xbf16>,
    %c2_52 = arith.constant 2 : index
    %c2_53 = arith.constant 2 : index
    %c0_54 = arith.constant 0 : index
    %50 = vector.load %arg8[%c2_52, %c2_53, %c0_54] : memref<18x18x128xf32, #tpu.memory_space<vmem>>, vector<16x16x128xf32>
    %51 = vector.shape_cast %50 : vector<16x16x128xf32> to vector<256x128xf32>
    %52 = arith.truncf %51 : vector<256x128xf32> to vector<256x128xbf16>
    %c0_55 = arith.constant 0 : index
    %c1024 = arith.constant 1024 : index
    %53 = vector.load %arg9[%c0_55, %c1024] : memref<256x1152xbf16, #tpu.memory_space<vmem>>, vector<256x128xbf16>
    tpu.vector_store %arg9[%c0_55, %c1024], %52 {strides = array<i32>} : memref<256x1152xbf16, #tpu.memory_space<vmem>>, vector<256x128xbf16>,
    %c0_56 = arith.constant 0 : index
    %c0_57 = arith.constant 0 : index
    %54 = vector.load %arg9[%c0_56, %c0_57] : memref<256x1152xbf16, #tpu.memory_space<vmem>>, vector<256x1152xbf16>
    %c0_58 = arith.constant 0 : index
    %c0_59 = arith.constant 0 : index
    %55 = vector.load %arg4[%c0_58, %c0_59] : memref<1152x128xbf16, #tpu.memory_space<vmem>>, vector<1152x128xbf16>
    %cst_60 = arith.constant dense<0.000000e+00> : vector<256x128xf32>
    %56 = tpu.matmul %54, %55, %cst_60 {dimension_numbers = #tpu.dot_dimension_numbers<[1], [0], [0], [1], [0, 0, 1, 1], [], []>} : vector<256x1152xbf16>, vector<1152x128xbf16>, vector<256x128xf32> -> vector<256x128xf32>
    %c0_61 = arith.constant 0 : index
    %c0_62 = arith.constant 0 : index
    %57 = vector.load %arg5[%c0_61, %c0_62] : memref<1x128xf32, #tpu.memory_space<vmem>>, vector<1x128xf32>
    %58 = vector.broadcast %57 : vector<1x128xf32> to vector<256x128xf32>
    %59 = arith.addf %56, %58 : vector<256x128xf32>
    %cst_63 = arith.constant 1.000000e-01 : f32
    %60 = vector.broadcast %cst_63 : f32 to vector<256x128xf32>
    %61 = arith.mulf %60, %59 : vector<256x128xf32>
    %62 = arith.maximumf %59, %61 : vector<256x128xf32>
    %63 = arith.addf %10, %62 : vector<256x128xf32>
    %64 = vector.shape_cast %63 : vector<256x128xf32> to vector<1x16x16x128xf32>
    %c0_64 = arith.constant 0 : index
    %c0_65 = arith.constant 0 : index
    %c0_66 = arith.constant 0 : index
    %c0_67 = arith.constant 0 : index
    %65 = vector.load %arg6[%c0_64, %c0_65, %c0_66, %c0_67] : memref<1x16x16x128xf32, #tpu.memory_space<vmem>>, vector<1x16x16x128xf32>
    tpu.vector_store %arg6[%c0_64, %c0_65, %c0_66, %c0_67], %64 {strides = array<i32>} : memref<1x16x16x128xf32, #tpu.memory_space<vmem>>, vector<1x16x16x128xf32>,
    %cst_68 = arith.constant dense<0.000000e+00> : vector<128xf32>
    %66 = vector.multi_reduction <add>, %63, %cst_68 [0] : vector<256x128xf32> to vector<128xf32>
    %67 = vector.shape_cast %66 : vector<128xf32> to vector<1x128xf32>
    %cst_69 = arith.constant 3.906250e-03 : f32
    %68 = vector.broadcast %cst_69 : f32 to vector<1x128xf32>
    %69 = arith.mulf %67, %68 : vector<1x128xf32>
    %70 = vector.broadcast %69 : vector<1x128xf32> to vector<256x128xf32>
    %71 = arith.subf %63, %70 : vector<256x128xf32>
    %72 = arith.mulf %71, %71 : vector<256x128xf32>
    %cst_70 = arith.constant dense<0.000000e+00> : vector<128xf32>
    %73 = vector.multi_reduction <add>, %72, %cst_70 [0] : vector<256x128xf32> to vector<128xf32>
    %74 = vector.shape_cast %73 : vector<128xf32> to vector<1x128xf32>
    %75 = vector.shape_cast %67 : vector<1x128xf32> to vector<1x1x128xf32>
    %c0_71 = arith.constant 0 : index
    %c0_72 = arith.constant 0 : index
    %c0_73 = arith.constant 0 : index
    %76 = vector.load %arg7[%c0_71, %c0_72, %c0_73] : memref<1x2x128xf32, #tpu.memory_space<vmem>>, vector<1x1x128xf32>
    tpu.vector_store %arg7[%c0_71, %c0_72, %c0_73], %75 {strides = array<i32>} : memref<1x2x128xf32, #tpu.memory_space<vmem>>, vector<1x1x128xf32>,
    %77 = vector.shape_cast %74 : vector<1x128xf32> to vector<1x1x128xf32>
    %c0_74 = arith.constant 0 : index
    %c1_75 = arith.constant 1 : index
    %c0_76 = arith.constant 0 : index
    %78 = vector.load %arg7[%c0_74, %c1_75, %c0_76] : memref<1x2x128xf32, #tpu.memory_space<vmem>>, vector<1x1x128xf32>
    tpu.vector_store %arg7[%c0_74, %c1_75, %c0_76], %77 {strides = array<i32>} : memref<1x2x128xf32, #tpu.memory_space<vmem>>, vector<1x1x128xf32>,
    return
  }
  func.func @transform_0(%arg0: i32) -> (i32, i32, i32, i32) {
    %c0_i32 = arith.constant 0 : i32
    %c0_i32_0 = arith.constant 0 : i32
    %c0_i32_1 = arith.constant 0 : i32
    %c0_i32_2 = arith.constant 0 : i32
    return %arg0, %c0_i32, %c0_i32_0, %c0_i32_1 : i32, i32, i32, i32
  }
  func.func @transform_1(%arg0: i32) -> (i32, i32) {
    %c0_i32 = arith.constant 0 : i32
    %c0_i32_0 = arith.constant 0 : i32
    %c0_i32_1 = arith.constant 0 : i32
    return %c0_i32, %c0_i32_0 : i32, i32
  }
  func.func @transform_2(%arg0: i32) -> (i32, i32) {
    %c0_i32 = arith.constant 0 : i32
    %c0_i32_0 = arith.constant 0 : i32
    %c0_i32_1 = arith.constant 0 : i32
    return %c0_i32, %c0_i32_0 : i32, i32
  }
  func.func @transform_3(%arg0: i32) -> (i32, i32) {
    %c0_i32 = arith.constant 0 : i32
    %c0_i32_0 = arith.constant 0 : i32
    %c0_i32_1 = arith.constant 0 : i32
    return %c0_i32, %c0_i32_0 : i32, i32
  }
  func.func @transform_4(%arg0: i32) -> (i32, i32) {
    %c0_i32 = arith.constant 0 : i32
    %c0_i32_0 = arith.constant 0 : i32
    %c0_i32_1 = arith.constant 0 : i32
    return %c0_i32, %c0_i32_0 : i32, i32
  }
  func.func @transform_5(%arg0: i32) -> (i32, i32, i32, i32) {
    %c0_i32 = arith.constant 0 : i32
    %c0_i32_0 = arith.constant 0 : i32
    %c0_i32_1 = arith.constant 0 : i32
    %c0_i32_2 = arith.constant 0 : i32
    return %arg0, %c0_i32, %c0_i32_0, %c0_i32_1 : i32, i32, i32, i32
  }
  func.func @transform_6(%arg0: i32) -> (i32, i32, i32) {
    %c0_i32 = arith.constant 0 : i32
    %c0_i32_0 = arith.constant 0 : i32
    %c0_i32_1 = arith.constant 0 : i32
    return %arg0, %c0_i32, %c0_i32_0 : i32, i32, i32
  }
}

</mosaic_0001>

<llo_original>
// kernel: encoder_layer_forward.2
$region0: #{encoder_layer_forward.2}
  #allocation0 [shape = 'u32[]', space=smem, size = 0x4, offset = 0x4, fixed_abs, tag = 'smem constant byte address 0x4 - core index']
  #allocation1 [shape = 'u32[144,128]{1,0:T(1,128)}', space=vmem, size = 0x12000, scoped, tag = 'internal scratch']
  #allocation2 [shape = 'f32[18,18,128]{2,1,0:T(8,128)}', space=vmem, size = 0x36000, scoped, tag = 'scratch operand']
  #allocation3 [shape = 'bf16[256,1152]{1,0:T(16,128)(2,1)}', space=vmem, size = 0x90000, scoped, tag = 'scratch operand']
  %s0 = inlined_call_operand.vmem [shape: f32[2,16,16,128], index: 0, kind: input, shape index: {}]
  %s1 = inlined_call_operand.vmem [shape: f32[1,128], index: 1, kind: input, shape index: {}]
  %s2 = inlined_call_operand.vmem [shape: f32[1,128], index: 2, kind: input, shape index: {}]
  %s3 = inlined_call_operand.vmem [shape: bf16[1152,128], index: 3, kind: input, shape index: {}]
  %s4 = inlined_call_operand.vmem [shape: f32[1,128], index: 4, kind: input, shape index: {}]
  %s5 = inlined_call_operand.vmem [shape: f32[2,16,16,128], index: 5, kind: output, shape index: {0}]
  %s6 = inlined_call_operand.vmem [shape: f32[2,2,128], index: 6, kind: output, shape index: {1}]
  %7 = xla_tuple %s5, %s6
  %s8 = sld [smem:[#allocation0]]
  $region61: #{encoder_layer_forward.2} parent=0
    _
  %s10 = ssub.s32 1, %s8
  %s11 = scalar_select 0, %s10, %s8
  loop: start=0, step=1, limit=4
  $region2: #{encoder_layer_forward.2} parent=0 // loop_pre_header
    _
  $region3: #{encoder_layer_forward.2} parent=0 // loop_header
    %s13 = sphi 0, %s17
    %p14 = scmp.ge.s32.totalorder %s13, 4
    %s23 = sphi 0, %s25
    %s26 = sphi 0, %s23
    %s27 = sphi 0, %s26
    %s43 = sphi 0, %s27
    %s47 = sphi 0, %s47
    %s49 = sphi 0, %s47
    %s50 = sphi 0, %s49
    %s64 = sphi 0, %s50
    %s68 = sphi 0, %s68
    %s70 = sphi 0, %s68
    %s71 = sphi 0, %s70
    %s85 = sphi 0, %s71
    %s89 = sphi 0, %s89
    %s91 = sphi 0, %s89
    %s92 = sphi 0, %s91
    %s106 = sphi 0, %s92
    %s110 = sphi 0, %s110
    %s112 = sphi 0, %s110
    %s113 = sphi 0, %s112
    %s127 = sphi 0, %s113
    %s133 = sphi 0, %s135
    %s136 = sphi 0, %s133
    %s137 = sphi 0, %s136
    %s153 = sphi 0, %s137
    %s159 = sphi 0, %s161
    %s162 = sphi 0, %s159
    %s163 = sphi 0, %s162
    %s179 = sphi 0, %s163
  $region4: #{encoder_layer_forward.2} parent=0 // loop_header_branch
    %16 = sbr.rel (%p14) target = $region8
  $region5: #{encoder_layer_forward.2} parent=0 // loop_body
    %s18 = ssub.s32 %s13, 1
    %s19 = ssub.s32 %s13, 2
    %s20 = sadd.s32 %s13, 1
    %s21 = ssub.s32 %s13, %s20
    %p22 = scmp.eq.s32.totalorder %s21, 0
    %s24 = sadd.s32 %s23, 1
    %s25 = scalar_select %p22, %s23, %s24
    %p28 = pneg %p22
    %p29 = scmp.eq.s32.totalorder %s13, 1
    %p30 = por %p28, %p29
    %p31 = scmp.ne.s32.totalorder %s23, %s26
    %p32 = scmp.eq.s32.totalorder %s13, 0
    %p33 = por %p31, %p32
    %p34 = scmp.ne.s32.totalorder %s23, %s26
    %p35 = scmp.eq.s32.totalorder %s18, 1
    %p36 = por %p34, %p35
    %p37 = scmp.ne.s32.totalorder %s26, %s27
    %p38 = scmp.eq.s32.totalorder %s18, 0
    %p39 = por %p37, %p38
    %p40 = scmp.ne.s32.totalorder %s26, %s27
    %p41 = scmp.eq.s32.totalorder %s19, 1
    %p42 = por %p40, %p41
    %p44 = scmp.ne.s32.totalorder %s27, %s43
    %p45 = scmp.eq.s32.totalorder %s19, 0
    %p46 = por %p44, %p45
    %s48 = sadd.s32 %s47, 1
    %p51 = scmp.eq.s32.totalorder %s13, 1
    %p52 = scmp.ne.s32.totalorder %s47, %s49
    %p53 = scmp.eq.s32.totalorder %s13, 0
    %p54 = por %p52, %p53
    %p55 = scmp.ne.s32.totalorder %s47, %s49
    %p56 = scmp.eq.s32.totalorder %s18, 1
    %p57 = por %p55, %p56
    %p58 = scmp.ne.s32.totalorder %s49, %s50
    %p59 = scmp.eq.s32.totalorder %s18, 0
    %p60 = por %p58, %p59
    %p61 = scmp.ne.s32.totalorder %s49, %s50
    %p62 = scmp.eq.s32.totalorder %s19, 1
    %p63 = por %p61, %p62
    %p65 = scmp.ne.s32.totalorder %s50, %s64
    %p66 = scmp.eq.s32.totalorder %s19, 0
    %p67 = por %p65, %p66
    %s69 = sadd.s32 %s68, 1
    %p72 = scmp.eq.s32.totalorder %s13, 1
    %p73 = scmp.ne.s32.totalorder %s68, %s70
    %p74 = scmp.eq.s32.totalorder %s13, 0
    %p75 = por %p73, %p74
    %p76 = scmp.ne.s32.totalorder %s68, %s70
    %p77 = scmp.eq.s32.totalorder %s18, 1
    %p78 = por %p76, %p77
    %p79 = scmp.ne.s32.totalorder %s70, %s71
    %p80 = scmp.eq.s32.totalorder %s18, 0
    %p81 = por %p79, %p80
    %p82 = scmp.ne.s32.totalorder %s70, %s71
    %p83 = scmp.eq.s32.totalorder %s19, 1
    %p84 = por %p82, %p83
    %p86 = scmp.ne.s32.totalorder %s71, %s85
    %p87 = scmp.eq.s32.totalorder %s19, 0
    %p88 = por %p86, %p87
    %s90 = sadd.s32 %s89, 1
    %p93 = scmp.eq.s32.totalorder %s13, 1
    %p94 = scmp.ne.s32.totalorder %s89, %s91
    %p95 = scmp.eq.s32.totalorder %s13, 0
    %p96 = por %p94, %p95
    %p97 = scmp.ne.s32.totalorder %s89, %s91
    %p98 = scmp.eq.s32.totalorder %s18, 1
    %p99 = por %p97, %p98
    %p100 = scmp.ne.s32.totalorder %s91, %s92
    %p101 = scmp.eq.s32.totalorder %s18, 0
    %p102 = por %p100, %p101
    %p103 = scmp.ne.s32.totalorder %s91, %s92
    %p104 = scmp.eq.s32.totalorder %s19, 1
    %p105 = por %p103, %p104
    %p107 = scmp.ne.s32.totalorder %s92, %s106
    %p108 = scmp.eq.s32.totalorder %s19, 0
    %p109 = por %p107, %p108
    %s111 = sadd.s32 %s110, 1
    %p114 = scmp.eq.s32.totalorder %s13, 1
    %p115 = scmp.ne.s32.totalorder %s110, %s112
    %p116 = scmp.eq.s32.totalorder %s13, 0
    %p117 = por %p115, %p116
    %p118 = scmp.ne.s32.totalorder %s110, %s112
    %p119 = scmp.eq.s32.totalorder %s18, 1
    %p120 = por %p118, %p119
    %p121 = scmp.ne.s32.totalorder %s112, %s113
    %p122 = scmp.eq.s32.totalorder %s18, 0
    %p123 = por %p121, %p122
    %p124 = scmp.ne.s32.totalorder %s112, %s113
    %p125 = scmp.eq.s32.totalorder %s19, 1
    %p126 = por %p124, %p125
    %p128 = scmp.ne.s32.totalorder %s113, %s127
    %p129 = scmp.eq.s32.totalorder %s19, 0
    %p130 = por %p128, %p129
    %s131 = ssub.s32 %s13, %s20
    %p132 = scmp.eq.s32.totalorder %s131, 0
    %s134 = sadd.s32 %s133, 1
    %s135 = scalar_select %p132, %s133, %s134
    %p138 = pneg %p132
    %p139 = scmp.eq.s32.totalorder %s13, 1
    %p140 = por %p138, %p139
    %p141 = scmp.ne.s32.totalorder %s133, %s136
    %p142 = scmp.eq.s32.totalorder %s13, 0
    %p143 = por %p141, %p142
    %p144 = scmp.ne.s32.totalorder %s133, %s136
    %p145 = scmp.eq.s32.totalorder %s18, 1
    %p146 = por %p144, %p145
    %p147 = scmp.ne.s32.totalorder %s136, %s137
    %p148 = scmp.eq.s32.totalorder %s18, 0
    %p149 = por %p147, %p148
    %p150 = scmp.ne.s32.totalorder %s136, %s137
    %p151 = scmp.eq.s32.totalorder %s19, 1
    %p152 = por %p150, %p151
    %p154 = scmp.ne.s32.totalorder %s137, %s153
    %p155 = scmp.eq.s32.totalorder %s19, 0
    %p156 = por %p154, %p155
    %s157 = ssub.s32 %s13, %s20
    %p158 = scmp.eq.s32.totalorder %s157, 0
    %s160 = sadd.s32 %s159, 1
    %s161 = scalar_select %p158, %s159, %s160
    %p164 = pneg %p158
    %p165 = scmp.eq.s32.totalorder %s13, 1
    %p166 = por %p164, %p165
    %p167 = scmp.ne.s32.totalorder %s159, %s162
    %p168 = scmp.eq.s32.totalorder %s13, 0
    %p169 = por %p167, %p168
    %p170 = scmp.ne.s32.totalorder %s159, %s162
    %p171 = scmp.eq.s32.totalorder %s18, 1
    %p172 = por %p170, %p171
    %p173 = scmp.ne.s32.totalorder %s162, %s163
    %p174 = scmp.eq.s32.totalorder %s18, 0
    %p175 = por %p173, %p174
    %p176 = scmp.ne.s32.totalorder %s162, %s163
    %p177 = scmp.eq.s32.totalorder %s19, 1
    %p178 = por %p176, %p177
    %p180 = scmp.ne.s32.totalorder %s163, %s179
    %p181 = scmp.eq.s32.totalorder %s19, 0
    %p182 = por %p180, %p181
    %p183 = scmp.le.s32.totalorder 1, %s13
    %p184 = scmp.lt.s32.totalorder %s13, 3
    %p185 = pnand %p183, %p184
    %p186 = pneg %p185
    // Predicated region
    $region9: #{encoder_layer_forward.2} parent=5 // pred_check
      _
    $region10: #{encoder_layer_forward.2} parent=5 // pred_check_branch
      %188 = sbr.rel (%p185) target = $region12
    $region11: #{encoder_layer_forward.2} parent=5 // pred_region
      %s189 = ssub.s32 %s13, 1
      // Predicated region
      $region13: #{encoder_layer_forward.2} parent=11 // pred_check
        %p190 = pneg %p60
      $region14: #{encoder_layer_forward.2} parent=11 // pred_check_branch
        %192 = sbr.rel (%p190) target = $region16
      $region15: #{encoder_layer_forward.2} parent=11 // pred_region
        _
      $region16: #{encoder_layer_forward.2} parent=11 // pred_fallthru
        _
      // Predicated region
      $region17: #{encoder_layer_forward.2} parent=11 // pred_check
        %p193 = pneg %p81
      $region18: #{encoder_layer_forward.2} parent=11 // pred_check_branch
        %195 = sbr.rel (%p193) target = $region20
      $region19: #{encoder_layer_forward.2} parent=11 // pred_region
        _
      $region20: #{encoder_layer_forward.2} parent=11 // pred_fallthru
        _
      // Predicated region
      $region21: #{encoder_layer_forward.2} parent=11 // pred_check
        %p196 = pneg %p102
      $region22: #{encoder_layer_forward.2} parent=11 // pred_check_branch
        %198 = sbr.rel (%p196) target = $region24
      $region23: #{encoder_layer_forward.2} parent=11 // pred_region
        _
      $region24: #{encoder_layer_forward.2} parent=11 // pred_fallthru
        _
      // Predicated region
      $region25: #{encoder_layer_forward.2} parent=11 // pred_check
        %p199 = pneg %p123
      $region26: #{encoder_layer_forward.2} parent=11 // pred_check_branch
        %201 = sbr.rel (%p199) target = $region28
      $region27: #{encoder_layer_forward.2} parent=11 // pred_region
        _
      $region28: #{encoder_layer_forward.2} parent=11 // pred_fallthru
        _
    $region12: #{encoder_layer_forward.2} parent=5 // pred_fallthru
      _
    %p202 = scmp.lt.s32.totalorder %s13, 2
    // Predicated region
    $region29: #{encoder_layer_forward.2} parent=5 // pred_check
      %p203 = pneg %p202
    $region30: #{encoder_layer_forward.2} parent=5 // pred_check_branch
      %205 = sbr.rel (%p203) target = $region32
    $region31: #{encoder_layer_forward.2} parent=5 // pred_region
      // Predicated region
      $region33: #{encoder_layer_forward.2} parent=31 // pred_check
        %p206 = pneg %p33
      $region34: #{encoder_layer_forward.2} parent=31 // pred_check_branch
        %208 = sbr.rel (%p206) target = $region36
      $region35: #{encoder_layer_forward.2} parent=31 // pred_region
        %p209 = scmp.lt.s32.totalorder %s13, 1
        %s210 = scalar_select %p209, %s13, 1
        %s211 = smul.addr %s210, 32
        %s212 = smul.addr %s211, 8
        %s213 = scalar_lea.vmem %s0, %s212
      $region36: #{encoder_layer_forward.2} parent=31 // pred_fallthru
        _
    $region32: #{encoder_layer_forward.2} parent=5 // pred_fallthru
      _
    %p214 = scmp.le.s32.totalorder 1, %s13
    %p215 = scmp.lt.s32.totalorder %s13, 3
    %p216 = pnand %p214, %p215
    %p217 = pneg %p216
    // Predicated region
    $region37: #{encoder_layer_forward.2} parent=5 // pred_check
      _
    $region38: #{encoder_layer_forward.2} parent=5 // pred_check_branch
      %219 = sbr.rel (%p216) target = $region40
    $region39: #{encoder_layer_forward.2} parent=5 // pred_region
      %s220 = ssub.s32 %s13, 1
      %p221 = scmp.lt.s32.totalorder %s18, 1
      %s222 = scalar_select %p221, %s18, 1
      %s223 = smul.addr %s222, 32
      %s224 = smul.addr %s223, 8
      %s225 = scalar_lea.vmem %s0, %s224
      %p226 = pneg %p39
      %p227 = pneg %p36
      %p228 = pneg %p60
      %p229 = pneg %p57
      %p230 = pneg %p81
      %p231 = pneg %p78
      %p232 = pneg %p102
      %p233 = pneg %p99
      %p234 = pneg %p123
      %p235 = pneg %p120
      %p236 = pneg %p149
      %p237 = pneg %p146
      %p238 = scmp.lt.s32.totalorder %s18, 1
      %s239 = scalar_select %p238, %s18, 1
      %s240 = smul.addr %s239, 32
      %s241 = smul.addr %s240, 8
      %s242 = scalar_lea.vmem %s5, %s241
      %p243 = pneg %p175
      %p244 = pneg %p172
      %p245 = scmp.lt.s32.totalorder %s18, 1
      %s246 = scalar_select %p245, %s18, 1
      %s247 = smul.addr %s246, 2
      %s248 = scalar_lea.vmem %s6, %s247
      %p249 = scmp.lt.s32.totalorder %s18, 1
      %s250 = scalar_select %p249, %s18, 1
      %s251 = smul.addr %s250, 32
      %s252 = smul.addr %s251, 8
      %s253 = scalar_lea.vmem %s0, %s252
      %p254 = scmp.lt.s32.totalorder %s18, 1
      %s255 = scalar_select %p254, %s18, 1
      %s256 = smul.addr %s255, 32
      %s257 = smul.addr %s256, 8
      %s258 = scalar_lea.vmem %s5, %s257
      %p259 = scmp.lt.s32.totalorder %s18, 1
      %s260 = scalar_select %p259, %s18, 1
      %s261 = smul.addr %s260, 2
      %s262 = scalar_lea.vmem %s6, %s261
      %v264 = vld [vmem:[%s253] sm:$0xff]
      %v265 = vld [vmem:[%s253 + $0x8] sm:$0xff]
      %v266 = vld [vmem:[%s253 + $0x10] sm:$0xff]
      %v267 = vld [vmem:[%s253 + $0x18] sm:$0xff]
      %v268 = vld [vmem:[%s253 + $0x20] sm:$0xff]
      %v269 = vld [vmem:[%s253 + $0x28] sm:$0xff]
      %v270 = vld [vmem:[%s253 + $0x30] sm:$0xff]
      %v271 = vld [vmem:[%s253 + $0x38] sm:$0xff]
      %v272 = vld [vmem:[%s253 + $0x40] sm:$0xff]
      %v273 = vld [vmem:[%s253 + $0x48] sm:$0xff]
      %v274 = vld [vmem:[%s253 + $0x50] sm:$0xff]
      %v275 = vld [vmem:[%s253 + $0x58] sm:$0xff]
      %v276 = vld [vmem:[%s253 + $0x60] sm:$0xff]
      %v277 = vld [vmem:[%s253 + $0x68] sm:$0xff]
      %v278 = vld [vmem:[%s253 + $0x70] sm:$0xff]
      %v279 = vld [vmem:[%s253 + $0x78] sm:$0xff]
      %v280 = vld [vmem:[%s253 + $0x80] sm:$0xff]
      %v281 = vld [vmem:[%s253 + $0x88] sm:$0xff]
      %v282 = vld [vmem:[%s253 + $0x90] sm:$0xff]
      %v283 = vld [vmem:[%s253 + $0x98] sm:$0xff]
      %v284 = vld [vmem:[%s253 + $0xa0] sm:$0xff]
      %v285 = vld [vmem:[%s253 + $0xa8] sm:$0xff]
      %v286 = vld [vmem:[%s253 + $0xb0] sm:$0xff]
      %v287 = vld [vmem:[%s253 + $0xb8] sm:$0xff]
      %v288 = vld [vmem:[%s253 + $0xc0] sm:$0xff]
      %v289 = vld [vmem:[%s253 + $0xc8] sm:$0xff]
      %v290 = vld [vmem:[%s253 + $0xd0] sm:$0xff]
      %v291 = vld [vmem:[%s253 + $0xd8] sm:$0xff]
      %v292 = vld [vmem:[%s253 + $0xe0] sm:$0xff]
      %v293 = vld [vmem:[%s253 + $0xe8] sm:$0xff]
      %v294 = vld [vmem:[%s253 + $0xf0] sm:$0xff]
      %v295 = vld [vmem:[%s253 + $0xf8] sm:$0xff]
      %v296 = vld [vmem:[%s1] sm:$0x1]
      %v298 = vlaneseq
      %v299 = vshrl.u32 %v298, 7
      %v300 = vsub.s32 0, %v299
      %v301 = vrot.slane %v296, %v300
      %v303 = vmul.f32 %v264, %v301
      %v304 = vmul.f32 %v265, %v301
      %v305 = vmul.f32 %v266, %v301
      %v306 = vmul.f32 %v267, %v301
      %v307 = vmul.f32 %v268, %v301
      %v308 = vmul.f32 %v269, %v301
      %v309 = vmul.f32 %v270, %v301
      %v310 = vmul.f32 %v271, %v301
      %v311 = vmul.f32 %v272, %v301
      %v312 = vmul.f32 %v273, %v301
      %v313 = vmul.f32 %v274, %v301
      %v314 = vmul.f32 %v275, %v301
      %v315 = vmul.f32 %v276, %v301
      %v316 = vmul.f32 %v277, %v301
      %v317 = vmul.f32 %v278, %v301
      %v318 = vmul.f32 %v279, %v301
      %v319 = vmul.f32 %v280, %v301
      %v320 = vmul.f32 %v281, %v301
      %v321 = vmul.f32 %v282, %v301
      %v322 = vmul.f32 %v283, %v301
      %v323 = vmul.f32 %v284, %v301
      %v324 = vmul.f32 %v285, %v301
      %v325 = vmul.f32 %v286, %v301
      %v326 = vmul.f32 %v287, %v301
      %v327 = vmul.f32 %v288, %v301
      %v328 = vmul.f32 %v289, %v301
      %v329 = vmul.f32 %v290, %v301
      %v330 = vmul.f32 %v291, %v301
      %v331 = vmul.f32 %v292, %v301
      %v332 = vmul.f32 %v293, %v301
      %v333 = vmul.f32 %v294, %v301
      %v334 = vmul.f32 %v295, %v301
      %v335 = vld [vmem:[%s2] sm:$0x1]
      %v337 = vlaneseq
      %v338 = vshrl.u32 %v337, 7
      %v339 = vsub.s32 0, %v338
      %v340 = vrot.slane %v335, %v339
      %v342 = vadd.f32 %v303, %v340
      %v343 = vadd.f32 %v304, %v340
      %v344 = vadd.f32 %v305, %v340
      %v345 = vadd.f32 %v306, %v340
      %v346 = vadd.f32 %v307, %v340
      %v347 = vadd.f32 %v308, %v340
      %v348 = vadd.f32 %v309, %v340
      %v349 = vadd.f32 %v310, %v340
      %v350 = vadd.f32 %v311, %v340
      %v351 = vadd.f32 %v312, %v340
      %v352 = vadd.f32 %v313, %v340
      %v353 = vadd.f32 %v314, %v340
      %v354 = vadd.f32 %v315, %v340
      %v355 = vadd.f32 %v316, %v340
      %v356 = vadd.f32 %v317, %v340
      %v357 = vadd.f32 %v318, %v340
      %v358 = vadd.f32 %v319, %v340
      %v359 = vadd.f32 %v320, %v340
      %v360 = vadd.f32 %v321, %v340
      %v361 = vadd.f32 %v322, %v340
      %v362 = vadd.f32 %v323, %v340
      %v363 = vadd.f32 %v324, %v340
      %v364 = vadd.f32 %v325, %v340
      %v365 = vadd.f32 %v326, %v340
      %v366 = vadd.f32 %v327, %v340
      %v367 = vadd.f32 %v328, %v340
      %v368 = vadd.f32 %v329, %v340
      %v369 = vadd.f32 %v330, %v340
      %v370 = vadd.f32 %v331, %v340
      %v371 = vadd.f32 %v332, %v340
      %v372 = vadd.f32 %v333, %v340
      %v373 = vadd.f32 %v334, %v340
      %374 = vst [vmem:[#allocation2] sm:$0xff] 0.0
      %375 = vst [vmem:[#allocation2 + $0x8] sm:$0xff] 0.0
      %376 = vst [vmem:[#allocation2 + $0x10] sm:$0x3] 0.0
      %s377 = scalar_lea.vmem [#allocation2], 408
      %378 = vst [vmem:[%s377] sm:$0xff] 0.0
      %379 = vst [vmem:[%s377 + $0x8] sm:$0xff] 0.0
      %380 = vst [vmem:[%s377 + $0x10] sm:$0x3] 0.0
      %s381 = scalar_lea.vmem [#allocation2], 24
      %382 = vst [vmem:[%s381] sm:$0x1] 0.0
      %383 = vst [vmem:[%s381 + $0x18] sm:$0x1] 0.0
      %384 = vst [vmem:[%s381 + $0x30] sm:$0x1] 0.0
      %385 = vst [vmem:[%s381 + $0x48] sm:$0x1] 0.0
      %386 = vst [vmem:[%s381 + $0x60] sm:$0x1] 0.0
      %387 = vst [vmem:[%s381 + $0x78] sm:$0x1] 0.0
      %388 = vst [vmem:[%s381 + $0x90] sm:$0x1] 0.0
      %389 = vst [vmem:[%s381 + $0xa8] sm:$0x1] 0.0
      %390 = vst [vmem:[%s381 + $0xc0] sm:$0x1] 0.0
      %391 = vst [vmem:[%s381 + $0xd8] sm:$0x1] 0.0
      %392 = vst [vmem:[%s381 + $0xf0] sm:$0x1] 0.0
      %393 = vst [vmem:[%s381 + $0x108] sm:$0x1] 0.0
      %394 = vst [vmem:[%s381 + $0x120] sm:$0x1] 0.0
      %395 = vst [vmem:[%s381 + $0x138] sm:$0x1] 0.0
      %396 = vst [vmem:[%s381 + $0x150] sm:$0x1] 0.0
      %397 = vst [vmem:[%s381 + $0x168] sm:$0x1] 0.0
      %398 = vst [vmem:[%s381 + $0x11] sm:$0x1] 0.0
      %399 = vst [vmem:[%s381 + $0x29] sm:$0x1] 0.0
      %400 = vst [vmem:[%s381 + $0x41] sm:$0x1] 0.0
      %401 = vst [vmem:[%s381 + $0x59] sm:$0x1] 0.0
      %402 = vst [vmem:[%s381 + $0x71] sm:$0x1] 0.0
      %403 = vst [vmem:[%s381 + $0x89] sm:$0x1] 0.0
      %404 = vst [vmem:[%s381 + $0xa1] sm:$0x1] 0.0
      %405 = vst [vmem:[%s381 + $0xb9] sm:$0x1] 0.0
      %406 = vst [vmem:[%s381 + $0xd1] sm:$0x1] 0.0
      %407 = vst [vmem:[%s381 + $0xe9] sm:$0x1] 0.0
      %408 = vst [vmem:[%s381 + $0x101] sm:$0x1] 0.0
      %409 = vst [vmem:[%s381 + $0x119] sm:$0x1] 0.0
      %410 = vst [vmem:[%s381 + $0x131] sm:$0x1] 0.0
      %411 = vst [vmem:[%s381 + $0x149] sm:$0x1] 0.0
      %412 = vst [vmem:[%s381 + $0x161] sm:$0x1] 0.0
      %413 = vst [vmem:[%s381 + $0x179] sm:$0x1] 0.0
      %414 = vst [vmem:[%s381 + $0x1] sm:$0xff] %v342
      %415 = vst [vmem:[%s381 + $0x9] sm:$0xff] %v343
      %416 = vst [vmem:[%s381 + $0x19] sm:$0xff] %v344
      %417 = vst [vmem:[%s381 + $0x21] sm:$0xff] %v345
      %418 = vst [vmem:[%s381 + $0x31] sm:$0xff] %v346
      %419 = vst [vmem:[%s381 + $0x39] sm:$0xff] %v347
      %420 = vst [vmem:[%s381 + $0x49] sm:$0xff] %v348
      %421 = vst [vmem:[%s381 + $0x51] sm:$0xff] %v349
      %422 = vst [vmem:[%s381 + $0x61] sm:$0xff] %v350
      %423 = vst [vmem:[%s381 + $0x69] sm:$0xff] %v351
      %424 = vst [vmem:[%s381 + $0x79] sm:$0xff] %v352
      %425 = vst [vmem:[%s381 + $0x81] sm:$0xff] %v353
      %426 = vst [vmem:[%s381 + $0x91] sm:$0xff] %v354
      %427 = vst [vmem:[%s381 + $0x99] sm:$0xff] %v355
      %428 = vst [vmem:[%s381 + $0xa9] sm:$0xff] %v356
      %429 = vst [vmem:[%s381 + $0xb1] sm:$0xff] %v357
      %430 = vst [vmem:[%s381 + $0xc1] sm:$0xff] %v358
      %431 = vst [vmem:[%s381 + $0xc9] sm:$0xff] %v359
      %432 = vst [vmem:[%s381 + $0xd9] sm:$0xff] %v360
      %433 = vst [vmem:[%s381 + $0xe1] sm:$0xff] %v361
      %434 = vst [vmem:[%s381 + $0xf1] sm:$0xff] %v362
      %435 = vst [vmem:[%s381 + $0xf9] sm:$0xff] %v363
      %436 = vst [vmem:[%s381 + $0x109] sm:$0xff] %v364
      %437 = vst [vmem:[%s381 + $0x111] sm:$0xff] %v365
      %438 = vst [vmem:[%s381 + $0x121] sm:$0xff] %v366
      %439 = vst [vmem:[%s381 + $0x129] sm:$0xff] %v367
      %440 = vst [vmem:[%s381 + $0x139] sm:$0xff] %v368
      %441 = vst [vmem:[%s381 + $0x141] sm:$0xff] %v369
      %442 = vst [vmem:[%s381 + $0x151] sm:$0xff] %v370
      %443 = vst [vmem:[%s381 + $0x159] sm:$0xff] %v371
      %444 = vst [vmem:[%s381 + $0x169] sm:$0xff] %v372
      %445 = vst [vmem:[%s381 + $0x171] sm:$0xff] %v373
      %v446 = vld [vmem:[#allocation2] sm:$0xff]
      %v447 = vld [vmem:[#allocation2 + $0x8] sm:$0xff]
      %v448 = vld [vmem:[#allocation2 + $0x18] sm:$0xff]
      %v449 = vld [vmem:[#allocation2 + $0x20] sm:$0xff]
      %v450 = vld [vmem:[#allocation2 + $0x30] sm:$0xff]
      %v451 = vld [vmem:[#allocation2 + $0x38] sm:$0xff]
      %v452 = vld [vmem:[#allocation2 + $0x48] sm:$0xff]
      %v453 = vld [vmem:[#allocation2 + $0x50] sm:$0xff]
      %v454 = vld [vmem:[#allocation2 + $0x60] sm:$0xff]
      %v455 = vld [vmem:[#allocation2 + $0x68] sm:$0xff]
      %v456 = vld [vmem:[#allocation2 + $0x78] sm:$0xff]
      %v457 = vld [vmem:[#allocation2 + $0x80] sm:$0xff]
      %v458 = vld [vmem:[#allocation2 + $0x90] sm:$0xff]
      %v459 = vld [vmem:[#allocation2 + $0x98] sm:$0xff]
      %v460 = vld [vmem:[#allocation2 + $0xa8] sm:$0xff]
      %v461 = vld [vmem:[#allocation2 + $0xb0] sm:$0xff]
      %v462 = vld [vmem:[#allocation2 + $0xc0] sm:$0xff]
      %v463 = vld [vmem:[#allocation2 + $0xc8] sm:$0xff]
      %v464 = vld [vmem:[#allocation2 + $0xd8] sm:$0xff]
      %v465 = vld [vmem:[#allocation2 + $0xe0] sm:$0xff]
      %v466 = vld [vmem:[#allocation2 + $0xf0] sm:$0xff]
      %v467 = vld [vmem:[#allocation2 + $0xf8] sm:$0xff]
      %v468 = vld [vmem:[#allocation2 + $0x108] sm:$0xff]
      %v469 = vld [vmem:[#allocation2 + $0x110] sm:$0xff]
      %v470 = vld [vmem:[#allocation2 + $0x120] sm:$0xff]
      %v471 = vld [vmem:[#allocation2 + $0x128] sm:$0xff]
      %v472 = vld [vmem:[#allocation2 + $0x138] sm:$0xff]
      %v473 = vld [vmem:[#allocation2 + $0x140] sm:$0xff]
      %v474 = vld [vmem:[#allocation2 + $0x150] sm:$0xff]
      %v475 = vld [vmem:[#allocation2 + $0x158] sm:$0xff]
      %v476 = vld [vmem:[#allocation2 + $0x168] sm:$0xff]
      %v477 = vld [vmem:[#allocation2 + $0x170] sm:$0xff]
      %v478 = vpack.c.bf16 %v447, %v446
      %v479 = vpack.c.bf16 %v449, %v448
      %v480 = vpack.c.bf16 %v451, %v450
      %v481 = vpack.c.bf16 %v453, %v452
      %v482 = vpack.c.bf16 %v455, %v454
      %v483 = vpack.c.bf16 %v457, %v456
      %v484 = vpack.c.bf16 %v459, %v458
      %v485 = vpack.c.bf16 %v461, %v460
      %v486 = vpack.c.bf16 %v463, %v462
      %v487 = vpack.c.bf16 %v465, %v464
      %v488 = vpack.c.bf16 %v467, %v466
      %v489 = vpack.c.bf16 %v469, %v468
      %v490 = vpack.c.bf16 %v471, %v470
      %v491 = vpack.c.bf16 %v473, %v472
      %v492 = vpack.c.bf16 %v475, %v474
      %v493 = vpack.c.bf16 %v477, %v476
      %494 = vst [vmem:[#allocation3] sm:$0xff] %v478
      %495 = vst [vmem:[#allocation3 + $0x48] sm:$0xff] %v479
      %496 = vst [vmem:[#allocation3 + $0x90] sm:$0xff] %v480
      %497 = vst [vmem:[#allocation3 + $0xd8] sm:$0xff] %v481
      %498 = vst [vmem:[#allocation3 + $0x120] sm:$0xff] %v482
      %499 = vst [vmem:[#allocation3 + $0x168] sm:$0xff] %v483
      %500 = vst [vmem:[#allocation3 + $0x1b0] sm:$0xff] %v484
      %501 = vst [vmem:[#allocation3 + $0x1f8] sm:$0xff] %v485
      %502 = vst [vmem:[#allocation3 + $0x240] sm:$0xff] %v486
      %503 = vst [vmem:[#allocation3 + $0x288] sm:$0xff] %v487
      %504 = vst [vmem:[#allocation3 + $0x2d0] sm:$0xff] %v488
      %505 = vst [vmem:[#allocation3 + $0x318] sm:$0xff] %v489
      %506 = vst [vmem:[#allocation3 + $0x360] sm:$0xff] %v490
      %507 = vst [vmem:[#allocation3 + $0x3a8] sm:$0xff] %v491
      %508 = vst [vmem:[#allocation3 + $0x3f0] sm:$0xff] %v492
      %509 = vst [vmem:[#allocation3 + $0x438] sm:$0xff] %v493
      %v510 = vld [vmem:[#allocation2 + $0x1] sm:$0xff]
      %v511 = vld [vmem:[#allocation2 + $0x9] sm:$0xff]
      %v512 = vld [vmem:[#allocation2 + $0x19] sm:$0xff]
      %v513 = vld [vmem:[#allocation2 + $0x21] sm:$0xff]
      %v514 = vld [vmem:[#allocation2 + $0x31] sm:$0xff]
      %v515 = vld [vmem:[#allocation2 + $0x39] sm:$0xff]
      %v516 = vld [vmem:[#allocation2 + $0x49] sm:$0xff]
      %v517 = vld [vmem:[#allocation2 + $0x51] sm:$0xff]
      %v518 = vld [vmem:[#allocation2 + $0x61] sm:$0xff]
      %v519 = vld [vmem:[#allocation2 + $0x69] sm:$0xff]
      %v520 = vld [vmem:[#allocation2 + $0x79] sm:$0xff]
      %v521 = vld [vmem:[#allocation2 + $0x81] sm:$0xff]
      %v522 = vld [vmem:[#allocation2 + $0x91] sm:$0xff]
      %v523 = vld [vmem:[#allocation2 + $0x99] sm:$0xff]
      %v524 = vld [vmem:[#allocation2 + $0xa9] sm:$0xff]
      %v525 = vld [vmem:[#allocation2 + $0xb1] sm:$0xff]
      %v526 = vld [vmem:[#allocation2 + $0xc1] sm:$0xff]
      %v527 = vld [vmem:[#allocation2 + $0xc9] sm:$0xff]
      %v528 = vld [vmem:[#allocation2 + $0xd9] sm:$0xff]
      %v529 = vld [vmem:[#allocation2 + $0xe1] sm:$0xff]
      %v530 = vld [vmem:[#allocation2 + $0xf1] sm:$0xff]
      %v531 = vld [vmem:[#allocation2 + $0xf9] sm:$0xff]
      %v532 = vld [vmem:[#allocation2 + $0x109] sm:$0xff]
      %v533 = vld [vmem:[#allocation2 + $0x111] sm:$0xff]
      %v534 = vld [vmem:[#allocation2 + $0x121] sm:$0xff]
      %v535 = vld [vmem:[#allocation2 + $0x129] sm:$0xff]
      %v536 = vld [vmem:[#allocation2 + $0x139] sm:$0xff]
      %v537 = vld [vmem:[#allocation2 + $0x141] sm:$0xff]
      %v538 = vld [vmem:[#allocation2 + $0x151] sm:$0xff]
      %v539 = vld [vmem:[#allocation2 + $0x159] sm:$0xff]
      %v540 = vld [vmem:[#allocation2 + $0x169] sm:$0xff]
      %v541 = vld [vmem:[#allocation2 + $0x171] sm:$0xff]
      %v542 = vpack.c.bf16 %v511, %v510
      %v543 = vpack.c.bf16 %v513, %v512
      %v544 = vpack.c.bf16 %v515, %v514
      %v545 = vpack.c.bf16 %v517, %v516
      %v546 = vpack.c.bf16 %v519, %v518
      %v547 = vpack.c.bf16 %v521, %v520
      %v548 = vpack.c.bf16 %v523, %v522
      %v549 = vpack.c.bf16 %v525, %v524
      %v550 = vpack.c.bf16 %v527, %v526
      %v551 = vpack.c.bf16 %v529, %v528
      %v552 = vpack.c.bf16 %v531, %v530
      %v553 = vpack.c.bf16 %v533, %v532
      %v554 = vpack.c.bf16 %v535, %v534
      %v555 = vpack.c.bf16 %v537, %v536
      %v556 = vpack.c.bf16 %v539, %v538
      %v557 = vpack.c.bf16 %v541, %v540
      %558 = vst [vmem:[#allocation3 + $0x8] sm:$0xff] %v542
      %559 = vst [vmem:[#allocation3 + $0x50] sm:$0xff] %v543
      %560 = vst [vmem:[#allocation3 + $0x98] sm:$0xff] %v544
      %561 = vst [vmem:[#allocation3 + $0xe0] sm:$0xff] %v545
      %562 = vst [vmem:[#allocation3 + $0x128] sm:$0xff] %v546
      %563 = vst [vmem:[#allocation3 + $0x170] sm:$0xff] %v547
      %564 = vst [vmem:[#allocation3 + $0x1b8] sm:$0xff] %v548
      %565 = vst [vmem:[#allocation3 + $0x200] sm:$0xff] %v549
      %566 = vst [vmem:[#allocation3 + $0x248] sm:$0xff] %v550
      %567 = vst [vmem:[#allocation3 + $0x290] sm:$0xff] %v551
      %568 = vst [vmem:[#allocation3 + $0x2d8] sm:$0xff] %v552
      %569 = vst [vmem:[#allocation3 + $0x320] sm:$0xff] %v553
      %570 = vst [vmem:[#allocation3 + $0x368] sm:$0xff] %v554
      %571 = vst [vmem:[#allocation3 + $0x3b0] sm:$0xff] %v555
      %572 = vst [vmem:[#allocation3 + $0x3f8] sm:$0xff] %v556
      %573 = vst [vmem:[#allocation3 + $0x440] sm:$0xff] %v557
      %v574 = vld [vmem:[#allocation2 + $0x2] sm:$0xff]
      %v575 = vld [vmem:[#allocation2 + $0xa] sm:$0xff]
      %v576 = vld [vmem:[#allocation2 + $0x1a] sm:$0xff]
      %v577 = vld [vmem:[#allocation2 + $0x22] sm:$0xff]
      %v578 = vld [vmem:[#allocation2 + $0x32] sm:$0xff]
      %v579 = vld [vmem:[#allocation2 + $0x3a] sm:$0xff]
      %v580 = vld [vmem:[#allocation2 + $0x4a] sm:$0xff]
      %v581 = vld [vmem:[#allocation2 + $0x52] sm:$0xff]
      %v582 = vld [vmem:[#allocation2 + $0x62] sm:$0xff]
      %v583 = vld [vmem:[#allocation2 + $0x6a] sm:$0xff]
      %v584 = vld [vmem:[#allocation2 + $0x7a] sm:$0xff]
      %v585 = vld [vmem:[#allocation2 + $0x82] sm:$0xff]
      %v586 = vld [vmem:[#allocation2 + $0x92] sm:$0xff]
      %v587 = vld [vmem:[#allocation2 + $0x9a] sm:$0xff]
      %v588 = vld [vmem:[#allocation2 + $0xaa] sm:$0xff]
      %v589 = vld [vmem:[#allocation2 + $0xb2] sm:$0xff]
      %v590 = vld [vmem:[#allocation2 + $0xc2] sm:$0xff]
      %v591 = vld [vmem:[#allocation2 + $0xca] sm:$0xff]
      %v592 = vld [vmem:[#allocation2 + $0xda] sm:$0xff]
      %v593 = vld [vmem:[#allocation2 + $0xe2] sm:$0xff]
      %v594 = vld [vmem:[#allocation2 + $0xf2] sm:$0xff]
      %v595 = vld [vmem:[#allocation2 + $0xfa] sm:$0xff]
      %v596 = vld [vmem:[#allocation2 + $0x10a] sm:$0xff]
      %v597 = vld [vmem:[#allocation2 + $0x112] sm:$0xff]
      %v598 = vld [vmem:[#allocation2 + $0x122] sm:$0xff]
      %v599 = vld [vmem:[#allocation2 + $0x12a] sm:$0xff]
      %v600 = vld [vmem:[#allocation2 + $0x13a] sm:$0xff]
      %v601 = vld [vmem:[#allocation2 + $0x142] sm:$0xff]
      %v602 = vld [vmem:[#allocation2 + $0x152] sm:$0xff]
      %v603 = vld [vmem:[#allocation2 + $0x15a] sm:$0xff]
      %v604 = vld [vmem:[#allocation2 + $0x16a] sm:$0xff]
      %v605 = vld [vmem:[#allocation2 + $0x172] sm:$0xff]
      %v606 = vpack.c.bf16 %v575, %v574
      %v607 = vpack.c.bf16 %v577, %v576
      %v608 = vpack.c.bf16 %v579, %v578
      %v609 = vpack.c.bf16 %v581, %v580
      %v610 = vpack.c.bf16 %v583, %v582
      %v611 = vpack.c.bf16 %v585, %v584
      %v612 = vpack.c.bf16 %v587, %v586
      %v613 = vpack.c.bf16 %v589, %v588
      %v614 = vpack.c.bf16 %v591, %v590
      %v615 = vpack.c.bf16 %v593, %v592
      %v616 = vpack.c.bf16 %v595, %v594
      %v617 = vpack.c.bf16 %v597, %v596
      %v618 = vpack.c.bf16 %v599, %v598
      %v619 = vpack.c.bf16 %v601, %v600
      %v620 = vpack.c.bf16 %v603, %v602
      %v621 = vpack.c.bf16 %v605, %v604
      %622 = vst [vmem:[#allocation3 + $0x10] sm:$0xff] %v606
      %623 = vst [vmem:[#allocation3 + $0x58] sm:$0xff] %v607
      %624 = vst [vmem:[#allocation3 + $0xa0] sm:$0xff] %v608
      %625 = vst [vmem:[#allocation3 + $0xe8] sm:$0xff] %v609
      %626 = vst [vmem:[#allocation3 + $0x130] sm:$0xff] %v610
      %627 = vst [vmem:[#allocation3 + $0x178] sm:$0xff] %v611
      %628 = vst [vmem:[#allocation3 + $0x1c0] sm:$0xff] %v612
      %629 = vst [vmem:[#allocation3 + $0x208] sm:$0xff] %v613
      %630 = vst [vmem:[#allocation3 + $0x250] sm:$0xff] %v614
      %631 = vst [vmem:[#allocation3 + $0x298] sm:$0xff] %v615
      %632 = vst [vmem:[#allocation3 + $0x2e0] sm:$0xff] %v616
      %633 = vst [vmem:[#allocation3 + $0x328] sm:$0xff] %v617
      %634 = vst [vmem:[#allocation3 + $0x370] sm:$0xff] %v618
      %635 = vst [vmem:[#allocation3 + $0x3b8] sm:$0xff] %v619
      %636 = vst [vmem:[#allocation3 + $0x400] sm:$0xff] %v620
      %637 = vst [vmem:[#allocation3 + $0x448] sm:$0xff] %v621
      %v638 = vld [vmem:[%s381] sm:$0xff]
      %v639 = vld [vmem:[%s381 + $0x8] sm:$0xff]
      %v640 = vld [vmem:[%s381 + $0x18] sm:$0xff]
      %v641 = vld [vmem:[%s381 + $0x20] sm:$0xff]
      %v642 = vld [vmem:[%s381 + $0x30] sm:$0xff]
      %v643 = vld [vmem:[%s381 + $0x38] sm:$0xff]
      %v644 = vld [vmem:[%s381 + $0x48] sm:$0xff]
      %v645 = vld [vmem:[%s381 + $0x50] sm:$0xff]
      %v646 = vld [vmem:[%s381 + $0x60] sm:$0xff]
      %v647 = vld [vmem:[%s381 + $0x68] sm:$0xff]
      %v648 = vld [vmem:[%s381 + $0x78] sm:$0xff]
      %v649 = vld [vmem:[%s381 + $0x80] sm:$0xff]
      %v650 = vld [vmem:[%s381 + $0x90] sm:$0xff]
      %v651 = vld [vmem:[%s381 + $0x98] sm:$0xff]
      %v652 = vld [vmem:[%s381 + $0xa8] sm:$0xff]
      %v653 = vld [vmem:[%s381 + $0xb0] sm:$0xff]
      %v654 = vld [vmem:[%s381 + $0xc0] sm:$0xff]
      %v655 = vld [vmem:[%s381 + $0xc8] sm:$0xff]
      %v656 = vld [vmem:[%s381 + $0xd8] sm:$0xff]
      %v657 = vld [vmem:[%s381 + $0xe0] sm:$0xff]
      %v658 = vld [vmem:[%s381 + $0xf0] sm:$0xff]
      %v659 = vld [vmem:[%s381 + $0xf8] sm:$0xff]
      %v660 = vld [vmem:[%s381 + $0x108] sm:$0xff]
      %v661 = vld [vmem:[%s381 + $0x110] sm:$0xff]
      %v662 = vld [vmem:[%s381 + $0x120] sm:$0xff]
      %v663 = vld [vmem:[%s381 + $0x128] sm:$0xff]
      %v664 = vld [vmem:[%s381 + $0x138] sm:$0xff]
      %v665 = vld [vmem:[%s381 + $0x140] sm:$0xff]
      %v666 = vld [vmem:[%s381 + $0x150] sm:$0xff]
      %v667 = vld [vmem:[%s381 + $0x158] sm:$0xff]
      %v668 = vld [vmem:[%s381 + $0x168] sm:$0xff]
      %v669 = vld [vmem:[%s381 + $0x170] sm:$0xff]
      %v670 = vpack.c.bf16 %v639, %v638
      %v671 = vpack.c.bf16 %v641, %v640
      %v672 = vpack.c.bf16 %v643, %v642
      %v673 = vpack.c.bf16 %v645, %v644
      %v674 = vpack.c.bf16 %v647, %v646
      %v675 = vpack.c.bf16 %v649, %v648
      %v676 = vpack.c.bf16 %v651, %v650
      %v677 = vpack.c.bf16 %v653, %v652
      %v678 = vpack.c.bf16 %v655, %v654
      %v679 = vpack.c.bf16 %v657, %v656
      %v680 = vpack.c.bf16 %v659, %v658
      %v681 = vpack.c.bf16 %v661, %v660
      %v682 = vpack.c.bf16 %v663, %v662
      %v683 = vpack.c.bf16 %v665, %v664
      %v684 = vpack.c.bf16 %v667, %v666
      %v685 = vpack.c.bf16 %v669, %v668
      %686 = vst [vmem:[#allocation3 + $0x18] sm:$0xff] %v670
      %687 = vst [vmem:[#allocation3 + $0x60] sm:$0xff] %v671
      %688 = vst [vmem:[#allocation3 + $0xa8] sm:$0xff] %v672
      %689 = vst [vmem:[#allocation3 + $0xf0] sm:$0xff] %v673
      %690 = vst [vmem:[#allocation3 + $0x138] sm:$0xff] %v674
      %691 = vst [vmem:[#allocation3 + $0x180] sm:$0xff] %v675
      %692 = vst [vmem:[#allocation3 + $0x1c8] sm:$0xff] %v676
      %693 = vst [vmem:[#allocation3 + $0x210] sm:$0xff] %v677
      %694 = vst [vmem:[#allocation3 + $0x258] sm:$0xff] %v678
      %695 = vst [vmem:[#allocation3 + $0x2a0] sm:$0xff] %v679
      %696 = vst [vmem:[#allocation3 + $0x2e8] sm:$0xff] %v680
      %697 = vst [vmem:[#allocation3 + $0x330] sm:$0xff] %v681
      %698 = vst [vmem:[#allocation3 + $0x378] sm:$0xff] %v682
      %699 = vst [vmem:[#allocation3 + $0x3c0] sm:$0xff] %v683
      %700 = vst [vmem:[#allocation3 + $0x408] sm:$0xff] %v684
      %701 = vst [vmem:[#allocation3 + $0x450] sm:$0xff] %v685
      %v702 = vpack.c.bf16 %v343, %v342
      %v703 = vpack.c.bf16 %v345, %v344
      %v704 = vpack.c.bf16 %v347, %v346
      %v705 = vpack.c.bf16 %v349, %v348
      %v706 = vpack.c.bf16 %v351, %v350
      %v707 = vpack.c.bf16 %v353, %v352
      %v708 = vpack.c.bf16 %v355, %v354
      %v709 = vpack.c.bf16 %v357, %v356
      %v710 = vpack.c.bf16 %v359, %v358
      %v711 = vpack.c.bf16 %v361, %v360
      %v712 = vpack.c.bf16 %v363, %v362
      %v713 = vpack.c.bf16 %v365, %v364
      %v714 = vpack.c.bf16 %v367, %v366
      %v715 = vpack.c.bf16 %v369, %v368
      %v716 = vpack.c.bf16 %v371, %v370
      %v717 = vpack.c.bf16 %v373, %v372
      %718 = vst [vmem:[#allocation3 + $0x20] sm:$0xff] %v702
      %719 = vst [vmem:[#allocation3 + $0x68] sm:$0xff] %v703
      %720 = vst [vmem:[#allocation3 + $0xb0] sm:$0xff] %v704
      %721 = vst [vmem:[#allocation3 + $0xf8] sm:$0xff] %v705
      %722 = vst [vmem:[#allocation3 + $0x140] sm:$0xff] %v706
      %723 = vst [vmem:[#allocation3 + $0x188] sm:$0xff] %v707
      %724 = vst [vmem:[#allocation3 + $0x1d0] sm:$0xff] %v708
      %725 = vst [vmem:[#allocation3 + $0x218] sm:$0xff] %v709
      %726 = vst [vmem:[#allocation3 + $0x260] sm:$0xff] %v710
      %727 = vst [vmem:[#allocation3 + $0x2a8] sm:$0xff] %v711
      %728 = vst [vmem:[#allocation3 + $0x2f0] sm:$0xff] %v712
      %729 = vst [vmem:[#allocation3 + $0x338] sm:$0xff] %v713
      %730 = vst [vmem:[#allocation3 + $0x380] sm:$0xff] %v714
      %731 = vst [vmem:[#allocation3 + $0x3c8] sm:$0xff] %v715
      %732 = vst [vmem:[#allocation3 + $0x410] sm:$0xff] %v716
      %733 = vst [vmem:[#allocation3 + $0x458] sm:$0xff] %v717
      %v734 = vld [vmem:[%s381 + $0x2] sm:$0xff]
      %v735 = vld [vmem:[%s381 + $0xa] sm:$0xff]
      %v736 = vld [vmem:[%s381 + $0x1a] sm:$0xff]
      %v737 = vld [vmem:[%s381 + $0x22] sm:$0xff]
      %v738 = vld [vmem:[%s381 + $0x32] sm:$0xff]
      %v739 = vld [vmem:[%s381 + $0x3a] sm:$0xff]
      %v740 = vld [vmem:[%s381 + $0x4a] sm:$0xff]
      %v741 = vld [vmem:[%s381 + $0x52] sm:$0xff]
      %v742 = vld [vmem:[%s381 + $0x62] sm:$0xff]
      %v743 = vld [vmem:[%s381 + $0x6a] sm:$0xff]
      %v744 = vld [vmem:[%s381 + $0x7a] sm:$0xff]
      %v745 = vld [vmem:[%s381 + $0x82] sm:$0xff]
      %v746 = vld [vmem:[%s381 + $0x92] sm:$0xff]
      %v747 = vld [vmem:[%s381 + $0x9a] sm:$0xff]
      %v748 = vld [vmem:[%s381 + $0xaa] sm:$0xff]
      %v749 = vld [vmem:[%s381 + $0xb2] sm:$0xff]
      %v750 = vld [vmem:[%s381 + $0xc2] sm:$0xff]
      %v751 = vld [vmem:[%s381 + $0xca] sm:$0xff]
      %v752 = vld [vmem:[%s381 + $0xda] sm:$0xff]
      %v753 = vld [vmem:[%s381 + $0xe2] sm:$0xff]
      %v754 = vld [vmem:[%s381 + $0xf2] sm:$0xff]
      %v755 = vld [vmem:[%s381 + $0xfa] sm:$0xff]
      %v756 = vld [vmem:[%s381 + $0x10a] sm:$0xff]
      %v757 = vld [vmem:[%s381 + $0x112] sm:$0xff]
      %v758 = vld [vmem:[%s381 + $0x122] sm:$0xff]
      %v759 = vld [vmem:[%s381 + $0x12a] sm:$0xff]
      %v760 = vld [vmem:[%s381 + $0x13a] sm:$0xff]
      %v761 = vld [vmem:[%s381 + $0x142] sm:$0xff]
      %v762 = vld [vmem:[%s381 + $0x152] sm:$0xff]
      %v763 = vld [vmem:[%s381 + $0x15a] sm:$0xff]
      %v764 = vld [vmem:[%s381 + $0x16a] sm:$0xff]
      %v765 = vld [vmem:[%s381 + $0x172] sm:$0xff]
      %v766 = vpack.c.bf16 %v735, %v734
      %v767 = vpack.c.bf16 %v737, %v736
      %v768 = vpack.c.bf16 %v739, %v738
      %v769 = vpack.c.bf16 %v741, %v740
      %v770 = vpack.c.bf16 %v743, %v742
      %v771 = vpack.c.bf16 %v745, %v744
      %v772 = vpack.c.bf16 %v747, %v746
      %v773 = vpack.c.bf16 %v749, %v748
      %v774 = vpack.c.bf16 %v751, %v750
      %v775 = vpack.c.bf16 %v753, %v752
      %v776 = vpack.c.bf16 %v755, %v754
      %v777 = vpack.c.bf16 %v757, %v756
      %v778 = vpack.c.bf16 %v759, %v758
      %v779 = vpack.c.bf16 %v761, %v760
      %v780 = vpack.c.bf16 %v763, %v762
      %v781 = vpack.c.bf16 %v765, %v764
      %782 = vst [vmem:[#allocation3 + $0x28] sm:$0xff] %v766
      %783 = vst [vmem:[#allocation3 + $0x70] sm:$0xff] %v767
      %784 = vst [vmem:[#allocation3 + $0xb8] sm:$0xff] %v768
      %785 = vst [vmem:[#allocation3 + $0x100] sm:$0xff] %v769
      %786 = vst [vmem:[#allocation3 + $0x148] sm:$0xff] %v770
      %787 = vst [vmem:[#allocation3 + $0x190] sm:$0xff] %v771
      %788 = vst [vmem:[#allocation3 + $0x1d8] sm:$0xff] %v772
      %789 = vst [vmem:[#allocation3 + $0x220] sm:$0xff] %v773
      %790 = vst [vmem:[#allocation3 + $0x268] sm:$0xff] %v774
      %791 = vst [vmem:[#allocation3 + $0x2b0] sm:$0xff] %v775
      %792 = vst [vmem:[#allocation3 + $0x2f8] sm:$0xff] %v776
      %793 = vst [vmem:[#allocation3 + $0x340] sm:$0xff] %v777
      %794 = vst [vmem:[#allocation3 + $0x388] sm:$0xff] %v778
      %795 = vst [vmem:[#allocation3 + $0x3d0] sm:$0xff] %v779
      %796 = vst [vmem:[#allocation3 + $0x418] sm:$0xff] %v780
      %797 = vst [vmem:[#allocation3 + $0x460] sm:$0xff] %v781
      %s798 = scalar_lea.vmem [#allocation2], 48
      %v799 = vld [vmem:[%s798] sm:$0xff]
      %v800 = vld [vmem:[%s798 + $0x8] sm:$0xff]
      %v801 = vld [vmem:[%s798 + $0x18] sm:$0xff]
      %v802 = vld [vmem:[%s798 + $0x20] sm:$0xff]
      %v803 = vld [vmem:[%s798 + $0x30] sm:$0xff]
      %v804 = vld [vmem:[%s798 + $0x38] sm:$0xff]
      %v805 = vld [vmem:[%s798 + $0x48] sm:$0xff]
      %v806 = vld [vmem:[%s798 + $0x50] sm:$0xff]
      %v807 = vld [vmem:[%s798 + $0x60] sm:$0xff]
      %v808 = vld [vmem:[%s798 + $0x68] sm:$0xff]
      %v809 = vld [vmem:[%s798 + $0x78] sm:$0xff]
      %v810 = vld [vmem:[%s798 + $0x80] sm:$0xff]
      %v811 = vld [vmem:[%s798 + $0x90] sm:$0xff]
      %v812 = vld [vmem:[%s798 + $0x98] sm:$0xff]
      %v813 = vld [vmem:[%s798 + $0xa8] sm:$0xff]
      %v814 = vld [vmem:[%s798 + $0xb0] sm:$0xff]
      %v815 = vld [vmem:[%s798 + $0xc0] sm:$0xff]
      %v816 = vld [vmem:[%s798 + $0xc8] sm:$0xff]
      %v817 = vld [vmem:[%s798 + $0xd8] sm:$0xff]
      %v818 = vld [vmem:[%s798 + $0xe0] sm:$0xff]
      %v819 = vld [vmem:[%s798 + $0xf0] sm:$0xff]
      %v820 = vld [vmem:[%s798 + $0xf8] sm:$0xff]
      %v821 = vld [vmem:[%s798 + $0x108] sm:$0xff]
      %v822 = vld [vmem:[%s798 + $0x110] sm:$0xff]
      %v823 = vld [vmem:[%s798 + $0x120] sm:$0xff]
      %v824 = vld [vmem:[%s798 + $0x128] sm:$0xff]
      %v825 = vld [vmem:[%s798 + $0x138] sm:$0xff]
      %v826 = vld [vmem:[%s798 + $0x140] sm:$0xff]
      %v827 = vld [vmem:[%s798 + $0x150] sm:$0xff]
      %v828 = vld [vmem:[%s798 + $0x158] sm:$0xff]
      %v829 = vld [vmem:[%s798 + $0x168] sm:$0xff]
      %v830 = vld [vmem:[%s798 + $0x170] sm:$0xff]
      %v831 = vpack.c.bf16 %v800, %v799
      %v832 = vpack.c.bf16 %v802, %v801
      %v833 = vpack.c.bf16 %v804, %v803
      %v834 = vpack.c.bf16 %v806, %v805
      %v835 = vpack.c.bf16 %v808, %v807
      %v836 = vpack.c.bf16 %v810, %v809
      %v837 = vpack.c.bf16 %v812, %v811
      %v838 = vpack.c.bf16 %v814, %v813
      %v839 = vpack.c.bf16 %v816, %v815
      %v840 = vpack.c.bf16 %v818, %v817
      %v841 = vpack.c.bf16 %v820, %v819
      %v842 = vpack.c.bf16 %v822, %v821
      %v843 = vpack.c.bf16 %v824, %v823
      %v844 = vpack.c.bf16 %v826, %v825
      %v845 = vpack.c.bf16 %v828, %v827
      %v846 = vpack.c.bf16 %v830, %v829
      %847 = vst [vmem:[#allocation3 + $0x30] sm:$0xff] %v831
      %848 = vst [vmem:[#allocation3 + $0x78] sm:$0xff] %v832
      %849 = vst [vmem:[#allocation3 + $0xc0] sm:$0xff] %v833
      %850 = vst [vmem:[#allocation3 + $0x108] sm:$0xff] %v834
      %851 = vst [vmem:[#allocation3 + $0x150] sm:$0xff] %v835
      %852 = vst [vmem:[#allocation3 + $0x198] sm:$0xff] %v836
      %853 = vst [vmem:[#allocation3 + $0x1e0] sm:$0xff] %v837
      %854 = vst [vmem:[#allocation3 + $0x228] sm:$0xff] %v838
      %855 = vst [vmem:[#allocation3 + $0x270] sm:$0xff] %v839
      %856 = vst [vmem:[#allocation3 + $0x2b8] sm:$0xff] %v840
      %857 = vst [vmem:[#allocation3 + $0x300] sm:$0xff] %v841
      %858 = vst [vmem:[#allocation3 + $0x348] sm:$0xff] %v842
      %859 = vst [vmem:[#allocation3 + $0x390] sm:$0xff] %v843
      %860 = vst [vmem:[#allocation3 + $0x3d8] sm:$0xff] %v844
      %861 = vst [vmem:[#allocation3 + $0x420] sm:$0xff] %v845
      %862 = vst [vmem:[#allocation3 + $0x468] sm:$0xff] %v846
      %v863 = vld [vmem:[%s798 + $0x1] sm:$0xff]
      %v864 = vld [vmem:[%s798 + $0x9] sm:$0xff]
      %v865 = vld [vmem:[%s798 + $0x19] sm:$0xff]
      %v866 = vld [vmem:[%s798 + $0x21] sm:$0xff]
      %v867 = vld [vmem:[%s798 + $0x31] sm:$0xff]
      %v868 = vld [vmem:[%s798 + $0x39] sm:$0xff]
      %v869 = vld [vmem:[%s798 + $0x49] sm:$0xff]
      %v870 = vld [vmem:[%s798 + $0x51] sm:$0xff]
      %v871 = vld [vmem:[%s798 + $0x61] sm:$0xff]
      %v872 = vld [vmem:[%s798 + $0x69] sm:$0xff]
      %v873 = vld [vmem:[%s798 + $0x79] sm:$0xff]
      %v874 = vld [vmem:[%s798 + $0x81] sm:$0xff]
      %v875 = vld [vmem:[%s798 + $0x91] sm:$0xff]
      %v876 = vld [vmem:[%s798 + $0x99] sm:$0xff]
      %v877 = vld [vmem:[%s798 + $0xa9] sm:$0xff]
      %v878 = vld [vmem:[%s798 + $0xb1] sm:$0xff]
      %v879 = vld [vmem:[%s798 + $0xc1] sm:$0xff]
      %v880 = vld [vmem:[%s798 + $0xc9] sm:$0xff]
      %v881 = vld [vmem:[%s798 + $0xd9] sm:$0xff]
      %v882 = vld [vmem:[%s798 + $0xe1] sm:$0xff]
      %v883 = vld [vmem:[%s798 + $0xf1] sm:$0xff]
      %v884 = vld [vmem:[%s798 + $0xf9] sm:$0xff]
      %v885 = vld [vmem:[%s798 + $0x109] sm:$0xff]
      %v886 = vld [vmem:[%s798 + $0x111] sm:$0xff]
      %v887 = vld [vmem:[%s798 + $0x121] sm:$0xff]
      %v888 = vld [vmem:[%s798 + $0x129] sm:$0xff]
      %v889 = vld [vmem:[%s798 + $0x139] sm:$0xff]
      %v890 = vld [vmem:[%s798 + $0x141] sm:$0xff]
      %v891 = vld [vmem:[%s798 + $0x151] sm:$0xff]
      %v892 = vld [vmem:[%s798 + $0x159] sm:$0xff]
      %v893 = vld [vmem:[%s798 + $0x169] sm:$0xff]
      %v894 = vld [vmem:[%s798 + $0x171] sm:$0xff]
      %v895 = vpack.c.bf16 %v864, %v863
      %v896 = vpack.c.bf16 %v866, %v865
      %v897 = vpack.c.bf16 %v868, %v867
      %v898 = vpack.c.bf16 %v870, %v869
      %v899 = vpack.c.bf16 %v872, %v871
      %v900 = vpack.c.bf16 %v874, %v873
      %v901 = vpack.c.bf16 %v876, %v875
      %v902 = vpack.c.bf16 %v878, %v877
      %v903 = vpack.c.bf16 %v880, %v879
      %v904 = vpack.c.bf16 %v882, %v881
      %v905 = vpack.c.bf16 %v884, %v883
      %v906 = vpack.c.bf16 %v886, %v885
      %v907 = vpack.c.bf16 %v888, %v887
      %v908 = vpack.c.bf16 %v890, %v889
      %v909 = vpack.c.bf16 %v892, %v891
      %v910 = vpack.c.bf16 %v894, %v893
      %911 = vst [vmem:[#allocation3 + $0x38] sm:$0xff] %v895
      %912 = vst [vmem:[#allocation3 + $0x80] sm:$0xff] %v896
      %913 = vst [vmem:[#allocation3 + $0xc8] sm:$0xff] %v897
      %914 = vst [vmem:[#allocation3 + $0x110] sm:$0xff] %v898
      %915 = vst [vmem:[#allocation3 + $0x158] sm:$0xff] %v899
      %916 = vst [vmem:[#allocation3 + $0x1a0] sm:$0xff] %v900
      %917 = vst [vmem:[#allocation3 + $0x1e8] sm:$0xff] %v901
      %918 = vst [vmem:[#allocation3 + $0x230] sm:$0xff] %v902
      %919 = vst [vmem:[#allocation3 + $0x278] sm:$0xff] %v903
      %920 = vst [vmem:[#allocation3 + $0x2c0] sm:$0xff] %v904
      %921 = vst [vmem:[#allocation3 + $0x308] sm:$0xff] %v905
      %922 = vst [vmem:[#allocation3 + $0x350] sm:$0xff] %v906
      %923 = vst [vmem:[#allocation3 + $0x398] sm:$0xff] %v907
      %924 = vst [vmem:[#allocation3 + $0x3e0] sm:$0xff] %v908
      %925 = vst [vmem:[#allocation3 + $0x428] sm:$0xff] %v909
      %926 = vst [vmem:[#allocation3 + $0x470] sm:$0xff] %v910
      %v927 = vld [vmem:[%s798 + $0x2] sm:$0xff]
      %v928 = vld [vmem:[%s798 + $0xa] sm:$0xff]
      %v929 = vld [vmem:[%s798 + $0x1a] sm:$0xff]
      %v930 = vld [vmem:[%s798 + $0x22] sm:$0xff]
      %v931 = vld [vmem:[%s798 + $0x32] sm:$0xff]
      %v932 = vld [vmem:[%s798 + $0x3a] sm:$0xff]
      %v933 = vld [vmem:[%s798 + $0x4a] sm:$0xff]
      %v934 = vld [vmem:[%s798 + $0x52] sm:$0xff]
      %v935 = vld [vmem:[%s798 + $0x62] sm:$0xff]
      %v936 = vld [vmem:[%s798 + $0x6a] sm:$0xff]
      %v937 = vld [vmem:[%s798 + $0x7a] sm:$0xff]
      %v938 = vld [vmem:[%s798 + $0x82] sm:$0xff]
      %v939 = vld [vmem:[%s798 + $0x92] sm:$0xff]
      %v940 = vld [vmem:[%s798 + $0x9a] sm:$0xff]
      %v941 = vld [vmem:[%s798 + $0xaa] sm:$0xff]
      %v942 = vld [vmem:[%s798 + $0xb2] sm:$0xff]
      %v943 = vld [vmem:[%s798 + $0xc2] sm:$0xff]
      %v944 = vld [vmem:[%s798 + $0xca] sm:$0xff]
      %v945 = vld [vmem:[%s798 + $0xda] sm:$0xff]
      %v946 = vld [vmem:[%s798 + $0xe2] sm:$0xff]
      %v947 = vld [vmem:[%s798 + $0xf2] sm:$0xff]
      %v948 = vld [vmem:[%s798 + $0xfa] sm:$0xff]
      %v949 = vld [vmem:[%s798 + $0x10a] sm:$0xff]
      %v950 = vld [vmem:[%s798 + $0x112] sm:$0xff]
      %v951 = vld [vmem:[%s798 + $0x122] sm:$0xff]
      %v952 = vld [vmem:[%s798 + $0x12a] sm:$0xff]
      %v953 = vld [vmem:[%s798 + $0x13a] sm:$0xff]
      %v954 = vld [vmem:[%s798 + $0x142] sm:$0xff]
      %v955 = vld [vmem:[%s798 + $0x152] sm:$0xff]
      %v956 = vld [vmem:[%s798 + $0x15a] sm:$0xff]
      %v957 = vld [vmem:[%s798 + $0x16a] sm:$0xff]
      %v958 = vld [vmem:[%s798 + $0x172] sm:$0xff]
      %v959 = vpack.c.bf16 %v928, %v927
      %v960 = vpack.c.bf16 %v930, %v929
      %v961 = vpack.c.bf16 %v932, %v931
      %v962 = vpack.c.bf16 %v934, %v933
      %v963 = vpack.c.bf16 %v936, %v935
      %v964 = vpack.c.bf16 %v938, %v937
      %v965 = vpack.c.bf16 %v940, %v939
      %v966 = vpack.c.bf16 %v942, %v941
      %v967 = vpack.c.bf16 %v944, %v943
      %v968 = vpack.c.bf16 %v946, %v945
      %v969 = vpack.c.bf16 %v948, %v947
      %v970 = vpack.c.bf16 %v950, %v949
      %v971 = vpack.c.bf16 %v952, %v951
      %v972 = vpack.c.bf16 %v954, %v953
      %v973 = vpack.c.bf16 %v956, %v955
      %v974 = vpack.c.bf16 %v958, %v957
      %975 = vst [vmem:[#allocation3 + $0x40] sm:$0xff] %v959
      %976 = vst [vmem:[#allocation3 + $0x88] sm:$0xff] %v960
      %977 = vst [vmem:[#allocation3 + $0xd0] sm:$0xff] %v961
      %978 = vst [vmem:[#allocation3 + $0x118] sm:$0xff] %v962
      %979 = vst [vmem:[#allocation3 + $0x160] sm:$0xff] %v963
      %980 = vst [vmem:[#allocation3 + $0x1a8] sm:$0xff] %v964
      %981 = vst [vmem:[#allocation3 + $0x1f0] sm:$0xff] %v965
      %982 = vst [vmem:[#allocation3 + $0x238] sm:$0xff] %v966
      %983 = vst [vmem:[#allocation3 + $0x280] sm:$0xff] %v967
      %984 = vst [vmem:[#allocation3 + $0x2c8] sm:$0xff] %v968
      %985 = vst [vmem:[#allocation3 + $0x310] sm:$0xff] %v969
      %986 = vst [vmem:[#allocation3 + $0x358] sm:$0xff] %v970
      %987 = vst [vmem:[#allocation3 + $0x3a0] sm:$0xff] %v971
      %988 = vst [vmem:[#allocation3 + $0x3e8] sm:$0xff] %v972
      %989 = vst [vmem:[#allocation3 + $0x430] sm:$0xff] %v973
      %990 = vst [vmem:[#allocation3 + $0x478] sm:$0xff] %v974
      %v991 = vld [vmem:[#allocation3] sm:$0xff]
      %v992 = vld [vmem:[#allocation3 + $0x8] sm:$0xff]
      %v993 = vld [vmem:[#allocation3 + $0x10] sm:$0xff]
      %v994 = vld [vmem:[#allocation3 + $0x18] sm:$0xff]
      %v995 = vld [vmem:[#allocation3 + $0x20] sm:$0xff]
      %v996 = vld [vmem:[#allocation3 + $0x28] sm:$0xff]
      %v997 = vld [vmem:[#allocation3 + $0x30] sm:$0xff]
      %v998 = vld [vmem:[#allocation3 + $0x38] sm:$0xff]
      %v999 = vld [vmem:[#allocation3 + $0x40] sm:$0xff]
      %v1000 = vld [vmem:[#allocation3 + $0x48] sm:$0xff]
      %v1001 = vld [vmem:[#allocation3 + $0x50] sm:$0xff]
      %v1002 = vld [vmem:[#allocation3 + $0x58] sm:$0xff]
      %v1003 = vld [vmem:[#allocation3 + $0x60] sm:$0xff]
      %v1004 = vld [vmem:[#allocation3 + $0x68] sm:$0xff]
      %v1005 = vld [vmem:[#allocation3 + $0x70] sm:$0xff]
      %v1006 = vld [vmem:[#allocation3 + $0x78] sm:$0xff]
      %v1007 = vld [vmem:[#allocation3 + $0x80] sm:$0xff]
      %v1008 = vld [vmem:[#allocation3 + $0x88] sm:$0xff]
      %v1009 = vld [vmem:[#allocation3 + $0x90] sm:$0xff]
      %v1010 = vld [vmem:[#allocation3 + $0x98] sm:$0xff]
      %v1011 = vld [vmem:[#allocation3 + $0xa0] sm:$0xff]
      %v1012 = vld [vmem:[#allocation3 + $0xa8] sm:$0xff]
      %v1013 = vld [vmem:[#allocation3 + $0xb0] sm:$0xff]
      %v1014 = vld [vmem:[#allocation3 + $0xb8] sm:$0xff]
      %v1015 = vld [vmem:[#allocation3 + $0xc0] sm:$0xff]
      %v1016 = vld [vmem:[#allocation3 + $0xc8] sm:$0xff]
      %v1017 = vld [vmem:[#allocation3 + $0xd0] sm:$0xff]
      %v1018 = vld [vmem:[#allocation3 + $0xd8] sm:$0xff]
      %v1019 = vld [vmem:[#allocation3 + $0xe0] sm:$0xff]
      %v1020 = vld [vmem:[#allocation3 + $0xe8] sm:$0xff]
      %v1021 = vld [vmem:[#allocation3 + $0xf0] sm:$0xff]
      %v1022 = vld [vmem:[#allocation3 + $0xf8] sm:$0xff]
      %v1023 = vld [vmem:[#allocation3 + $0x100] sm:$0xff]
      %v1024 = vld [vmem:[#allocation3 + $0x108] sm:$0xff]
      %v1025 = vld [vmem:[#allocation3 + $0x110] sm:$0xff]
      %v1026 = vld [vmem:[#allocation3 + $0x118] sm:$0xff]
      %v1027 = vld [vmem:[#allocation3 + $0x120] sm:$0xff]
      %v1028 = vld [vmem:[#allocation3 + $0x128] sm:$0xff]
      %v1029 = vld [vmem:[#allocation3 + $0x130] sm:$0xff]
      %v1030 = vld [vmem:[#allocation3 + $0x138] sm:$0xff]
      %v1031 = vld [vmem:[#allocation3 + $0x140] sm:$0xff]
      %v1032 = vld [vmem:[#allocation3 + $0x148] sm:$0xff]
      %v1033 = vld [vmem:[#allocation3 + $0x150] sm:$0xff]
      %v1034 = vld [vmem:[#allocation3 + $0x158] sm:$0xff]
      %v1035 = vld [vmem:[#allocation3 + $0x160] sm:$0xff]
      %v1036 = vld [vmem:[#allocation3 + $0x168] sm:$0xff]
      %v1037 = vld [vmem:[#allocation3 + $0x170] sm:$0xff]
      %v1038 = vld [vmem:[#allocation3 + $0x178] sm:$0xff]
      %v1039 = vld [vmem:[#allocation3 + $0x180] sm:$0xff]
      %v1040 = vld [vmem:[#allocation3 + $0x188] sm:$0xff]
      %v1041 = vld [vmem:[#allocation3 + $0x190] sm:$0xff]
      %v1042 = vld [vmem:[#allocation3 + $0x198] sm:$0xff]
      %v1043 = vld [vmem:[#allocation3 + $0x1a0] sm:$0xff]
      %v1044 = vld [vmem:[#allocation3 + $0x1a8] sm:$0xff]
      %v1045 = vld [vmem:[#allocation3 + $0x1b0] sm:$0xff]
      %v1046 = vld [vmem:[#allocation3 + $0x1b8] sm:$0xff]
      %v1047 = vld [vmem:[#allocation3 + $0x1c0] sm:$0xff]
      %v1048 = vld [vmem:[#allocation3 + $0x1c8] sm:$0xff]
      %v1049 = vld [vmem:[#allocation3 + $0x1d0] sm:$0xff]
      %v1050 = vld [vmem:[#allocation3 + $0x1d8] sm:$0xff]
      %v1051 = vld [vmem:[#allocation3 + $0x1e0] sm:$0xff]
      %v1052 = vld [vmem:[#allocation3 + $0x1e8] sm:$0xff]
      %v1053 = vld [vmem:[#allocation3 + $0x1f0] sm:$0xff]
      %v1054 = vld [vmem:[#allocation3 + $0x1f8] sm:$0xff]
      %v1055 = vld [vmem:[#allocation3 + $0x200] sm:$0xff]
      %v1056 = vld [vmem:[#allocation3 + $0x208] sm:$0xff]
      %v1057 = vld [vmem:[#allocation3 + $0x210] sm:$0xff]
      %v1058 = vld [vmem:[#allocation3 + $0x218] sm:$0xff]
      %v1059 = vld [vmem:[#allocation3 + $0x220] sm:$0xff]
      %v1060 = vld [vmem:[#allocation3 + $0x228] sm:$0xff]
      %v1061 = vld [vmem:[#allocation3 + $0x230] sm:$0xff]
      %v1062 = vld [vmem:[#allocation3 + $0x238] sm:$0xff]
      %v1063 = vld [vmem:[#allocation3 + $0x240] sm:$0xff]
      %v1064 = vld [vmem:[#allocation3 + $0x248] sm:$0xff]
      %v1065 = vld [vmem:[#allocation3 + $0x250] sm:$0xff]
      %v1066 = vld [vmem:[#allocation3 + $0x258] sm:$0xff]
      %v1067 = vld [vmem:[#allocation3 + $0x260] sm:$0xff]
      %v1068 = vld [vmem:[#allocation3 + $0x268] sm:$0xff]
      %v1069 = vld [vmem:[#allocation3 + $0x270] sm:$0xff]
      %v1070 = vld [vmem:[#allocation3 + $0x278] sm:$0xff]
      %v1071 = vld [vmem:[#allocation3 + $0x280] sm:$0xff]
      %v1072 = vld [vmem:[#allocation3 + $0x288] sm:$0xff]
      %v1073 = vld [vmem:[#allocation3 + $0x290] sm:$0xff]
      %v1074 = vld [vmem:[#allocation3 + $0x298] sm:$0xff]
      %v1075 = vld [vmem:[#allocation3 + $0x2a0] sm:$0xff]
      %v1076 = vld [vmem:[#allocation3 + $0x2a8] sm:$0xff]
      %v1077 = vld [vmem:[#allocation3 + $0x2b0] sm:$0xff]
      %v1078 = vld [vmem:[#allocation3 + $0x2b8] sm:$0xff]
      %v1079 = vld [vmem:[#allocation3 + $0x2c0] sm:$0xff]
      %v1080 = vld [vmem:[#allocation3 + $0x2c8] sm:$0xff]
      %v1081 = vld [vmem:[#allocation3 + $0x2d0] sm:$0xff]
      %v1082 = vld [vmem:[#allocation3 + $0x2d8] sm:$0xff]
      %v1083 = vld [vmem:[#allocation3 + $0x2e0] sm:$0xff]
      %v1084 = vld [vmem:[#allocation3 + $0x2e8] sm:$0xff]
      %v1085 = vld [vmem:[#allocation3 + $0x2f0] sm:$0xff]
      %v1086 = vld [vmem:[#allocation3 + $0x2f8] sm:$0xff]
      %v1087 = vld [vmem:[#allocation3 + $0x300] sm:$0xff]
      %v1088 = vld [vmem:[#allocation3 + $0x308] sm:$0xff]
      %v1089 = vld [vmem:[#allocation3 + $0x310] sm:$0xff]
      %v1090 = vld [vmem:[#allocation3 + $0x318] sm:$0xff]
      %v1091 = vld [vmem:[#allocation3 + $0x320] sm:$0xff]
      %v1092 = vld [vmem:[#allocation3 + $0x328] sm:$0xff]
      %v1093 = vld [vmem:[#allocation3 + $0x330] sm:$0xff]
      %v1094 = vld [vmem:[#allocation3 + $0x338] sm:$0xff]
      %v1095 = vld [vmem:[#allocation3 + $0x340] sm:$0xff]
      %v1096 = vld [vmem:[#allocation3 + $0x348] sm:$0xff]
      %v1097 = vld [vmem:[#allocation3 + $0x350] sm:$0xff]
      %v1098 = vld [vmem:[#allocation3 + $0x358] sm:$0xff]
      %v1099 = vld [vmem:[#allocation3 + $0x360] sm:$0xff]
      %v1100 = vld [vmem:[#allocation3 + $0x368] sm:$0xff]
      %v1101 = vld [vmem:[#allocation3 + $0x370] sm:$0xff]
      %v1102 = vld [vmem:[#allocation3 + $0x378] sm:$0xff]
      %v1103 = vld [vmem:[#allocation3 + $0x380] sm:$0xff]
      %v1104 = vld [vmem:[#allocation3 + $0x388] sm:$0xff]
      %v1105 = vld [vmem:[#allocation3 + $0x390] sm:$0xff]
      %v1106 = vld [vmem:[#allocation3 + $0x398] sm:$0xff]
      %v1107 = vld [vmem:[#allocation3 + $0x3a0] sm:$0xff]
      %v1108 = vld [vmem:[#allocation3 + $0x3a8] sm:$0xff]
      %v1109 = vld [vmem:[#allocation3 + $0x3b0] sm:$0xff]
      %v1110 = vld [vmem:[#allocation3 + $0x3b8] sm:$0xff]
      %v1111 = vld [vmem:[#allocation3 + $0x3c0] sm:$0xff]
      %v1112 = vld [vmem:[#allocation3 + $0x3c8] sm:$0xff]
      %v1113 = vld [vmem:[#allocation3 + $0x3d0] sm:$0xff]
      %v1114 = vld [vmem:[#allocation3 + $0x3d8] sm:$0xff]
      %v1115 = vld [vmem:[#allocation3 + $0x3e0] sm:$0xff]
      %v1116 = vld [vmem:[#allocation3 + $0x3e8] sm:$0xff]
      %v1117 = vld [vmem:[#allocation3 + $0x3f0] sm:$0xff]
      %v1118 = vld [vmem:[#allocation3 + $0x3f8] sm:$0xff]
      %v1119 = vld [vmem:[#allocation3 + $0x400] sm:$0xff]
      %v1120 = vld [vmem:[#allocation3 + $0x408] sm:$0xff]
      %v1121 = vld [vmem:[#allocation3 + $0x410] sm:$0xff]
      %v1122 = vld [vmem:[#allocation3 + $0x418] sm:$0xff]
      %v1123 = vld [vmem:[#allocation3 + $0x420] sm:$0xff]
      %v1124 = vld [vmem:[#allocation3 + $0x428] sm:$0xff]
      %v1125 = vld [vmem:[#allocation3 + $0x430] sm:$0xff]
      %v1126 = vld [vmem:[#allocation3 + $0x438] sm:$0xff]
      %v1127 = vld [vmem:[#allocation3 + $0x440] sm:$0xff]
      %v1128 = vld [vmem:[#allocation3 + $0x448] sm:$0xff]
      %v1129 = vld [vmem:[#allocation3 + $0x450] sm:$0xff]
      %v1130 = vld [vmem:[#allocation3 + $0x458] sm:$0xff]
      %v1131 = vld [vmem:[#allocation3 + $0x460] sm:$0xff]
      %v1132 = vld [vmem:[#allocation3 + $0x468] sm:$0xff]
      %v1133 = vld [vmem:[#allocation3 + $0x470] sm:$0xff]
      %v1134 = vld [vmem:[#allocation3 + $0x478] sm:$0xff]
      %v1135 = vld [vmem:[%s3] sm:$0xf]
      %v1136 = vld [vmem:[%s3 + $0x4] sm:$0xf]
      %v1137 = vld [vmem:[%s3 + $0x8] sm:$0xf]
      %v1138 = vld [vmem:[%s3 + $0xc] sm:$0xf]
      %v1139 = vld [vmem:[%s3 + $0x10] sm:$0xf]
      %v1140 = vld [vmem:[%s3 + $0x14] sm:$0xf]
      %v1141 = vld [vmem:[%s3 + $0x18] sm:$0xf]
      %v1142 = vld [vmem:[%s3 + $0x1c] sm:$0xf]
      %v1143 = vld [vmem:[%s3 + $0x20] sm:$0xf]
      %v1144 = vld [vmem:[%s3 + $0x24] sm:$0xf]
      %v1145 = vld [vmem:[%s3 + $0x28] sm:$0xf]
      %v1146 = vld [vmem:[%s3 + $0x2c] sm:$0xf]
      %v1147 = vld [vmem:[%s3 + $0x30] sm:$0xf]
      %v1148 = vld [vmem:[%s3 + $0x34] sm:$0xf]
      %v1149 = vld [vmem:[%s3 + $0x38] sm:$0xf]
      %v1150 = vld [vmem:[%s3 + $0x3c] sm:$0xf]
      %v1151 = vld [vmem:[%s3 + $0x40] sm:$0xf]
      %v1152 = vld [vmem:[%s3 + $0x44] sm:$0xf]
      %v1153 = vld [vmem:[%s3 + $0x48] sm:$0xf]
      %v1154 = vld [vmem:[%s3 + $0x4c] sm:$0xf]
      %v1155 = vld [vmem:[%s3 + $0x50] sm:$0xf]
      %v1156 = vld [vmem:[%s3 + $0x54] sm:$0xf]
      %v1157 = vld [vmem:[%s3 + $0x58] sm:$0xf]
      %v1158 = vld [vmem:[%s3 + $0x5c] sm:$0xf]
      %v1159 = vld [vmem:[%s3 + $0x60] sm:$0xf]
      %v1160 = vld [vmem:[%s3 + $0x64] sm:$0xf]
      %v1161 = vld [vmem:[%s3 + $0x68] sm:$0xf]
      %v1162 = vld [vmem:[%s3 + $0x6c] sm:$0xf]
      %v1163 = vld [vmem:[%s3 + $0x70] sm:$0xf]
      %v1164 = vld [vmem:[%s3 + $0x74] sm:$0xf]
      %v1165 = vld [vmem:[%s3 + $0x78] sm:$0xf]
      %v1166 = vld [vmem:[%s3 + $0x7c] sm:$0xf]
      %v1167 = vld [vmem:[%s3 + $0x80] sm:$0xf]
      %v1168 = vld [vmem:[%s3 + $0x84] sm:$0xf]
      %v1169 = vld [vmem:[%s3 + $0x88] sm:$0xf]
      %v1170 = vld [vmem:[%s3 + $0x8c] sm:$0xf]
      %v1171 = vld [vmem:[%s3 + $0x90] sm:$0xf]
      %v1172 = vld [vmem:[%s3 + $0x94] sm:$0xf]
      %v1173 = vld [vmem:[%s3 + $0x98] sm:$0xf]
      %v1174 = vld [vmem:[%s3 + $0x9c] sm:$0xf]
      %v1175 = vld [vmem:[%s3 + $0xa0] sm:$0xf]
      %v1176 = vld [vmem:[%s3 + $0xa4] sm:$0xf]
      %v1177 = vld [vmem:[%s3 + $0xa8] sm:$0xf]
      %v1178 = vld [vmem:[%s3 + $0xac] sm:$0xf]
      %v1179 = vld [vmem:[%s3 + $0xb0] sm:$0xf]
      %v1180 = vld [vmem:[%s3 + $0xb4] sm:$0xf]
      %v1181 = vld [vmem:[%s3 + $0xb8] sm:$0xf]
      %v1182 = vld [vmem:[%s3 + $0xbc] sm:$0xf]
      %v1183 = vld [vmem:[%s3 + $0xc0] sm:$0xf]
      %v1184 = vld [vmem:[%s3 + $0xc4] sm:$0xf]
      %v1185 = vld [vmem:[%s3 + $0xc8] sm:$0xf]
      %v1186 = vld [vmem:[%s3 + $0xcc] sm:$0xf]
      %v1187 = vld [vmem:[%s3 + $0xd0] sm:$0xf]
      %v1188 = vld [vmem:[%s3 + $0xd4] sm:$0xf]
      %v1189 = vld [vmem:[%s3 + $0xd8] sm:$0xf]
      %v1190 = vld [vmem:[%s3 + $0xdc] sm:$0xf]
      %v1191 = vld [vmem:[%s3 + $0xe0] sm:$0xf]
      %v1192 = vld [vmem:[%s3 + $0xe4] sm:$0xf]
      %v1193 = vld [vmem:[%s3 + $0xe8] sm:$0xf]
      %v1194 = vld [vmem:[%s3 + $0xec] sm:$0xf]
      %v1195 = vld [vmem:[%s3 + $0xf0] sm:$0xf]
      %v1196 = vld [vmem:[%s3 + $0xf4] sm:$0xf]
      %v1197 = vld [vmem:[%s3 + $0xf8] sm:$0xf]
      %v1198 = vld [vmem:[%s3 + $0xfc] sm:$0xf]
      %v1199 = vld [vmem:[%s3 + $0x100] sm:$0xf]
      %v1200 = vld [vmem:[%s3 + $0x104] sm:$0xf]
      %v1201 = vld [vmem:[%s3 + $0x108] sm:$0xf]
      %v1202 = vld [vmem:[%s3 + $0x10c] sm:$0xf]
      %v1203 = vld [vmem:[%s3 + $0x110] sm:$0xf]
      %v1204 = vld [vmem:[%s3 + $0x114] sm:$0xf]
      %v1205 = vld [vmem:[%s3 + $0x118] sm:$0xf]
      %v1206 = vld [vmem:[%s3 + $0x11c] sm:$0xf]
      %v1207 = vld [vmem:[%s3 + $0x120] sm:$0xf]
      %v1208 = vld [vmem:[%s3 + $0x124] sm:$0xf]
      %v1209 = vld [vmem:[%s3 + $0x128] sm:$0xf]
      %v1210 = vld [vmem:[%s3 + $0x12c] sm:$0xf]
      %v1211 = vld [vmem:[%s3 + $0x130] sm:$0xf]
      %v1212 = vld [vmem:[%s3 + $0x134] sm:$0xf]
      %v1213 = vld [vmem:[%s3 + $0x138] sm:$0xf]
      %v1214 = vld [vmem:[%s3 + $0x13c] sm:$0xf]
      %v1215 = vld [vmem:[%s3 + $0x140] sm:$0xf]
      %v1216 = vld [vmem:[%s3 + $0x144] sm:$0xf]
      %v1217 = vld [vmem:[%s3 + $0x148] sm:$0xf]
      %v1218 = vld [vmem:[%s3 + $0x14c] sm:$0xf]
      %v1219 = vld [vmem:[%s3 + $0x150] sm:$0xf]
      %v1220 = vld [vmem:[%s3 + $0x154] sm:$0xf]
      %v1221 = vld [vmem:[%s3 + $0x158] sm:$0xf]
      %v1222 = vld [vmem:[%s3 + $0x15c] sm:$0xf]
      %v1223 = vld [vmem:[%s3 + $0x160] sm:$0xf]
      %v1224 = vld [vmem:[%s3 + $0x164] sm:$0xf]
      %v1225 = vld [vmem:[%s3 + $0x168] sm:$0xf]
      %v1226 = vld [vmem:[%s3 + $0x16c] sm:$0xf]
      %v1227 = vld [vmem:[%s3 + $0x170] sm:$0xf]
      %v1228 = vld [vmem:[%s3 + $0x174] sm:$0xf]
      %v1229 = vld [vmem:[%s3 + $0x178] sm:$0xf]
      %v1230 = vld [vmem:[%s3 + $0x17c] sm:$0xf]
      %v1231 = vld [vmem:[%s3 + $0x180] sm:$0xf]
      %v1232 = vld [vmem:[%s3 + $0x184] sm:$0xf]
      %v1233 = vld [vmem:[%s3 + $0x188] sm:$0xf]
      %v1234 = vld [vmem:[%s3 + $0x18c] sm:$0xf]
      %v1235 = vld [vmem:[%s3 + $0x190] sm:$0xf]
      %v1236 = vld [vmem:[%s3 + $0x194] sm:$0xf]
      %v1237 = vld [vmem:[%s3 + $0x198] sm:$0xf]
      %v1238 = vld [vmem:[%s3 + $0x19c] sm:$0xf]
      %v1239 = vld [vmem:[%s3 + $0x1a0] sm:$0xf]
      %v1240 = vld [vmem:[%s3 + $0x1a4] sm:$0xf]
      %v1241 = vld [vmem:[%s3 + $0x1a8] sm:$0xf]
      %v1242 = vld [vmem:[%s3 + $0x1ac] sm:$0xf]
      %v1243 = vld [vmem:[%s3 + $0x1b0] sm:$0xf]
      %v1244 = vld [vmem:[%s3 + $0x1b4] sm:$0xf]
      %v1245 = vld [vmem:[%s3 + $0x1b8] sm:$0xf]
      %v1246 = vld [vmem:[%s3 + $0x1bc] sm:$0xf]
      %v1247 = vld [vmem:[%s3 + $0x1c0] sm:$0xf]
      %v1248 = vld [vmem:[%s3 + $0x1c4] sm:$0xf]
      %v1249 = vld [vmem:[%s3 + $0x1c8] sm:$0xf]
      %v1250 = vld [vmem:[%s3 + $0x1cc] sm:$0xf]
      %v1251 = vld [vmem:[%s3 + $0x1d0] sm:$0xf]
      %v1252 = vld [vmem:[%s3 + $0x1d4] sm:$0xf]
      %v1253 = vld [vmem:[%s3 + $0x1d8] sm:$0xf]
      %v1254 = vld [vmem:[%s3 + $0x1dc] sm:$0xf]
      %v1255 = vld [vmem:[%s3 + $0x1e0] sm:$0xf]
      %v1256 = vld [vmem:[%s3 + $0x1e4] sm:$0xf]
      %v1257 = vld [vmem:[%s3 + $0x1e8] sm:$0xf]
      %v1258 = vld [vmem:[%s3 + $0x1ec] sm:$0xf]
      %v1259 = vld [vmem:[%s3 + $0x1f0] sm:$0xf]
      %v1260 = vld [vmem:[%s3 + $0x1f4] sm:$0xf]
      %v1261 = vld [vmem:[%s3 + $0x1f8] sm:$0xf]
      %v1262 = vld [vmem:[%s3 + $0x1fc] sm:$0xf]
      %v1263 = vld [vmem:[%s3 + $0x200] sm:$0xf]
      %v1264 = vld [vmem:[%s3 + $0x204] sm:$0xf]
      %v1265 = vld [vmem:[%s3 + $0x208] sm:$0xf]
      %v1266 = vld [vmem:[%s3 + $0x20c] sm:$0xf]
      %v1267 = vld [vmem:[%s3 + $0x210] sm:$0xf]
      %v1268 = vld [vmem:[%s3 + $0x214] sm:$0xf]
      %v1269 = vld [vmem:[%s3 + $0x218] sm:$0xf]
      %v1270 = vld [vmem:[%s3 + $0x21c] sm:$0xf]
      %v1271 = vld [vmem:[%s3 + $0x220] sm:$0xf]
      %v1272 = vld [vmem:[%s3 + $0x224] sm:$0xf]
      %v1273 = vld [vmem:[%s3 + $0x228] sm:$0xf]
      %v1274 = vld [vmem:[%s3 + $0x22c] sm:$0xf]
      %v1275 = vld [vmem:[%s3 + $0x230] sm:$0xf]
      %v1276 = vld [vmem:[%s3 + $0x234] sm:$0xf]
      %v1277 = vld [vmem:[%s3 + $0x238] sm:$0xf]
      %v1278 = vld [vmem:[%s3 + $0x23c] sm:$0xf]
      %v1279 = vld [vmem:[%s4] sm:$0x1]
      %v1281 = vlaneseq
      %v1282 = vshrl.u32 %v1281, 7
      %v1283 = vsub.s32 0, %v1282
      %v1284 = vrot.slane %v1279, %v1283
      %v1430 = vunpack.c.l.b16 %v1135
      %v1431 = vunpack.c.l.b16 %v1136
      %v1432 = vunpack.c.l.b16 %v1137
      %v1433 = vunpack.c.l.b16 %v1138
      %v1434 = vunpack.c.l.b16 %v1139
      %v1435 = vunpack.c.l.b16 %v1140
      %v1436 = vunpack.c.l.b16 %v1141
      %v1437 = vunpack.c.l.b16 %v1142
      %v1438 = vunpack.c.l.b16 %v1143
      %v1439 = vunpack.c.l.b16 %v1144
      %v1440 = vunpack.c.l.b16 %v1145
      %v1441 = vunpack.c.l.b16 %v1146
      %v1442 = vunpack.c.l.b16 %v1147
      %v1443 = vunpack.c.l.b16 %v1148
      %v1444 = vunpack.c.l.b16 %v1149
      %v1445 = vunpack.c.l.b16 %v1150
      %v1446 = vunpack.c.l.b16 %v1151
      %v1447 = vunpack.c.l.b16 %v1152
      %v1448 = vunpack.c.l.b16 %v1153
      %v1449 = vunpack.c.l.b16 %v1154
      %v1450 = vunpack.c.l.b16 %v1155
      %v1451 = vunpack.c.l.b16 %v1156
      %v1452 = vunpack.c.l.b16 %v1157
      %v1453 = vunpack.c.l.b16 %v1158
      %v1454 = vunpack.c.l.b16 %v1159
      %v1455 = vunpack.c.l.b16 %v1160
      %v1456 = vunpack.c.l.b16 %v1161
      %v1457 = vunpack.c.l.b16 %v1162
      %v1458 = vunpack.c.l.b16 %v1163
      %v1459 = vunpack.c.l.b16 %v1164
      %v1460 = vunpack.c.l.b16 %v1165
      %v1461 = vunpack.c.l.b16 %v1166
      %v1462 = vunpack.c.l.b16 %v1167
      %v1463 = vunpack.c.l.b16 %v1168
      %v1464 = vunpack.c.l.b16 %v1169
      %v1465 = vunpack.c.l.b16 %v1170
      %v1466 = vunpack.c.l.b16 %v1171
      %v1467 = vunpack.c.l.b16 %v1172
      %v1468 = vunpack.c.l.b16 %v1173
      %v1469 = vunpack.c.l.b16 %v1174
      %v1470 = vunpack.c.l.b16 %v1175
      %v1471 = vunpack.c.l.b16 %v1176
      %v1472 = vunpack.c.l.b16 %v1177
      %v1473 = vunpack.c.l.b16 %v1178
      %v1474 = vunpack.c.l.b16 %v1179
      %v1475 = vunpack.c.l.b16 %v1180
      %v1476 = vunpack.c.l.b16 %v1181
      %v1477 = vunpack.c.l.b16 %v1182
      %v1478 = vunpack.c.l.b16 %v1183
      %v1479 = vunpack.c.l.b16 %v1184
      %v1480 = vunpack.c.l.b16 %v1185
      %v1481 = vunpack.c.l.b16 %v1186
      %v1482 = vunpack.c.l.b16 %v1187
      %v1483 = vunpack.c.l.b16 %v1188
      %v1484 = vunpack.c.l.b16 %v1189
      %v1485 = vunpack.c.l.b16 %v1190
      %v1486 = vunpack.c.l.b16 %v1191
      %v1487 = vunpack.c.l.b16 %v1192
      %v1488 = vunpack.c.l.b16 %v1193
      %v1489 = vunpack.c.l.b16 %v1194
      %v1490 = vunpack.c.l.b16 %v1195
      %v1491 = vunpack.c.l.b16 %v1196
      %v1492 = vunpack.c.l.b16 %v1197
      %v1493 = vunpack.c.l.b16 %v1198
      %v1494 = vunpack.c.l.b16 %v1199
      %v1495 = vunpack.c.l.b16 %v1200
      %v1496 = vunpack.c.l.b16 %v1201
      %v1497 = vunpack.c.l.b16 %v1202
      %v1498 = vunpack.c.l.b16 %v1203
      %v1499 = vunpack.c.l.b16 %v1204
      %v1500 = vunpack.c.l.b16 %v1205
      %v1501 = vunpack.c.l.b16 %v1206
      %v1502 = vunpack.c.l.b16 %v1207
      %v1503 = vunpack.c.l.b16 %v1208
      %v1504 = vunpack.c.l.b16 %v1209
      %v1505 = vunpack.c.l.b16 %v1210
      %v1506 = vunpack.c.l.b16 %v1211
      %v1507 = vunpack.c.l.b16 %v1212
      %v1508 = vunpack.c.l.b16 %v1213
      %v1509 = vunpack.c.l.b16 %v1214
      %v1510 = vunpack.c.l.b16 %v1215
      %v1511 = vunpack.c.l.b16 %v1216
      %v1512 = vunpack.c.l.b16 %v1217
      %v1513 = vunpack.c.l.b16 %v1218
      %v1514 = vunpack.c.l.b16 %v1219
      %v1515 = vunpack.c.l.b16 %v1220
      %v1516 = vunpack.c.l.b16 %v1221
      %v1517 = vunpack.c.l.b16 %v1222
      %v1518 = vunpack.c.l.b16 %v1223
      %v1519 = vunpack.c.l.b16 %v1224
      %v1520 = vunpack.c.l.b16 %v1225
      %v1521 = vunpack.c.l.b16 %v1226
      %v1522 = vunpack.c.l.b16 %v1227
      %v1523 = vunpack.c.l.b16 %v1228
      %v1524 = vunpack.c.l.b16 %v1229
      %v1525 = vunpack.c.l.b16 %v1230
      %v1526 = vunpack.c.l.b16 %v1231
      %v1527 = vunpack.c.l.b16 %v1232
      %v1528 = vunpack.c.l.b16 %v1233
      %v1529 = vunpack.c.l.b16 %v1234
      %v1530 = vunpack.c.l.b16 %v1235
      %v1531 = vunpack.c.l.b16 %v1236
      %v1532 = vunpack.c.l.b16 %v1237
      %v1533 = vunpack.c.l.b16 %v1238
      %v1534 = vunpack.c.l.b16 %v1239
      %v1535 = vunpack.c.l.b16 %v1240
      %v1536 = vunpack.c.l.b16 %v1241
      %v1537 = vunpack.c.l.b16 %v1242
      %v1538 = vunpack.c.l.b16 %v1243
      %v1539 = vunpack.c.l.b16 %v1244
      %v1540 = vunpack.c.l.b16 %v1245
      %v1541 = vunpack.c.l.b16 %v1246
      %v1542 = vunpack.c.l.b16 %v1247
      %v1543 = vunpack.c.l.b16 %v1248
      %v1544 = vunpack.c.l.b16 %v1249
      %v1545 = vunpack.c.l.b16 %v1250
      %v1546 = vunpack.c.l.b16 %v1251
      %v1547 = vunpack.c.l.b16 %v1252
      %v1548 = vunpack.c.l.b16 %v1253
      %v1549 = vunpack.c.l.b16 %v1254
      %v1550 = vunpack.c.l.b16 %v1255
      %v1551 = vunpack.c.l.b16 %v1256
      %v1552 = vunpack.c.l.b16 %v1257
      %v1553 = vunpack.c.l.b16 %v1258
      %v1554 = vunpack.c.l.b16 %v1259
      %v1555 = vunpack.c.l.b16 %v1260
      %v1556 = vunpack.c.l.b16 %v1261
      %v1557 = vunpack.c.l.b16 %v1262
      %v1558 = vunpack.c.l.b16 %v1263
      %v1559 = vunpack.c.l.b16 %v1264
      %v1560 = vunpack.c.l.b16 %v1265
      %v1561 = vunpack.c.l.b16 %v1266
      %v1562 = vunpack.c.l.b16 %v1267
      %v1563 = vunpack.c.l.b16 %v1268
      %v1564 = vunpack.c.l.b16 %v1269
      %v1565 = vunpack.c.l.b16 %v1270
      %v1566 = vunpack.c.l.b16 %v1271
      %v1567 = vunpack.c.l.b16 %v1272
      %v1568 = vunpack.c.l.b16 %v1273
      %v1569 = vunpack.c.l.b16 %v1274
      %v1570 = vunpack.c.l.b16 %v1275
      %v1571 = vunpack.c.l.b16 %v1276
      %v1572 = vunpack.c.l.b16 %v1277
      %v1573 = vunpack.c.l.b16 %v1278
      %v1574 = vpack.c.b16 %v1431, %v1430
      %v1575 = vpack.c.b16 %v1433, %v1432
      %v1576 = vpack.c.b16 %v1435, %v1434
      %v1577 = vpack.c.b16 %v1437, %v1436
      %v1578 = vpack.c.b16 %v1439, %v1438
      %v1579 = vpack.c.b16 %v1441, %v1440
      %v1580 = vpack.c.b16 %v1443, %v1442
      %v1581 = vpack.c.b16 %v1445, %v1444
      %v1582 = vpack.c.b16 %v1447, %v1446
      %v1583 = vpack.c.b16 %v1449, %v1448
      %v1584 = vpack.c.b16 %v1451, %v1450
      %v1585 = vpack.c.b16 %v1453, %v1452
      %v1586 = vpack.c.b16 %v1455, %v1454
      %v1587 = vpack.c.b16 %v1457, %v1456
      %v1588 = vpack.c.b16 %v1459, %v1458
      %v1589 = vpack.c.b16 %v1461, %v1460
      %v1590 = vpack.c.b16 %v1463, %v1462
      %v1591 = vpack.c.b16 %v1465, %v1464
      %v1592 = vpack.c.b16 %v1467, %v1466
      %v1593 = vpack.c.b16 %v1469, %v1468
      %v1594 = vpack.c.b16 %v1471, %v1470
      %v1595 = vpack.c.b16 %v1473, %v1472
      %v1596 = vpack.c.b16 %v1475, %v1474
      %v1597 = vpack.c.b16 %v1477, %v1476
      %v1598 = vpack.c.b16 %v1479, %v1478
      %v1599 = vpack.c.b16 %v1481, %v1480
      %v1600 = vpack.c.b16 %v1483, %v1482
      %v1601 = vpack.c.b16 %v1485, %v1484
      %v1602 = vpack.c.b16 %v1487, %v1486
      %v1603 = vpack.c.b16 %v1489, %v1488
      %v1604 = vpack.c.b16 %v1491, %v1490
      %v1605 = vpack.c.b16 %v1493, %v1492
      %v1606 = vpack.c.b16 %v1495, %v1494
      %v1607 = vpack.c.b16 %v1497, %v1496
      %v1608 = vpack.c.b16 %v1499, %v1498
      %v1609 = vpack.c.b16 %v1501, %v1500
      %v1610 = vpack.c.b16 %v1503, %v1502
      %v1611 = vpack.c.b16 %v1505, %v1504
      %v1612 = vpack.c.b16 %v1507, %v1506
      %v1613 = vpack.c.b16 %v1509, %v1508
      %v1614 = vpack.c.b16 %v1511, %v1510
      %v1615 = vpack.c.b16 %v1513, %v1512
      %v1616 = vpack.c.b16 %v1515, %v1514
      %v1617 = vpack.c.b16 %v1517, %v1516
      %v1618 = vpack.c.b16 %v1519, %v1518
      %v1619 = vpack.c.b16 %v1521, %v1520
      %v1620 = vpack.c.b16 %v1523, %v1522
      %v1621 = vpack.c.b16 %v1525, %v1524
      %v1622 = vpack.c.b16 %v1527, %v1526
      %v1623 = vpack.c.b16 %v1529, %v1528
      %v1624 = vpack.c.b16 %v1531, %v1530
      %v1625 = vpack.c.b16 %v1533, %v1532
      %v1626 = vpack.c.b16 %v1535, %v1534
      %v1627 = vpack.c.b16 %v1537, %v1536
      %v1628 = vpack.c.b16 %v1539, %v1538
      %v1629 = vpack.c.b16 %v1541, %v1540
      %v1630 = vpack.c.b16 %v1543, %v1542
      %v1631 = vpack.c.b16 %v1545, %v1544
      %v1632 = vpack.c.b16 %v1547, %v1546
      %v1633 = vpack.c.b16 %v1549, %v1548
      %v1634 = vpack.c.b16 %v1551, %v1550
      %v1635 = vpack.c.b16 %v1553, %v1552
      %v1636 = vpack.c.b16 %v1555, %v1554
      %v1637 = vpack.c.b16 %v1557, %v1556
      %v1638 = vpack.c.b16 %v1559, %v1558
      %v1639 = vpack.c.b16 %v1561, %v1560
      %v1640 = vpack.c.b16 %v1563, %v1562
      %v1641 = vpack.c.b16 %v1565, %v1564
      %v1642 = vpack.c.b16 %v1567, %v1566
      %v1643 = vpack.c.b16 %v1569, %v1568
      %v1644 = vpack.c.b16 %v1571, %v1570
      %v1645 = vpack.c.b16 %v1573, %v1572
      %1718 = vmatprep.subr.bf16.mxu0 0
      %1719 = vmatpush1.bf16.msra.mxu0 %v1574
      %1720 = vmatprep.subr.bf16.mxu0 0
      %1721 = vmatpush1.bf16.msra.mxu0 %v1575
      %1722 = vmatprep.subr.bf16.mxu0 0
      %1723 = vmatpush1.bf16.msra.mxu0 %v1576
      %1724 = vmatprep.subr.bf16.mxu0 0
      %1725 = vmatpush1.bf16.msra.mxu0 %v1577
      %1726 = vmatprep.subr.bf16.mxu0 0
      %1727 = vmatpush1.bf16.msra.mxu0 %v1578
      %1728 = vmatprep.subr.bf16.mxu0 0
      %1729 = vmatpush1.bf16.msra.mxu0 %v1579
      %1730 = vmatprep.subr.bf16.mxu0 0
      %1731 = vmatpush1.bf16.msra.mxu0 %v1580
      %1732 = vmatprep.subr.bf16.mxu0 0
      %1733 = vmatpush1.bf16.msra.mxu0 %v1581
      %1734 = vmatprep.subr.bf16.mxu0 0
      %1735 = vmatpush1.bf16.msra.mxu0 %v1582
      %1736 = vmatprep.subr.bf16.mxu0 0
      %1737 = vmatpush1.bf16.msra.mxu0 %v1583
      %1738 = vmatprep.subr.bf16.mxu0 0
      %1739 = vmatpush1.bf16.msra.mxu0 %v1584
      %1740 = vmatprep.subr.bf16.mxu0 0
      %1741 = vmatpush1.bf16.msra.mxu0 %v1585
      %1742 = vmatprep.subr.bf16.mxu0 0
      %1743 = vmatpush1.bf16.msra.mxu0 %v1586
      %1744 = vmatprep.subr.bf16.mxu0 0
      %1745 = vmatpush1.bf16.msra.mxu0 %v1587
      %1746 = vmatprep.subr.bf16.mxu0 0
      %1747 = vmatpush1.bf16.msra.mxu0 %v1588
      %1748 = vmatprep.subr.bf16.mxu0 0
      %1749 = vmatpush1.bf16.msra.mxu0 %v1589
      %1750 = vmatprep.mubr.bf16.mxu0 %v992
      %1751 = vmatmul.mubr.bf16.gmra.mrb[0].mxu0 %v991
      %v1752 = vpop.f32.mrb[0].mxu0
      %v1753 = vadd.f32 %v1284, %v1752
      %v1754 = vpop.f32.mrb[0].mxu0
      %v1755 = vpop.f32.mrb[0].mxu0
      %v1756 = vadd.f32 %v1284, %v1755
      %v1757 = vpop.f32.mrb[0].mxu0
      %1758 = vmatprep.mubr.bf16.mxu0 %v1001
      %1759 = vmatmul.mubr.bf16.gmra.mrb[0].mxu0 %v1000
      %v1760 = vpop.f32.mrb[0].mxu0
      %v1761 = vadd.f32 %v1284, %v1760
      %v1762 = vpop.f32.mrb[0].mxu0
      %v1763 = vpop.f32.mrb[0].mxu0
      %v1764 = vadd.f32 %v1284, %v1763
      %v1765 = vpop.f32.mrb[0].mxu0
      %1766 = vmatprep.mubr.bf16.mxu0 %v1010
      %1767 = vmatmul.mubr.bf16.gmra.mrb[0].mxu0 %v1009
      %v1768 = vpop.f32.mrb[0].mxu0
      %v1769 = vadd.f32 %v1284, %v1768
      %v1770 = vpop.f32.mrb[0].mxu0
      %v1771 = vpop.f32.mrb[0].mxu0
      %v1772 = vadd.f32 %v1284, %v1771
      %v1773 = vpop.f32.mrb[0].mxu0
      %1774 = vmatprep.mubr.bf16.mxu0 %v1019
      %1775 = vmatmul.mubr.bf16.gmra.mrb[0].mxu0 %v1018
      %v1776 = vpop.f32.mrb[0].mxu0
      %v1777 = vadd.f32 %v1284, %v1776
      %v1778 = vpop.f32.mrb[0].mxu0
      %v1779 = vpop.f32.mrb[0].mxu0
      %v1780 = vadd.f32 %v1284, %v1779
      %v1781 = vpop.f32.mrb[0].mxu0
      %1782 = vmatprep.mubr.bf16.mxu0 %v1028
      %1783 = vmatmul.mubr.bf16.gmra.mrb[0].mxu0 %v1027
      %v1784 = vpop.f32.mrb[0].mxu0
      %v1785 = vadd.f32 %v1284, %v1784
      %v1786 = vpop.f32.mrb[0].mxu0
      %v1787 = vpop.f32.mrb[0].mxu0
      %v1788 = vadd.f32 %v1284, %v1787
      %v1789 = vpop.f32.mrb[0].mxu0
      %1790 = vmatprep.mubr.bf16.mxu0 %v1037
      %1791 = vmatmul.mubr.bf16.gmra.mrb[0].mxu0 %v1036
      %v1792 = vpop.f32.mrb[0].mxu0
      %v1793 = vadd.f32 %v1284, %v1792
      %v1794 = vpop.f32.mrb[0].mxu0
      %v1795 = vpop.f32.mrb[0].mxu0
      %v1796 = vadd.f32 %v1284, %v1795
      %v1797 = vpop.f32.mrb[0].mxu0
      %1798 = vmatprep.mubr.bf16.mxu0 %v1046
      %1799 = vmatmul.mubr.bf16.gmra.mrb[0].mxu0 %v1045
      %v1800 = vpop.f32.mrb[0].mxu0
      %v1801 = vadd.f32 %v1284, %v1800
      %v1802 = vpop.f32.mrb[0].mxu0
      %v1803 = vpop.f32.mrb[0].mxu0
      %v1804 = vadd.f32 %v1284, %v1803
      %v1805 = vpop.f32.mrb[0].mxu0
      %1806 = vmatprep.mubr.bf16.mxu0 %v1055
      %1807 = vmatmul.mubr.bf16.gmra.mrb[0].mxu0 %v1054
      %v1808 = vpop.f32.mrb[0].mxu0
      %v1809 = vadd.f32 %v1284, %v1808
      %v1810 = vpop.f32.mrb[0].mxu0
      %v1811 = vpop.f32.mrb[0].mxu0
      %v1812 = vadd.f32 %v1284, %v1811
      %v1813 = vpop.f32.mrb[0].mxu0
      %1814 = vmatprep.mubr.bf16.mxu0 %v1064
      %1815 = vmatmul.mubr.bf16.gmra.mrb[0].mxu0 %v1063
      %v1816 = vpop.f32.mrb[0].mxu0
      %v1817 = vadd.f32 %v1284, %v1816
      %v1818 = vpop.f32.mrb[0].mxu0
      %v1819 = vpop.f32.mrb[0].mxu0
      %v1820 = vadd.f32 %v1284, %v1819
      %v1821 = vpop.f32.mrb[0].mxu0
      %1822 = vmatprep.mubr.bf16.mxu0 %v1073
      %1823 = vmatmul.mubr.bf16.gmra.mrb[0].mxu0 %v1072
      %v1824 = vpop.f32.mrb[0].mxu0
      %v1825 = vadd.f32 %v1284, %v1824
      %v1826 = vpop.f32.mrb[0].mxu0
      %v1827 = vpop.f32.mrb[0].mxu0
      %v1828 = vadd.f32 %v1284, %v1827
      %v1829 = vpop.f32.mrb[0].mxu0
      %1830 = vmatprep.mubr.bf16.mxu0 %v1082
      %1831 = vmatmul.mubr.bf16.gmra.mrb[0].mxu0 %v1081
      %v1832 = vpop.f32.mrb[0].mxu0
      %v1833 = vadd.f32 %v1284, %v1832
      %v1834 = vpop.f32.mrb[0].mxu0
      %v1835 = vpop.f32.mrb[0].mxu0
      %v1836 = vadd.f32 %v1284, %v1835
      %v1837 = vpop.f32.mrb[0].mxu0
      %1838 = vmatprep.mubr.bf16.mxu0 %v1091
      %1839 = vmatmul.mubr.bf16.gmra.mrb[0].mxu0 %v1090
      %v1840 = vpop.f32.mrb[0].mxu0
      %v1841 = vadd.f32 %v1284, %v1840
      %v1842 = vpop.f32.mrb[0].mxu0
      %v1843 = vpop.f32.mrb[0].mxu0
      %v1844 = vadd.f32 %v1284, %v1843
      %v1845 = vpop.f32.mrb[0].mxu0
      %1846 = vmatprep.mubr.bf16.mxu0 %v1100
      %1847 = vmatmul.mubr.bf16.gmra.mrb[0].mxu0 %v1099
      %v1848 = vpop.f32.mrb[0].mxu0
      %v1849 = vadd.f32 %v1284, %v1848
      %v1850 = vpop.f32.mrb[0].mxu0
      %v1851 = vpop.f32.mrb[0].mxu0
      %v1852 = vadd.f32 %v1284, %v1851
      %v1853 = vpop.f32.mrb[0].mxu0
      %1854 = vmatprep.mubr.bf16.mxu0 %v1109
      %1855 = vmatmul.mubr.bf16.gmra.mrb[0].mxu0 %v1108
      %v1856 = vpop.f32.mrb[0].mxu0
      %v1857 = vadd.f32 %v1284, %v1856
      %v1858 = vpop.f32.mrb[0].mxu0
      %v1859 = vpop.f32.mrb[0].mxu0
      %v1860 = vadd.f32 %v1284, %v1859
      %v1861 = vpop.f32.mrb[0].mxu0
      %1862 = vmatprep.mubr.bf16.mxu0 %v1118
      %1863 = vmatmul.mubr.bf16.gmra.mrb[0].mxu0 %v1117
      %v1864 = vpop.f32.mrb[0].mxu0
      %v1865 = vadd.f32 %v1284, %v1864
      %v1866 = vpop.f32.mrb[0].mxu0
      %v1867 = vpop.f32.mrb[0].mxu0
      %v1868 = vadd.f32 %v1284, %v1867
      %v1869 = vpop.f32.mrb[0].mxu0
      %1870 = vmatprep.mubr.bf16.mxu0 %v1127
      %1871 = vmatmul.mubr.bf16.gmra.mrb[0].mxu0 %v1126
      %v1872 = vpop.f32.mrb[0].mxu0
      %v1873 = vadd.f32 %v1284, %v1872
      %v1874 = vpop.f32.mrb[0].mxu0
      %v1875 = vpop.f32.mrb[0].mxu0
      %v1876 = vadd.f32 %v1284, %v1875
      %v1877 = vpop.f32.mrb[0].mxu0
      %1878 = vdwg.mxu0
      %1879 = vmatprep.subr.bf16.mxu0 0
      %1880 = vmatpush1.bf16.msra.mxu0 %v1590
      %1881 = vmatprep.subr.bf16.mxu0 0
      %1882 = vmatpush1.bf16.msra.mxu0 %v1591
      %1883 = vmatprep.subr.bf16.mxu0 0
      %1884 = vmatpush1.bf16.msra.mxu0 %v1592
      %1885 = vmatprep.subr.bf16.mxu0 0
      %1886 = vmatpush1.bf16.msra.mxu0 %v1593
      %1887 = vmatprep.subr.bf16.mxu0 0
      %1888 = vmatpush1.bf16.msra.mxu0 %v1594
      %1889 = vmatprep.subr.bf16.mxu0 0
      %1890 = vmatpush1.bf16.msra.mxu0 %v1595
      %1891 = vmatprep.subr.bf16.mxu0 0
      %1892 = vmatpush1.bf16.msra.mxu0 %v1596
      %1893 = vmatprep.subr.bf16.mxu0 0
      %1894 = vmatpush1.bf16.msra.mxu0 %v1597
      %1895 = vmatprep.subr.bf16.mxu0 0
      %1896 = vmatpush1.bf16.msra.mxu0 %v1598
      %1897 = vmatprep.subr.bf16.mxu0 0
      %1898 = vmatpush1.bf16.msra.mxu0 %v1599
      %1899 = vmatprep.subr.bf16.mxu0 0
      %1900 = vmatpush1.bf16.msra.mxu0 %v1600
      %1901 = vmatprep.subr.bf16.mxu0 0
      %1902 = vmatpush1.bf16.msra.mxu0 %v1601
      %1903 = vmatprep.subr.bf16.mxu0 0
      %1904 = vmatpush1.bf16.msra.mxu0 %v1602
      %1905 = vmatprep.subr.bf16.mxu0 0
      %1906 = vmatpush1.bf16.msra.mxu0 %v1603
      %1907 = vmatprep.subr.bf16.mxu0 0
      %1908 = vmatpush1.bf16.msra.mxu0 %v1604
      %1909 = vmatprep.subr.bf16.mxu0 0
      %1910 = vmatpush1.bf16.msra.mxu0 %v1605
      %1911 = vmatprep.mubr.bf16.mxu0 %v994
      %1912 = vmatmul.mubr.bf16.gmra.mrb[0].mxu0 %v993
      %v1913 = vpop.f32.mrb[0].mxu0
      %v1914 = vadd.f32 %v1753, %v1913
      %v1915 = vpop.f32.mrb[0].mxu0
      %v1916 = vpop.f32.mrb[0].mxu0
      %v1917 = vadd.f32 %v1756, %v1916
      %v1918 = vpop.f32.mrb[0].mxu0
      %1919 = vmatprep.mubr.bf16.mxu0 %v1003
      %1920 = vmatmul.mubr.bf16.gmra.mrb[0].mxu0 %v1002
      %v1921 = vpop.f32.mrb[0].mxu0
      %v1922 = vadd.f32 %v1761, %v1921
      %v1923 = vpop.f32.mrb[0].mxu0
      %v1924 = vpop.f32.mrb[0].mxu0
      %v1925 = vadd.f32 %v1764, %v1924
      %v1926 = vpop.f32.mrb[0].mxu0
      %1927 = vmatprep.mubr.bf16.mxu0 %v1012
      %1928 = vmatmul.mubr.bf16.gmra.mrb[0].mxu0 %v1011
      %v1929 = vpop.f32.mrb[0].mxu0
      %v1930 = vadd.f32 %v1769, %v1929
      %v1931 = vpop.f32.mrb[0].mxu0
      %v1932 = vpop.f32.mrb[0].mxu0
      %v1933 = vadd.f32 %v1772, %v1932
      %v1934 = vpop.f32.mrb[0].mxu0
      %1935 = vmatprep.mubr.bf16.mxu0 %v1021
      %1936 = vmatmul.mubr.bf16.gmra.mrb[0].mxu0 %v1020
      %v1937 = vpop.f32.mrb[0].mxu0
      %v1938 = vadd.f32 %v1777, %v1937
      %v1939 = vpop.f32.mrb[0].mxu0
      %v1940 = vpop.f32.mrb[0].mxu0
      %v1941 = vadd.f32 %v1780, %v1940
      %v1942 = vpop.f32.mrb[0].mxu0
      %1943 = vmatprep.mubr.bf16.mxu0 %v1030
      %1944 = vmatmul.mubr.bf16.gmra.mrb[0].mxu0 %v1029
      %v1945 = vpop.f32.mrb[0].mxu0
      %v1946 = vadd.f32 %v1785, %v1945
      %v1947 = vpop.f32.mrb[0].mxu0
      %v1948 = vpop.f32.mrb[0].mxu0
      %v1949 = vadd.f32 %v1788, %v1948
      %v1950 = vpop.f32.mrb[0].mxu0
      %1951 = vmatprep.mubr.bf16.mxu0 %v1039
      %1952 = vmatmul.mubr.bf16.gmra.mrb[0].mxu0 %v1038
      %v1953 = vpop.f32.mrb[0].mxu0
      %v1954 = vadd.f32 %v1793, %v1953
      %v1955 = vpop.f32.mrb[0].mxu0
      %v1956 = vpop.f32.mrb[0].mxu0
      %v1957 = vadd.f32 %v1796, %v1956
      %v1958 = vpop.f32.mrb[0].mxu0
      %1959 = vmatprep.mubr.bf16.mxu0 %v1048
      %1960 = vmatmul.mubr.bf16.gmra.mrb[0].mxu0 %v1047
      %v1961 = vpop.f32.mrb[0].mxu0
      %v1962 = vadd.f32 %v1801, %v1961
      %v1963 = vpop.f32.mrb[0].mxu0
      %v1964 = vpop.f32.mrb[0].mxu0
      %v1965 = vadd.f32 %v1804, %v1964
      %v1966 = vpop.f32.mrb[0].mxu0
      %1967 = vmatprep.mubr.bf16.mxu0 %v1057
      %1968 = vmatmul.mubr.bf16.gmra.mrb[0].mxu0 %v1056
      %v1969 = vpop.f32.mrb[0].mxu0
      %v1970 = vadd.f32 %v1809, %v1969
      %v1971 = vpop.f32.mrb[0].mxu0
      %v1972 = vpop.f32.mrb[0].mxu0
      %v1973 = vadd.f32 %v1812, %v1972
      %v1974 = vpop.f32.mrb[0].mxu0
      %1975 = vmatprep.mubr.bf16.mxu0 %v1066
      %1976 = vmatmul.mubr.bf16.gmra.mrb[0].mxu0 %v1065
      %v1977 = vpop.f32.mrb[0].mxu0
      %v1978 = vadd.f32 %v1817, %v1977
      %v1979 = vpop.f32.mrb[0].mxu0
      %v1980 = vpop.f32.mrb[0].mxu0
      %v1981 = vadd.f32 %v1820, %v1980
      %v1982 = vpop.f32.mrb[0].mxu0
      %1983 = vmatprep.mubr.bf16.mxu0 %v1075
      %1984 = vmatmul.mubr.bf16.gmra.mrb[0].mxu0 %v1074
      %v1985 = vpop.f32.mrb[0].mxu0
      %v1986 = vadd.f32 %v1825, %v1985
      %v1987 = vpop.f32.mrb[0].mxu0
      %v1988 = vpop.f32.mrb[0].mxu0
      %v1989 = vadd.f32 %v1828, %v1988
      %v1990 = vpop.f32.mrb[0].mxu0
      %1991 = vmatprep.mubr.bf16.mxu0 %v1084
      %1992 = vmatmul.mubr.bf16.gmra.mrb[0].mxu0 %v1083
      %v1993 = vpop.f32.mrb[0].mxu0
      %v1994 = vadd.f32 %v1833, %v1993
      %v1995 = vpop.f32.mrb[0].mxu0
      %v1996 = vpop.f32.mrb[0].mxu0
      %v1997 = vadd.f32 %v1836, %v1996
      %v1998 = vpop.f32.mrb[0].mxu0
      %1999 = vmatprep.mubr.bf16.mxu0 %v1093
      %2000 = vmatmul.mubr.bf16.gmra.mrb[0].mxu0 %v1092
      %v2001 = vpop.f32.mrb[0].mxu0
      %v2002 = vadd.f32 %v1841, %v2001
      %v2003 = vpop.f32.mrb[0].mxu0
      %v2004 = vpop.f32.mrb[0].mxu0
      %v2005 = vadd.f32 %v1844, %v2004
      %v2006 = vpop.f32.mrb[0].mxu0
      %2007 = vmatprep.mubr.bf16.mxu0 %v1102
      %2008 = vmatmul.mubr.bf16.gmra.mrb[0].mxu0 %v1101
      %v2009 = vpop.f32.mrb[0].mxu0
      %v2010 = vadd.f32 %v1849, %v2009
      %v2011 = vpop.f32.mrb[0].mxu0
      %v2012 = vpop.f32.mrb[0].mxu0
      %v2013 = vadd.f32 %v1852, %v2012
      %v2014 = vpop.f32.mrb[0].mxu0
      %2015 = vmatprep.mubr.bf16.mxu0 %v1111
      %2016 = vmatmul.mubr.bf16.gmra.mrb[0].mxu0 %v1110
      %v2017 = vpop.f32.mrb[0].mxu0
      %v2018 = vadd.f32 %v1857, %v2017
      %v2019 = vpop.f32.mrb[0].mxu0
      %v2020 = vpop.f32.mrb[0].mxu0
      %v2021 = vadd.f32 %v1860, %v2020
      %v2022 = vpop.f32.mrb[0].mxu0
      %2023 = vmatprep.mubr.bf16.mxu0 %v1120
      %2024 = vmatmul.mubr.bf16.gmra.mrb[0].mxu0 %v1119
      %v2025 = vpop.f32.mrb[0].mxu0
      %v2026 = vadd.f32 %v1865, %v2025
      %v2027 = vpop.f32.mrb[0].mxu0
      %v2028 = vpop.f32.mrb[0].mxu0
      %v2029 = vadd.f32 %v1868, %v2028
      %v2030 = vpop.f32.mrb[0].mxu0
      %2031 = vmatprep.mubr.bf16.mxu0 %v1129
      %2032 = vmatmul.mubr.bf16.gmra.mrb[0].mxu0 %v1128
      %v2033 = vpop.f32.mrb[0].mxu0
      %v2034 = vadd.f32 %v1873, %v2033
      %v2035 = vpop.f32.mrb[0].mxu0
      %v2036 = vpop.f32.mrb[0].mxu0
      %v2037 = vadd.f32 %v1876, %v2036
      %v2038 = vpop.f32.mrb[0].mxu0
      %2039 = vdwg.mxu0
      %2040 = vmatprep.subr.bf16.mxu0 0
      %2041 = vmatpush1.bf16.msra.mxu0 %v1606
      %2042 = vmatprep.subr.bf16.mxu0 0
      %2043 = vmatpush1.bf16.msra.mxu0 %v1607
      %2044 = vmatprep.subr.bf16.mxu0 0
      %2045 = vmatpush1.bf16.msra.mxu0 %v1608
      %2046 = vmatprep.subr.bf16.mxu0 0
      %2047 = vmatpush1.bf16.msra.mxu0 %v1609
      %2048 = vmatprep.subr.bf16.mxu0 0
      %2049 = vmatpush1.bf16.msra.mxu0 %v1610
      %2050 = vmatprep.subr.bf16.mxu0 0
      %2051 = vmatpush1.bf16.msra.mxu0 %v1611
      %2052 = vmatprep.subr.bf16.mxu0 0
      %2053 = vmatpush1.bf16.msra.mxu0 %v1612
      %2054 = vmatprep.subr.bf16.mxu0 0
      %2055 = vmatpush1.bf16.msra.mxu0 %v1613
      %2056 = vmatprep.subr.bf16.mxu0 0
      %2057 = vmatpush1.bf16.msra.mxu0 %v1614
      %2058 = vmatprep.subr.bf16.mxu0 0
      %2059 = vmatpush1.bf16.msra.mxu0 %v1615
      %2060 = vmatprep.subr.bf16.mxu0 0
      %2061 = vmatpush1.bf16.msra.mxu0 %v1616
      %2062 = vmatprep.subr.bf16.mxu0 0
      %2063 = vmatpush1.bf16.msra.mxu0 %v1617
      %2064 = vmatprep.subr.bf16.mxu0 0
      %2065 = vmatpush1.bf16.msra.mxu0 %v1618
      %2066 = vmatprep.subr.bf16.mxu0 0
      %2067 = vmatpush1.bf16.msra.mxu0 %v1619
      %2068 = vmatprep.subr.bf16.mxu0 0
      %2069 = vmatpush1.bf16.msra.mxu0 %v1620
      %2070 = vmatprep.subr.bf16.mxu0 0
      %2071 = vmatpush1.bf16.msra.mxu0 %v1621
      %2072 = vmatprep.mubr.bf16.mxu0 %v996
      %2073 = vmatmul.mubr.bf16.gmra.mrb[0].mxu0 %v995
      %v2074 = vpop.f32.mrb[0].mxu0
      %v2075 = vadd.f32 %v1914, %v2074
      %v2076 = vpop.f32.mrb[0].mxu0
      %v2077 = vpop.f32.mrb[0].mxu0
      %v2078 = vadd.f32 %v1917, %v2077
      %v2079 = vpop.f32.mrb[0].mxu0
      %2080 = vmatprep.mubr.bf16.mxu0 %v1005
      %2081 = vmatmul.mubr.bf16.gmra.mrb[0].mxu0 %v1004
      %v2082 = vpop.f32.mrb[0].mxu0
      %v2083 = vadd.f32 %v1922, %v2082
      %v2084 = vpop.f32.mrb[0].mxu0
      %v2085 = vpop.f32.mrb[0].mxu0
      %v2086 = vadd.f32 %v1925, %v2085
      %v2087 = vpop.f32.mrb[0].mxu0
      %2088 = vmatprep.mubr.bf16.mxu0 %v1014
      %2089 = vmatmul.mubr.bf16.gmra.mrb[0].mxu0 %v1013
      %v2090 = vpop.f32.mrb[0].mxu0
      %v2091 = vadd.f32 %v1930, %v2090
      %v2092 = vpop.f32.mrb[0].mxu0
      %v2093 = vpop.f32.mrb[0].mxu0
      %v2094 = vadd.f32 %v1933, %v2093
      %v2095 = vpop.f32.mrb[0].mxu0
      %2096 = vmatprep.mubr.bf16.mxu0 %v1023
      %2097 = vmatmul.mubr.bf16.gmra.mrb[0].mxu0 %v1022
      %v2098 = vpop.f32.mrb[0].mxu0
      %v2099 = vadd.f32 %v1938, %v2098
      %v2100 = vpop.f32.mrb[0].mxu0
      %v2101 = vpop.f32.mrb[0].mxu0
      %v2102 = vadd.f32 %v1941, %v2101
      %v2103 = vpop.f32.mrb[0].mxu0
      %2104 = vmatprep.mubr.bf16.mxu0 %v1032
      %2105 = vmatmul.mubr.bf16.gmra.mrb[0].mxu0 %v1031
      %v2106 = vpop.f32.mrb[0].mxu0
      %v2107 = vadd.f32 %v1946, %v2106
      %v2108 = vpop.f32.mrb[0].mxu0
      %v2109 = vpop.f32.mrb[0].mxu0
      %v2110 = vadd.f32 %v1949, %v2109
      %v2111 = vpop.f32.mrb[0].mxu0
      %2112 = vmatprep.mubr.bf16.mxu0 %v1041
      %2113 = vmatmul.mubr.bf16.gmra.mrb[0].mxu0 %v1040
      %v2114 = vpop.f32.mrb[0].mxu0
      %v2115 = vadd.f32 %v1954, %v2114
      %v2116 = vpop.f32.mrb[0].mxu0
      %v2117 = vpop.f32.mrb[0].mxu0
      %v2118 = vadd.f32 %v1957, %v2117
      %v2119 = vpop.f32.mrb[0].mxu0
      %2120 = vmatprep.mubr.bf16.mxu0 %v1050
      %2121 = vmatmul.mubr.bf16.gmra.mrb[0].mxu0 %v1049
      %v2122 = vpop.f32.mrb[0].mxu0
      %v2123 = vadd.f32 %v1962, %v2122
      %v2124 = vpop.f32.mrb[0].mxu0
      %v2125 = vpop.f32.mrb[0].mxu0
      %v2126 = vadd.f32 %v1965, %v2125
      %v2127 = vpop.f32.mrb[0].mxu0
      %2128 = vmatprep.mubr.bf16.mxu0 %v1059
      %2129 = vmatmul.mubr.bf16.gmra.mrb[0].mxu0 %v1058
      %v2130 = vpop.f32.mrb[0].mxu0
      %v2131 = vadd.f32 %v1970, %v2130
      %v2132 = vpop.f32.mrb[0].mxu0
      %v2133 = vpop.f32.mrb[0].mxu0
      %v2134 = vadd.f32 %v1973, %v2133
      %v2135 = vpop.f32.mrb[0].mxu0
      %2136 = vmatprep.mubr.bf16.mxu0 %v1068
      %2137 = vmatmul.mubr.bf16.gmra.mrb[0].mxu0 %v1067
      %v2138 = vpop.f32.mrb[0].mxu0
      %v2139 = vadd.f32 %v1978, %v2138
      %v2140 = vpop.f32.mrb[0].mxu0
      %v2141 = vpop.f32.mrb[0].mxu0
      %v2142 = vadd.f32 %v1981, %v2141
      %v2143 = vpop.f32.mrb[0].mxu0
      %2144 = vmatprep.mubr.bf16.mxu0 %v1077
      %2145 = vmatmul.mubr.bf16.gmra.mrb[0].mxu0 %v1076
      %v2146 = vpop.f32.mrb[0].mxu0
      %v2147 = vadd.f32 %v1986, %v2146
      %v2148 = vpop.f32.mrb[0].mxu0
      %v2149 = vpop.f32.mrb[0].mxu0
      %v2150 = vadd.f32 %v1989, %v2149
      %v2151 = vpop.f32.mrb[0].mxu0
      %2152 = vmatprep.mubr.bf16.mxu0 %v1086
      %2153 = vmatmul.mubr.bf16.gmra.mrb[0].mxu0 %v1085
      %v2154 = vpop.f32.mrb[0].mxu0
      %v2155 = vadd.f32 %v1994, %v2154
      %v2156 = vpop.f32.mrb[0].mxu0
      %v2157 = vpop.f32.mrb[0].mxu0
      %v2158 = vadd.f32 %v1997, %v2157
      %v2159 = vpop.f32.mrb[0].mxu0
      %2160 = vmatprep.mubr.bf16.mxu0 %v1095
      %2161 = vmatmul.mubr.bf16.gmra.mrb[0].mxu0 %v1094
      %v2162 = vpop.f32.mrb[0].mxu0
      %v2163 = vadd.f32 %v2002, %v2162
      %v2164 = vpop.f32.mrb[0].mxu0
      %v2165 = vpop.f32.mrb[0].mxu0
      %v2166 = vadd.f32 %v2005, %v2165
      %v2167 = vpop.f32.mrb[0].mxu0
      %2168 = vmatprep.mubr.bf16.mxu0 %v1104
      %2169 = vmatmul.mubr.bf16.gmra.mrb[0].mxu0 %v1103
      %v2170 = vpop.f32.mrb[0].mxu0
      %v2171 = vadd.f32 %v2010, %v2170
      %v2172 = vpop.f32.mrb[0].mxu0
      %v2173 = vpop.f32.mrb[0].mxu0
      %v2174 = vadd.f32 %v2013, %v2173
      %v2175 = vpop.f32.mrb[0].mxu0
      %2176 = vmatprep.mubr.bf16.mxu0 %v1113
      %2177 = vmatmul.mubr.bf16.gmra.mrb[0].mxu0 %v1112
      %v2178 = vpop.f32.mrb[0].mxu0
      %v2179 = vadd.f32 %v2018, %v2178
      %v2180 = vpop.f32.mrb[0].mxu0
      %v2181 = vpop.f32.mrb[0].mxu0
      %v2182 = vadd.f32 %v2021, %v2181
      %v2183 = vpop.f32.mrb[0].mxu0
      %2184 = vmatprep.mubr.bf16.mxu0 %v1122
      %2185 = vmatmul.mubr.bf16.gmra.mrb[0].mxu0 %v1121
      %v2186 = vpop.f32.mrb[0].mxu0
      %v2187 = vadd.f32 %v2026, %v2186
      %v2188 = vpop.f32.mrb[0].mxu0
      %v2189 = vpop.f32.mrb[0].mxu0
      %v2190 = vadd.f32 %v2029, %v2189
      %v2191 = vpop.f32.mrb[0].mxu0
      %2192 = vmatprep.mubr.bf16.mxu0 %v1131
      %2193 = vmatmul.mubr.bf16.gmra.mrb[0].mxu0 %v1130
      %v2194 = vpop.f32.mrb[0].mxu0
      %v2195 = vadd.f32 %v2034, %v2194
      %v2196 = vpop.f32.mrb[0].mxu0
      %v2197 = vpop.f32.mrb[0].mxu0
      %v2198 = vadd.f32 %v2037, %v2197
      %v2199 = vpop.f32.mrb[0].mxu0
      %2200 = vdwg.mxu0
      %2201 = vmatprep.subr.bf16.mxu0 0
      %2202 = vmatpush1.bf16.msra.mxu0 %v1622
      %2203 = vmatprep.subr.bf16.mxu0 0
      %2204 = vmatpush1.bf16.msra.mxu0 %v1623
      %2205 = vmatprep.subr.bf16.mxu0 0
      %2206 = vmatpush1.bf16.msra.mxu0 %v1624
      %2207 = vmatprep.subr.bf16.mxu0 0
      %2208 = vmatpush1.bf16.msra.mxu0 %v1625
      %2209 = vmatprep.subr.bf16.mxu0 0
      %2210 = vmatpush1.bf16.msra.mxu0 %v1626
      %2211 = vmatprep.subr.bf16.mxu0 0
      %2212 = vmatpush1.bf16.msra.mxu0 %v1627
      %2213 = vmatprep.subr.bf16.mxu0 0
      %2214 = vmatpush1.bf16.msra.mxu0 %v1628
      %2215 = vmatprep.subr.bf16.mxu0 0
      %2216 = vmatpush1.bf16.msra.mxu0 %v1629
      %2217 = vmatprep.subr.bf16.mxu0 0
      %2218 = vmatpush1.bf16.msra.mxu0 %v1630
      %2219 = vmatprep.subr.bf16.mxu0 0
      %2220 = vmatpush1.bf16.msra.mxu0 %v1631
      %2221 = vmatprep.subr.bf16.mxu0 0
      %2222 = vmatpush1.bf16.msra.mxu0 %v1632
      %2223 = vmatprep.subr.bf16.mxu0 0
      %2224 = vmatpush1.bf16.msra.mxu0 %v1633
      %2225 = vmatprep.subr.bf16.mxu0 0
      %2226 = vmatpush1.bf16.msra.mxu0 %v1634
      %2227 = vmatprep.subr.bf16.mxu0 0
      %2228 = vmatpush1.bf16.msra.mxu0 %v1635
      %2229 = vmatprep.subr.bf16.mxu0 0
      %2230 = vmatpush1.bf16.msra.mxu0 %v1636
      %2231 = vmatprep.subr.bf16.mxu0 0
      %2232 = vmatpush1.bf16.msra.mxu0 %v1637
      %2233 = vmatprep.mubr.bf16.mxu0 %v998
      %2234 = vmatmul.mubr.bf16.gmra.mrb[0].mxu0 %v997
      %v2235 = vpop.f32.mrb[0].mxu0
      %v2236 = vadd.f32 %v2075, %v2235
      %v2237 = vpop.f32.mrb[0].mxu0
      %v2238 = vpop.f32.mrb[0].mxu0
      %v2239 = vadd.f32 %v2078, %v2238
      %v2240 = vpop.f32.mrb[0].mxu0
      %2241 = vmatprep.mubr.bf16.mxu0 %v1007
      %2242 = vmatmul.mubr.bf16.gmra.mrb[0].mxu0 %v1006
      %v2243 = vpop.f32.mrb[0].mxu0
      %v2244 = vadd.f32 %v2083, %v2243
      %v2245 = vpop.f32.mrb[0].mxu0
      %v2246 = vpop.f32.mrb[0].mxu0
      %v2247 = vadd.f32 %v2086, %v2246
      %v2248 = vpop.f32.mrb[0].mxu0
      %2249 = vmatprep.mubr.bf16.mxu0 %v1016
      %2250 = vmatmul.mubr.bf16.gmra.mrb[0].mxu0 %v1015
      %v2251 = vpop.f32.mrb[0].mxu0
      %v2252 = vadd.f32 %v2091, %v2251
      %v2253 = vpop.f32.mrb[0].mxu0
      %v2254 = vpop.f32.mrb[0].mxu0
      %v2255 = vadd.f32 %v2094, %v2254
      %v2256 = vpop.f32.mrb[0].mxu0
      %2257 = vmatprep.mubr.bf16.mxu0 %v1025
      %2258 = vmatmul.mubr.bf16.gmra.mrb[0].mxu0 %v1024
      %v2259 = vpop.f32.mrb[0].mxu0
      %v2260 = vadd.f32 %v2099, %v2259
      %v2261 = vpop.f32.mrb[0].mxu0
      %v2262 = vpop.f32.mrb[0].mxu0
      %v2263 = vadd.f32 %v2102, %v2262
      %v2264 = vpop.f32.mrb[0].mxu0
      %2265 = vmatprep.mubr.bf16.mxu0 %v1034
      %2266 = vmatmul.mubr.bf16.gmra.mrb[0].mxu0 %v1033
      %v2267 = vpop.f32.mrb[0].mxu0
      %v2268 = vadd.f32 %v2107, %v2267
      %v2269 = vpop.f32.mrb[0].mxu0
      %v2270 = vpop.f32.mrb[0].mxu0
      %v2271 = vadd.f32 %v2110, %v2270
      %v2272 = vpop.f32.mrb[0].mxu0
      %2273 = vmatprep.mubr.bf16.mxu0 %v1043
      %2274 = vmatmul.mubr.bf16.gmra.mrb[0].mxu0 %v1042
      %v2275 = vpop.f32.mrb[0].mxu0
      %v2276 = vadd.f32 %v2115, %v2275
      %v2277 = vpop.f32.mrb[0].mxu0
      %v2278 = vpop.f32.mrb[0].mxu0
      %v2279 = vadd.f32 %v2118, %v2278
      %v2280 = vpop.f32.mrb[0].mxu0
      %2281 = vmatprep.mubr.bf16.mxu0 %v1052
      %2282 = vmatmul.mubr.bf16.gmra.mrb[0].mxu0 %v1051
      %v2283 = vpop.f32.mrb[0].mxu0
      %v2284 = vadd.f32 %v2123, %v2283
      %v2285 = vpop.f32.mrb[0].mxu0
      %v2286 = vpop.f32.mrb[0].mxu0
      %v2287 = vadd.f32 %v2126, %v2286
      %v2288 = vpop.f32.mrb[0].mxu0
      %2289 = vmatprep.mubr.bf16.mxu0 %v1061
      %2290 = vmatmul.mubr.bf16.gmra.mrb[0].mxu0 %v1060
      %v2291 = vpop.f32.mrb[0].mxu0
      %v2292 = vadd.f32 %v2131, %v2291
      %v2293 = vpop.f32.mrb[0].mxu0
      %v2294 = vpop.f32.mrb[0].mxu0
      %v2295 = vadd.f32 %v2134, %v2294
      %v2296 = vpop.f32.mrb[0].mxu0
      %2297 = vmatprep.mubr.bf16.mxu0 %v1070
      %2298 = vmatmul.mubr.bf16.gmra.mrb[0].mxu0 %v1069
      %v2299 = vpop.f32.mrb[0].mxu0
      %v2300 = vadd.f32 %v2139, %v2299
      %v2301 = vpop.f32.mrb[0].mxu0
      %v2302 = vpop.f32.mrb[0].mxu0
      %v2303 = vadd.f32 %v2142, %v2302
      %v2304 = vpop.f32.mrb[0].mxu0
      %2305 = vmatprep.mubr.bf16.mxu0 %v1079
      %2306 = vmatmul.mubr.bf16.gmra.mrb[0].mxu0 %v1078
      %v2307 = vpop.f32.mrb[0].mxu0
      %v2308 = vadd.f32 %v2147, %v2307
      %v2309 = vpop.f32.mrb[0].mxu0
      %v2310 = vpop.f32.mrb[0].mxu0
      %v2311 = vadd.f32 %v2150, %v2310
      %v2312 = vpop.f32.mrb[0].mxu0
      %2313 = vmatprep.mubr.bf16.mxu0 %v1088
      %2314 = vmatmul.mubr.bf16.gmra.mrb[0].mxu0 %v1087
      %v2315 = vpop.f32.mrb[0].mxu0
      %v2316 = vadd.f32 %v2155, %v2315
      %v2317 = vpop.f32.mrb[0].mxu0
      %v2318 = vpop.f32.mrb[0].mxu0
      %v2319 = vadd.f32 %v2158, %v2318
      %v2320 = vpop.f32.mrb[0].mxu0
      %2321 = vmatprep.mubr.bf16.mxu0 %v1097
      %2322 = vmatmul.mubr.bf16.gmra.mrb[0].mxu0 %v1096
      %v2323 = vpop.f32.mrb[0].mxu0
      %v2324 = vadd.f32 %v2163, %v2323
      %v2325 = vpop.f32.mrb[0].mxu0
      %v2326 = vpop.f32.mrb[0].mxu0
      %v2327 = vadd.f32 %v2166, %v2326
      %v2328 = vpop.f32.mrb[0].mxu0
      %2329 = vmatprep.mubr.bf16.mxu0 %v1106
      %2330 = vmatmul.mubr.bf16.gmra.mrb[0].mxu0 %v1105
      %v2331 = vpop.f32.mrb[0].mxu0
      %v2332 = vadd.f32 %v2171, %v2331
      %v2333 = vpop.f32.mrb[0].mxu0
      %v2334 = vpop.f32.mrb[0].mxu0
      %v2335 = vadd.f32 %v2174, %v2334
      %v2336 = vpop.f32.mrb[0].mxu0
      %2337 = vmatprep.mubr.bf16.mxu0 %v1115
      %2338 = vmatmul.mubr.bf16.gmra.mrb[0].mxu0 %v1114
      %v2339 = vpop.f32.mrb[0].mxu0
      %v2340 = vadd.f32 %v2179, %v2339
      %v2341 = vpop.f32.mrb[0].mxu0
      %v2342 = vpop.f32.mrb[0].mxu0
      %v2343 = vadd.f32 %v2182, %v2342
      %v2344 = vpop.f32.mrb[0].mxu0
      %2345 = vmatprep.mubr.bf16.mxu0 %v1124
      %2346 = vmatmul.mubr.bf16.gmra.mrb[0].mxu0 %v1123
      %v2347 = vpop.f32.mrb[0].mxu0
      %v2348 = vadd.f32 %v2187, %v2347
      %v2349 = vpop.f32.mrb[0].mxu0
      %v2350 = vpop.f32.mrb[0].mxu0
      %v2351 = vadd.f32 %v2190, %v2350
      %v2352 = vpop.f32.mrb[0].mxu0
      %2353 = vmatprep.mubr.bf16.mxu0 %v1133
      %2354 = vmatmul.mubr.bf16.gmra.mrb[0].mxu0 %v1132
      %v2355 = vpop.f32.mrb[0].mxu0
      %v2356 = vadd.f32 %v2195, %v2355
      %v2357 = vpop.f32.mrb[0].mxu0
      %v2358 = vpop.f32.mrb[0].mxu0
      %v2359 = vadd.f32 %v2198, %v2358
      %v2360 = vpop.f32.mrb[0].mxu0
      %2361 = vdwg.mxu0
      %2362 = vmatprep.subr.bf16.mxu0 0
      %2363 = vmatpush1.bf16.msra.mxu0 %v1638
      %2364 = vmatprep.subr.bf16.mxu0 0
      %2365 = vmatpush1.bf16.msra.mxu0 %v1639
      %2366 = vmatprep.subr.bf16.mxu0 0
      %2367 = vmatpush1.bf16.msra.mxu0 %v1640
      %2368 = vmatprep.subr.bf16.mxu0 0
      %2369 = vmatpush1.bf16.msra.mxu0 %v1641
      %2370 = vmatprep.subr.bf16.mxu0 0
      %2371 = vmatpush1.bf16.msra.mxu0 %v1642
      %2372 = vmatprep.subr.bf16.mxu0 0
      %2373 = vmatpush1.bf16.msra.mxu0 %v1643
      %2374 = vmatprep.subr.bf16.mxu0 0
      %2375 = vmatpush1.bf16.msra.mxu0 %v1644
      %2376 = vmatprep.subr.bf16.mxu0 0
      %2377 = vmatpush1.bf16.msra.mxu0 %v1645
      %2378 = vmatprep.subr.bf16.mxu0 0
      %2379 = vmatpush1.bf16.msra.mxu0 0
      %2380 = vmatprep.subr.bf16.mxu0 0
      %2381 = vmatpush1.bf16.msra.mxu0 0
      %2382 = vmatprep.subr.bf16.mxu0 0
      %2383 = vmatpush1.bf16.msra.mxu0 0
      %2384 = vmatprep.subr.bf16.mxu0 0
      %2385 = vmatpush1.bf16.msra.mxu0 0
      %2386 = vmatprep.subr.bf16.mxu0 0
      %2387 = vmatpush1.bf16.msra.mxu0 0
      %2388 = vmatprep.subr.bf16.mxu0 0
      %2389 = vmatpush1.bf16.msra.mxu0 0
      %2390 = vmatprep.subr.bf16.mxu0 0
      %2391 = vmatpush1.bf16.msra.mxu0 0
      %2392 = vmatprep.subr.bf16.mxu0 0
      %2393 = vmatpush1.bf16.msra.mxu0 0
      %2394 = vmatprep.mubr.bf16.mxu0 0
      %2395 = vmatmul.mubr.bf16.gmra.mrb[0].mxu0 %v999
      %v2396 = vpop.f32.mrb[0].mxu0
      %v2397 = vadd.f32 %v2236, %v2396
      %v2398 = vpop.f32.mrb[0].mxu0
      %v2399 = vpop.f32.mrb[0].mxu0
      %v2400 = vadd.f32 %v2239, %v2399
      %v2401 = vpop.f32.mrb[0].mxu0
      %2402 = vmatprep.mubr.bf16.mxu0 0
      %2403 = vmatmul.mubr.bf16.gmra.mrb[0].mxu0 %v1008
      %v2404 = vpop.f32.mrb[0].mxu0
      %v2405 = vadd.f32 %v2244, %v2404
      %v2406 = vpop.f32.mrb[0].mxu0
      %v2407 = vpop.f32.mrb[0].mxu0
      %v2408 = vadd.f32 %v2247, %v2407
      %v2409 = vpop.f32.mrb[0].mxu0
      %2410 = vmatprep.mubr.bf16.mxu0 0
      %2411 = vmatmul.mubr.bf16.gmra.mrb[0].mxu0 %v1017
      %v2412 = vpop.f32.mrb[0].mxu0
      %v2413 = vadd.f32 %v2252, %v2412
      %v2414 = vpop.f32.mrb[0].mxu0
      %v2415 = vpop.f32.mrb[0].mxu0
      %v2416 = vadd.f32 %v2255, %v2415
      %v2417 = vpop.f32.mrb[0].mxu0
      %2418 = vmatprep.mubr.bf16.mxu0 0
      %2419 = vmatmul.mubr.bf16.gmra.mrb[0].mxu0 %v1026
      %v2420 = vpop.f32.mrb[0].mxu0
      %v2421 = vadd.f32 %v2260, %v2420
      %v2422 = vpop.f32.mrb[0].mxu0
      %v2423 = vpop.f32.mrb[0].mxu0
      %v2424 = vadd.f32 %v2263, %v2423
      %v2425 = vpop.f32.mrb[0].mxu0
      %2426 = vmatprep.mubr.bf16.mxu0 0
      %2427 = vmatmul.mubr.bf16.gmra.mrb[0].mxu0 %v1035
      %v2428 = vpop.f32.mrb[0].mxu0
      %v2429 = vadd.f32 %v2268, %v2428
      %v2430 = vpop.f32.mrb[0].mxu0
      %v2431 = vpop.f32.mrb[0].mxu0
      %v2432 = vadd.f32 %v2271, %v2431
      %v2433 = vpop.f32.mrb[0].mxu0
      %2434 = vmatprep.mubr.bf16.mxu0 0
      %2435 = vmatmul.mubr.bf16.gmra.mrb[0].mxu0 %v1044
      %v2436 = vpop.f32.mrb[0].mxu0
      %v2437 = vadd.f32 %v2276, %v2436
      %v2438 = vpop.f32.mrb[0].mxu0
      %v2439 = vpop.f32.mrb[0].mxu0
      %v2440 = vadd.f32 %v2279, %v2439
      %v2441 = vpop.f32.mrb[0].mxu0
      %2442 = vmatprep.mubr.bf16.mxu0 0
      %2443 = vmatmul.mubr.bf16.gmra.mrb[0].mxu0 %v1053
      %v2444 = vpop.f32.mrb[0].mxu0
      %v2445 = vadd.f32 %v2284, %v2444
      %v2446 = vpop.f32.mrb[0].mxu0
      %v2447 = vpop.f32.mrb[0].mxu0
      %v2448 = vadd.f32 %v2287, %v2447
      %v2449 = vpop.f32.mrb[0].mxu0
      %2450 = vmatprep.mubr.bf16.mxu0 0
      %2451 = vmatmul.mubr.bf16.gmra.mrb[0].mxu0 %v1062
      %v2452 = vpop.f32.mrb[0].mxu0
      %v2453 = vadd.f32 %v2292, %v2452
      %v2454 = vpop.f32.mrb[0].mxu0
      %v2455 = vpop.f32.mrb[0].mxu0
      %v2456 = vadd.f32 %v2295, %v2455
      %v2457 = vpop.f32.mrb[0].mxu0
      %2458 = vmatprep.mubr.bf16.mxu0 0
      %2459 = vmatmul.mubr.bf16.gmra.mrb[0].mxu0 %v1071
      %v2460 = vpop.f32.mrb[0].mxu0
      %v2461 = vadd.f32 %v2300, %v2460
      %v2462 = vpop.f32.mrb[0].mxu0
      %v2463 = vpop.f32.mrb[0].mxu0
      %v2464 = vadd.f32 %v2303, %v2463
      %v2465 = vpop.f32.mrb[0].mxu0
      %2466 = vmatprep.mubr.bf16.mxu0 0
      %2467 = vmatmul.mubr.bf16.gmra.mrb[0].mxu0 %v1080
      %v2468 = vpop.f32.mrb[0].mxu0
      %v2469 = vadd.f32 %v2308, %v2468
      %v2470 = vpop.f32.mrb[0].mxu0
      %v2471 = vpop.f32.mrb[0].mxu0
      %v2472 = vadd.f32 %v2311, %v2471
      %v2473 = vpop.f32.mrb[0].mxu0
      %2474 = vmatprep.mubr.bf16.mxu0 0
      %2475 = vmatmul.mubr.bf16.gmra.mrb[0].mxu0 %v1089
      %v2476 = vpop.f32.mrb[0].mxu0
      %v2477 = vadd.f32 %v2316, %v2476
      %v2478 = vpop.f32.mrb[0].mxu0
      %v2479 = vpop.f32.mrb[0].mxu0
      %v2480 = vadd.f32 %v2319, %v2479
      %v2481 = vpop.f32.mrb[0].mxu0
      %2482 = vmatprep.mubr.bf16.mxu0 0
      %2483 = vmatmul.mubr.bf16.gmra.mrb[0].mxu0 %v1098
      %v2484 = vpop.f32.mrb[0].mxu0
      %v2485 = vadd.f32 %v2324, %v2484
      %v2486 = vpop.f32.mrb[0].mxu0
      %v2487 = vpop.f32.mrb[0].mxu0
      %v2488 = vadd.f32 %v2327, %v2487
      %v2489 = vpop.f32.mrb[0].mxu0
      %2490 = vmatprep.mubr.bf16.mxu0 0
      %2491 = vmatmul.mubr.bf16.gmra.mrb[0].mxu0 %v1107
      %v2492 = vpop.f32.mrb[0].mxu0
      %v2493 = vadd.f32 %v2332, %v2492
      %v2494 = vpop.f32.mrb[0].mxu0
      %v2495 = vpop.f32.mrb[0].mxu0
      %v2496 = vadd.f32 %v2335, %v2495
      %v2497 = vpop.f32.mrb[0].mxu0
      %2498 = vmatprep.mubr.bf16.mxu0 0
      %2499 = vmatmul.mubr.bf16.gmra.mrb[0].mxu0 %v1116
      %v2500 = vpop.f32.mrb[0].mxu0
      %v2501 = vadd.f32 %v2340, %v2500
      %v2502 = vpop.f32.mrb[0].mxu0
      %v2503 = vpop.f32.mrb[0].mxu0
      %v2504 = vadd.f32 %v2343, %v2503
      %v2505 = vpop.f32.mrb[0].mxu0
      %2506 = vmatprep.mubr.bf16.mxu0 0
      %2507 = vmatmul.mubr.bf16.gmra.mrb[0].mxu0 %v1125
      %v2508 = vpop.f32.mrb[0].mxu0
      %v2509 = vadd.f32 %v2348, %v2508
      %v2510 = vpop.f32.mrb[0].mxu0
      %v2511 = vpop.f32.mrb[0].mxu0
      %v2512 = vadd.f32 %v2351, %v2511
      %v2513 = vpop.f32.mrb[0].mxu0
      %2514 = vmatprep.mubr.bf16.mxu0 0
      %2515 = vmatmul.mubr.bf16.gmra.mrb[0].mxu0 %v1134
      %v2516 = vpop.f32.mrb[0].mxu0
      %v2517 = vadd.f32 %v2356, %v2516
      %v2518 = vpop.f32.mrb[0].mxu0
      %v2519 = vpop.f32.mrb[0].mxu0
      %v2520 = vadd.f32 %v2359, %v2519
      %v2521 = vpop.f32.mrb[0].mxu0
      %2522 = vdwg.mxu0
      %v2523 = vmul.f32 %v2397, 0.1
      %v2524 = vmul.f32 %v2400, 0.1
      %v2525 = vmul.f32 %v2405, 0.1
      %v2526 = vmul.f32 %v2408, 0.1
      %v2527 = vmul.f32 %v2413, 0.1
      %v2528 = vmul.f32 %v2416, 0.1
      %v2529 = vmul.f32 %v2421, 0.1
      %v2530 = vmul.f32 %v2424, 0.1
      %v2531 = vmul.f32 %v2429, 0.1
      %v2532 = vmul.f32 %v2432, 0.1
      %v2533 = vmul.f32 %v2437, 0.1
      %v2534 = vmul.f32 %v2440, 0.1
      %v2535 = vmul.f32 %v2445, 0.1
      %v2536 = vmul.f32 %v2448, 0.1
      %v2537 = vmul.f32 %v2453, 0.1
      %v2538 = vmul.f32 %v2456, 0.1
      %v2539 = vmul.f32 %v2461, 0.1
      %v2540 = vmul.f32 %v2464, 0.1
      %v2541 = vmul.f32 %v2469, 0.1
      %v2542 = vmul.f32 %v2472, 0.1
      %v2543 = vmul.f32 %v2477, 0.1
      %v2544 = vmul.f32 %v2480, 0.1
      %v2545 = vmul.f32 %v2485, 0.1
      %v2546 = vmul.f32 %v2488, 0.1
      %v2547 = vmul.f32 %v2493, 0.1
      %v2548 = vmul.f32 %v2496, 0.1
      %v2549 = vmul.f32 %v2501, 0.1
      %v2550 = vmul.f32 %v2504, 0.1
      %v2551 = vmul.f32 %v2509, 0.1
      %v2552 = vmul.f32 %v2512, 0.1
      %v2553 = vmul.f32 %v2517, 0.1
      %v2554 = vmul.f32 %v2520, 0.1
      %v2555 = vmax.f32 %v2397, %v2523
      %v2556 = vmax.f32 %v2400, %v2524
      %v2557 = vmax.f32 %v2405, %v2525
      %v2558 = vmax.f32 %v2408, %v2526
      %v2559 = vmax.f32 %v2413, %v2527
      %v2560 = vmax.f32 %v2416, %v2528
      %v2561 = vmax.f32 %v2421, %v2529
      %v2562 = vmax.f32 %v2424, %v2530
      %v2563 = vmax.f32 %v2429, %v2531
      %v2564 = vmax.f32 %v2432, %v2532
      %v2565 = vmax.f32 %v2437, %v2533
      %v2566 = vmax.f32 %v2440, %v2534
      %v2567 = vmax.f32 %v2445, %v2535
      %v2568 = vmax.f32 %v2448, %v2536
      %v2569 = vmax.f32 %v2453, %v2537
      %v2570 = vmax.f32 %v2456, %v2538
      %v2571 = vmax.f32 %v2461, %v2539
      %v2572 = vmax.f32 %v2464, %v2540
      %v2573 = vmax.f32 %v2469, %v2541
      %v2574 = vmax.f32 %v2472, %v2542
      %v2575 = vmax.f32 %v2477, %v2543
      %v2576 = vmax.f32 %v2480, %v2544
      %v2577 = vmax.f32 %v2485, %v2545
      %v2578 = vmax.f32 %v2488, %v2546
      %v2579 = vmax.f32 %v2493, %v2547
      %v2580 = vmax.f32 %v2496, %v2548
      %v2581 = vmax.f32 %v2501, %v2549
      %v2582 = vmax.f32 %v2504, %v2550
      %v2583 = vmax.f32 %v2509, %v2551
      %v2584 = vmax.f32 %v2512, %v2552
      %v2585 = vmax.f32 %v2517, %v2553
      %v2586 = vmax.f32 %v2520, %v2554
      %v2587 = vadd.f32 %v342, %v2555
      %v2588 = vadd.f32 %v343, %v2556
      %v2589 = vadd.f32 %v344, %v2557
      %v2590 = vadd.f32 %v345, %v2558
      %v2591 = vadd.f32 %v346, %v2559
      %v2592 = vadd.f32 %v347, %v2560
      %v2593 = vadd.f32 %v348, %v2561
      %v2594 = vadd.f32 %v349, %v2562
      %v2595 = vadd.f32 %v350, %v2563
      %v2596 = vadd.f32 %v351, %v2564
      %v2597 = vadd.f32 %v352, %v2565
      %v2598 = vadd.f32 %v353, %v2566
      %v2599 = vadd.f32 %v354, %v2567
      %v2600 = vadd.f32 %v355, %v2568
      %v2601 = vadd.f32 %v356, %v2569
      %v2602 = vadd.f32 %v357, %v2570
      %v2603 = vadd.f32 %v358, %v2571
      %v2604 = vadd.f32 %v359, %v2572
      %v2605 = vadd.f32 %v360, %v2573
      %v2606 = vadd.f32 %v361, %v2574
      %v2607 = vadd.f32 %v362, %v2575
      %v2608 = vadd.f32 %v363, %v2576
      %v2609 = vadd.f32 %v364, %v2577
      %v2610 = vadd.f32 %v365, %v2578
      %v2611 = vadd.f32 %v366, %v2579
      %v2612 = vadd.f32 %v367, %v2580
      %v2613 = vadd.f32 %v368, %v2581
      %v2614 = vadd.f32 %v369, %v2582
      %v2615 = vadd.f32 %v370, %v2583
      %v2616 = vadd.f32 %v371, %v2584
      %v2617 = vadd.f32 %v372, %v2585
      %v2618 = vadd.f32 %v373, %v2586
      %2619 = vst [vmem:[%s258] sm:$0xff] %v2587
      %2620 = vst [vmem:[%s258 + $0x8] sm:$0xff] %v2588
      %2621 = vst [vmem:[%s258 + $0x10] sm:$0xff] %v2589
      %2622 = vst [vmem:[%s258 + $0x18] sm:$0xff] %v2590
      %2623 = vst [vmem:[%s258 + $0x20] sm:$0xff] %v2591
      %2624 = vst [vmem:[%s258 + $0x28] sm:$0xff] %v2592
      %2625 = vst [vmem:[%s258 + $0x30] sm:$0xff] %v2593
      %2626 = vst [vmem:[%s258 + $0x38] sm:$0xff] %v2594
      %2627 = vst [vmem:[%s258 + $0x40] sm:$0xff] %v2595
      %2628 = vst [vmem:[%s258 + $0x48] sm:$0xff] %v2596
      %2629 = vst [vmem:[%s258 + $0x50] sm:$0xff] %v2597
      %2630 = vst [vmem:[%s258 + $0x58] sm:$0xff] %v2598
      %2631 = vst [vmem:[%s258 + $0x60] sm:$0xff] %v2599
      %2632 = vst [vmem:[%s258 + $0x68] sm:$0xff] %v2600
      %2633 = vst [vmem:[%s258 + $0x70] sm:$0xff] %v2601
      %2634 = vst [vmem:[%s258 + $0x78] sm:$0xff] %v2602
      %2635 = vst [vmem:[%s258 + $0x80] sm:$0xff] %v2603
      %2636 = vst [vmem:[%s258 + $0x88] sm:$0xff] %v2604
      %2637 = vst [vmem:[%s258 + $0x90] sm:$0xff] %v2605
      %2638 = vst [vmem:[%s258 + $0x98] sm:$0xff] %v2606
      %2639 = vst [vmem:[%s258 + $0xa0] sm:$0xff] %v2607
      %2640 = vst [vmem:[%s258 + $0xa8] sm:$0xff] %v2608
      %2641 = vst [vmem:[%s258 + $0xb0] sm:$0xff] %v2609
      %2642 = vst [vmem:[%s258 + $0xb8] sm:$0xff] %v2610
      %2643 = vst [vmem:[%s258 + $0xc0] sm:$0xff] %v2611
      %2644 = vst [vmem:[%s258 + $0xc8] sm:$0xff] %v2612
      %2645 = vst [vmem:[%s258 + $0xd0] sm:$0xff] %v2613
      %2646 = vst [vmem:[%s258 + $0xd8] sm:$0xff] %v2614
      %2647 = vst [vmem:[%s258 + $0xe0] sm:$0xff] %v2615
      %2648 = vst [vmem:[%s258 + $0xe8] sm:$0xff] %v2616
      %2649 = vst [vmem:[%s258 + $0xf0] sm:$0xff] %v2617
      %2650 = vst [vmem:[%s258 + $0xf8] sm:$0xff] %v2618
      %v2651 = vadd.f32 %v2587, %v2588
      %v2652 = vadd.f32 %v2651, %v2589
      %v2653 = vadd.f32 %v2652, %v2590
      %v2654 = vadd.f32 %v2653, %v2591
      %v2655 = vadd.f32 %v2654, %v2592
      %v2656 = vadd.f32 %v2655, %v2593
      %v2657 = vadd.f32 %v2656, %v2594
      %v2658 = vadd.f32 %v2657, %v2595
      %v2659 = vadd.f32 %v2658, %v2596
      %v2660 = vadd.f32 %v2659, %v2597
      %v2661 = vadd.f32 %v2660, %v2598
      %v2662 = vadd.f32 %v2661, %v2599
      %v2663 = vadd.f32 %v2662, %v2600
      %v2664 = vadd.f32 %v2663, %v2601
      %v2665 = vadd.f32 %v2664, %v2602
      %v2666 = vadd.f32 %v2665, %v2603
      %v2667 = vadd.f32 %v2666, %v2604
      %v2668 = vadd.f32 %v2667, %v2605
      %v2669 = vadd.f32 %v2668, %v2606
      %v2670 = vadd.f32 %v2669, %v2607
      %v2671 = vadd.f32 %v2670, %v2608
      %v2672 = vadd.f32 %v2671, %v2609
      %v2673 = vadd.f32 %v2672, %v2610
      %v2674 = vadd.f32 %v2673, %v2611
      %v2675 = vadd.f32 %v2674, %v2612
      %v2676 = vadd.f32 %v2675, %v2613
      %v2677 = vadd.f32 %v2676, %v2614
      %v2678 = vadd.f32 %v2677, %v2615
      %v2679 = vadd.f32 %v2678, %v2616
      %v2680 = vadd.f32 %v2679, %v2617
      %v2681 = vadd.f32 %v2680, %v2618
      %v2682 = vrot.slane %v2681, 4
      %v2683 = vadd.f32 %v2681, %v2682
      %v2684 = vrot.slane %v2683, 2
      %v2685 = vadd.f32 %v2683, %v2684
      %v2686 = vrot.slane %v2685, 1
      %v2687 = vadd.f32 %v2685, %v2686
      %v2688 = vmul.f32 %v2687, 0.00390625
      %v2689 = vsub.f32 %v2587, %v2688
      %v2690 = vsub.f32 %v2588, %v2688
      %v2691 = vsub.f32 %v2589, %v2688
      %v2692 = vsub.f32 %v2590, %v2688
      %v2693 = vsub.f32 %v2591, %v2688
      %v2694 = vsub.f32 %v2592, %v2688
      %v2695 = vsub.f32 %v2593, %v2688
      %v2696 = vsub.f32 %v2594, %v2688
      %v2697 = vsub.f32 %v2595, %v2688
      %v2698 = vsub.f32 %v2596, %v2688
      %v2699 = vsub.f32 %v2597, %v2688
      %v2700 = vsub.f32 %v2598, %v2688
      %v2701 = vsub.f32 %v2599, %v2688
      %v2702 = vsub.f32 %v2600, %v2688
      %v2703 = vsub.f32 %v2601, %v2688
      %v2704 = vsub.f32 %v2602, %v2688
      %v2705 = vsub.f32 %v2603, %v2688
      %v2706 = vsub.f32 %v2604, %v2688
      %v2707 = vsub.f32 %v2605, %v2688
      %v2708 = vsub.f32 %v2606, %v2688
      %v2709 = vsub.f32 %v2607, %v2688
      %v2710 = vsub.f32 %v2608, %v2688
      %v2711 = vsub.f32 %v2609, %v2688
      %v2712 = vsub.f32 %v2610, %v2688
      %v2713 = vsub.f32 %v2611, %v2688
      %v2714 = vsub.f32 %v2612, %v2688
      %v2715 = vsub.f32 %v2613, %v2688
      %v2716 = vsub.f32 %v2614, %v2688
      %v2717 = vsub.f32 %v2615, %v2688
      %v2718 = vsub.f32 %v2616, %v2688
      %v2719 = vsub.f32 %v2617, %v2688
      %v2720 = vsub.f32 %v2618, %v2688
      %v2721 = vmul.f32 %v2689, %v2689
      %v2722 = vmul.f32 %v2690, %v2690
      %v2723 = vmul.f32 %v2691, %v2691
      %v2724 = vmul.f32 %v2692, %v2692
      %v2725 = vmul.f32 %v2693, %v2693
      %v2726 = vmul.f32 %v2694, %v2694
      %v2727 = vmul.f32 %v2695, %v2695
      %v2728 = vmul.f32 %v2696, %v2696
      %v2729 = vmul.f32 %v2697, %v2697
      %v2730 = vmul.f32 %v2698, %v2698
      %v2731 = vmul.f32 %v2699, %v2699
      %v2732 = vmul.f32 %v2700, %v2700
      %v2733 = vmul.f32 %v2701, %v2701
      %v2734 = vmul.f32 %v2702, %v2702
      %v2735 = vmul.f32 %v2703, %v2703
      %v2736 = vmul.f32 %v2704, %v2704
      %v2737 = vmul.f32 %v2705, %v2705
      %v2738 = vmul.f32 %v2706, %v2706
      %v2739 = vmul.f32 %v2707, %v2707
      %v2740 = vmul.f32 %v2708, %v2708
      %v2741 = vmul.f32 %v2709, %v2709
      %v2742 = vmul.f32 %v2710, %v2710
      %v2743 = vmul.f32 %v2711, %v2711
      %v2744 = vmul.f32 %v2712, %v2712
      %v2745 = vmul.f32 %v2713, %v2713
      %v2746 = vmul.f32 %v2714, %v2714
      %v2747 = vmul.f32 %v2715, %v2715
      %v2748 = vmul.f32 %v2716, %v2716
      %v2749 = vmul.f32 %v2717, %v2717
      %v2750 = vmul.f32 %v2718, %v2718
      %v2751 = vmul.f32 %v2719, %v2719
      %v2752 = vmul.f32 %v2720, %v2720
      %v2753 = vadd.f32 %v2721, %v2722
      %v2754 = vadd.f32 %v2753, %v2723
      %v2755 = vadd.f32 %v2754, %v2724
      %v2756 = vadd.f32 %v2755, %v2725
      %v2757 = vadd.f32 %v2756, %v2726
      %v2758 = vadd.f32 %v2757, %v2727
      %v2759 = vadd.f32 %v2758, %v2728
      %v2760 = vadd.f32 %v2759, %v2729
      %v2761 = vadd.f32 %v2760, %v2730
      %v2762 = vadd.f32 %v2761, %v2731
      %v2763 = vadd.f32 %v2762, %v2732
      %v2764 = vadd.f32 %v2763, %v2733
      %v2765 = vadd.f32 %v2764, %v2734
      %v2766 = vadd.f32 %v2765, %v2735
      %v2767 = vadd.f32 %v2766, %v2736
      %v2768 = vadd.f32 %v2767, %v2737
      %v2769 = vadd.f32 %v2768, %v2738
      %v2770 = vadd.f32 %v2769, %v2739
      %v2771 = vadd.f32 %v2770, %v2740
      %v2772 = vadd.f32 %v2771, %v2741
      %v2773 = vadd.f32 %v2772, %v2742
      %v2774 = vadd.f32 %v2773, %v2743
      %v2775 = vadd.f32 %v2774, %v2744
      %v2776 = vadd.f32 %v2775, %v2745
      %v2777 = vadd.f32 %v2776, %v2746
      %v2778 = vadd.f32 %v2777, %v2747
      %v2779 = vadd.f32 %v2778, %v2748
      %v2780 = vadd.f32 %v2779, %v2749
      %v2781 = vadd.f32 %v2780, %v2750
      %v2782 = vadd.f32 %v2781, %v2751
      %v2783 = vadd.f32 %v2782, %v2752
      %v2784 = vrot.slane %v2783, 4
      %v2785 = vadd.f32 %v2783, %v2784
      %v2786 = vrot.slane %v2785, 2
      %v2787 = vadd.f32 %v2785, %v2786
      %v2788 = vrot.slane %v2787, 1
      %v2789 = vadd.f32 %v2787, %v2788
      %2790 = vst [vmem:[%s262] sm:$0x1] %v2687
      %2791 = vst [vmem:[%s262 + $0x1] sm:$0x1] %v2789
      %p2792 = scmp.lt.s32.totalorder %s18, 1
      %s2793 = scalar_select %p2792, %s18, 1
      %s2794 = smul.addr %s2793, 32
      %s2795 = smul.addr %s2794, 8
      %s2796 = scalar_lea.vmem %s5, %s2795
      %p2797 = scmp.lt.s32.totalorder %s18, 1
      %s2798 = scalar_select %p2797, %s18, 1
      %s2799 = smul.addr %s2798, 2
      %s2800 = scalar_lea.vmem %s6, %s2799
      // Predicated region
      $region41: #{encoder_layer_forward.2} parent=39 // pred_check
        %p2801 = pneg %p146
      $region42: #{encoder_layer_forward.2} parent=39 // pred_check_branch
        %2803 = sbr.rel (%p2801) target = $region44
      $region43: #{encoder_layer_forward.2} parent=39 // pred_region
        _
      $region44: #{encoder_layer_forward.2} parent=39 // pred_fallthru
        _
      // Predicated region
      $region45: #{encoder_layer_forward.2} parent=39 // pred_check
        %p2804 = pneg %p172
      $region46: #{encoder_layer_forward.2} parent=39 // pred_check_branch
        %2806 = sbr.rel (%p2804) target = $region48
      $region47: #{encoder_layer_forward.2} parent=39 // pred_region
        _
      $region48: #{encoder_layer_forward.2} parent=39 // pred_fallthru
        _
    $region40: #{encoder_layer_forward.2} parent=5 // pred_fallthru
      _
    %p2807 = scmp.le.s32.totalorder 2, %s13
    // Predicated region
    $region49: #{encoder_layer_forward.2} parent=5 // pred_check
      %p2808 = pneg %p2807
    $region50: #{encoder_layer_forward.2} parent=5 // pred_check_branch
      %2810 = sbr.rel (%p2808) target = $region52
    $region51: #{encoder_layer_forward.2} parent=5 // pred_region
      %s2811 = ssub.s32 %s13, 2
      // Predicated region
      $region53: #{encoder_layer_forward.2} parent=51 // pred_check
        %p2812 = pneg %p152
      $region54: #{encoder_layer_forward.2} parent=51 // pred_check_branch
        %2814 = sbr.rel (%p2812) target = $region56
      $region55: #{encoder_layer_forward.2} parent=51 // pred_region
        %p2815 = scmp.lt.s32.totalorder %s19, 1
        %s2816 = scalar_select %p2815, %s19, 1
        %s2817 = smul.addr %s2816, 32
        %s2818 = smul.addr %s2817, 8
        %s2819 = scalar_lea.vmem %s5, %s2818
      $region56: #{encoder_layer_forward.2} parent=51 // pred_fallthru
        _
      // Predicated region
      $region57: #{encoder_layer_forward.2} parent=51 // pred_check
        %p2820 = pneg %p178
      $region58: #{encoder_layer_forward.2} parent=51 // pred_check_branch
        %2822 = sbr.rel (%p2820) target = $region60
      $region59: #{encoder_layer_forward.2} parent=51 // pred_region
        %p2823 = scmp.lt.s32.totalorder %s19, 1
        %s2824 = scalar_select %p2823, %s19, 1
        %s2825 = smul.addr %s2824, 2
        %s2826 = scalar_lea.vmem %s6, %s2825
      $region60: #{encoder_layer_forward.2} parent=51 // pred_fallthru
        _
    $region52: #{encoder_layer_forward.2} parent=5 // pred_fallthru
      _
  $region6: #{encoder_layer_forward.2} parent=0 // loop_footer
    %s17 = sadd.s32 1, %s13
  $region7: #{encoder_layer_forward.2} parent=0 // loop_footer_branch
    %12 = sbr.rel target = $region3
  $region8: #{encoder_layer_forward.2} parent=0 // loop_exit
    _

</llo_original>
